<compile_context>
chip_gen: v5e
topology: v5e:2x2
jax: 0.10.0
libtpu: 0.0.40
codegen_flags: <defaults>
</compile_context>

<pallas_src>
import math

import jax
import jax.numpy as jnp
from jax.experimental import pallas as pl
from jax.experimental.pallas import tpu as pltpu


def _round_up(x, m):
    return ((x + m - 1) // m) * m


def _prep_gate_dim(w, H, Hp):
    """(..., 4H) in PyTorch gate order (i,f,g,o) -> (..., 4*Hp) in (i,f,o,g)
    order, each gate zero-padded H -> Hp so every gate slice is lane-aligned."""
    lead = w.shape[:-1]
    w = w.reshape(lead + (4, H))
    w = w[..., jnp.array([0, 1, 3, 2]), :]                  # i, f, o, g
    w = jnp.pad(w, [(0, 0)] * (len(lead) + 1) + [(0, Hp - H)])
    return w.reshape(lead + (4 * Hp,))


def _bilstm_kernel(xp_ref, whh_ref, h0_ref, c0_ref, out_ref, hn_ref, cn_ref):
    """One LSTM direction per grid step (axis 0: 0 = fwd, 1 = bwd).

    xp_ref : (T, Bp, 4*Hp)  precomputed x @ W_ih^T + b  (gate order i,f,o,g)
    whh_ref: (Hp, 4*Hp)     W_hh^T, resident for all T steps
    out_ref: (T, Bp, Hp)    this direction's Hp-wide slab of the fused output
    """
    d = pl.program_id(0)
    T = xp_ref.shape[0]
    Hp = hn_ref.shape[-1]

    whh = whh_ref[...]                                      # resident weights

    def run(time_order):
        h = h0_ref[...]                                     # (Bp, Hp) f32 state
        c = c0_ref[...]
        # Static per-step indices: xp_ref[s] / out_ref[s] are zero-cost views,
        # letting the LLO scheduler overlap step s+1's loads/address math with
        # step s's EUP/VPU/MXU work on the serial critical path.
        # TODO(synk): for production T, move to a time-chunked grid axis with
        # h/c carried in VMEM scratch + lax.fori_loop(unroll=4..8) instead of
        # a full Python unroll, with chunks sized to v7x's 64 MiB per-TC VMEM.
        # TODO(synk): for production H, consider pltpu.matmul_push_rhs /
        # matmul_acc_lhs so W_hh stays staged in the MXU across all T steps.
        for s in time_order:
            gates = xp_ref[s] + jnp.dot(h.astype(whh.dtype), whh,
                                        preferred_element_type=jnp.float32)
            sig = jax.nn.sigmoid(gates[:, :3 * Hp])         # i | f | o, contiguous
            i_g = sig[:, 0:Hp]
            f_g = sig[:, Hp:2 * Hp]
            o_g = sig[:, 2 * Hp:3 * Hp]
            g_g = jnp.tanh(gates[:, 3 * Hp:4 * Hp])         # tanh only on g
            c = f_g * c + i_g * g_g
            h = o_g * jnp.tanh(c)
            out_ref[s] = h
        hn_ref[...] = h                                     # written exactly once
        cn_ref[...] = c

    @pl.when(d == 0)
    def _():
        run(range(T))                                       # forward: 0 .. T-1

    @pl.when(d == 1)
    def _():
        run(range(T - 1, -1, -1))                           # backward: T-1 .. 0


def encoder_forward(x, params, hidden=None, mxu_dtype=jnp.bfloat16):
    """Bidirectional 1-layer LSTM forward matching nn.LSTM semantics.

    x: (T, B, E). hidden: optional (h0, c0), each (2, B, H); None -> zeros.
    Returns (output (T, B, 2H), (h_n (2, B, H), c_n (2, B, H))).
    mxu_dtype: dtype of MXU matmul operands. bf16 is the fast path on
    v6e/v7x (f32 accumulation + f32 h/c state keep drift ~1e-2 or less at
    these scales); pass jnp.float32 for exact nn.LSTM numerics.
    """
    x = x.astype(jnp.float32)
    T, B, E = x.shape
    H = params["w_hh"].shape[-1]
    Hp = max(_round_up(H, 128), 128)        # lane-dense hidden / gate columns
    Bp = max(_round_up(B, 8), 8)            # sublane-dense batch rows

    if hidden is None:
        h0 = jnp.zeros((2, B, H), jnp.float32)
        c0 = jnp.zeros((2, B, H), jnp.float32)
    else:
        h0, c0 = hidden
        h0 = h0.astype(jnp.float32)
        c0 = c0.astype(jnp.float32)
    # Zero padding is inert: padded gate columns/rows are exactly 0, so
    # c_pad = 0.5*c_pad + 0.5*0 stays 0 and h_pad stays 0 -> no leakage into
    # real lanes; padding is sliced off below.
    h0p = jnp.pad(h0, ((0, 0), (0, Bp - B), (0, Hp - H)))
    c0p = jnp.pad(c0, ((0, 0), (0, Bp - B), (0, Hp - H)))

    # ---- Weight prep (once, outside the kernel). ----
    wih_t = jnp.transpose(params["w_ih"].astype(jnp.float32), (0, 2, 1))   # (2,E,4H)
    wih_t = _prep_gate_dim(wih_t, H, Hp)                                   # (2,E,4Hp)
    whh_t = jnp.transpose(params["w_hh"].astype(jnp.float32), (0, 2, 1))   # (2,H,4H)
    whh_t = _prep_gate_dim(whh_t, H, Hp)                                   # (2,H,4Hp)
    whh_t = jnp.pad(whh_t, ((0, 0), (0, Hp - H), (0, 0))).astype(mxu_dtype)  # (2,Hp,4Hp)
    bias = _prep_gate_dim(
        (params["b_ih"] + params["b_hh"]).astype(jnp.float32), H, Hp)      # (2,4Hp)

    # ---- Input projection hoisted off the serial path: ONE fused matmul
    # (T*B, E) @ (E, 2*4*Hp) for both directions (reads x once), done as a
    # plain XLA op so the kernel body is pure recurrence.
    w_fused = jnp.transpose(wih_t, (1, 0, 2)).reshape(E, 2 * 4 * Hp)
    xp = jnp.dot(x.reshape(T * B, E).astype(mxu_dtype),
                 w_fused.astype(mxu_dtype),
                 preferred_element_type=jnp.float32)                       # (T*B, 8Hp)
    xp = xp.reshape(T, B, 2, 4 * Hp) + bias[None, None, :, :]
    xp = jnp.transpose(xp, (2, 0, 1, 3))                                   # (2,T,B,4Hp)
    xp = jnp.pad(xp, ((0, 0), (0, 0), (0, Bp - B), (0, 0)))                # (2,T,Bp,4Hp)

    # Scoped-VMEM budget from the resident blocks (inputs/outputs double
    # buffered); v5e's scoped default is only 16 MiB. Conservative f32 sizing.
    resident = (2 * T * Bp * 4 * Hp * 4          # xp block
                + 2 * Hp * 4 * Hp * 4            # W_hh^T block
                + 2 * 2 * Bp * Hp * 4            # h0, c0
                + 2 * T * Bp * Hp * 4            # out block
                + 2 * 2 * Bp * Hp * 4)           # h_n, c_n
    vmem_limit = int(min(max(4 * resident, 32 * 1024 * 1024), 64 * 1024 * 1024))

    out, h_n, c_n = pl.pallas_call(
        _bilstm_kernel,
        out_shape=(
            jax.ShapeDtypeStruct((T, Bp, 2 * Hp), jnp.float32),   # fused output
            jax.ShapeDtypeStruct((2, Bp, Hp), jnp.float32),       # h_n
            jax.ShapeDtypeStruct((2, Bp, Hp), jnp.float32),       # c_n
        ),
        grid_spec=pltpu.PrefetchScalarGridSpec(
            num_scalar_prefetch=0,
            grid=(2,),                                            # direction only
            in_specs=[
                pl.BlockSpec((None, T, Bp, 4 * Hp), lambda d: (d, 0, 0, 0)),  # xp[d]
                pl.BlockSpec((None, Hp, 4 * Hp), lambda d: (d, 0, 0)),        # W_hh^T[d]
                pl.BlockSpec((None, Bp, Hp), lambda d: (d, 0, 0)),            # h0[d]
                pl.BlockSpec((None, Bp, Hp), lambda d: (d, 0, 0)),            # c0[d]
            ],
            out_specs=[
                # Each direction writes its own lane-dense Hp-wide slab of the
                # fused output -> no wrapper-concat HBM round-trip.
                pl.BlockSpec((T, Bp, Hp), lambda d: (0, 0, d)),
                pl.BlockSpec((None, Bp, Hp), lambda d: (d, 0, 0)),
                pl.BlockSpec((None, Bp, Hp), lambda d: (d, 0, 0)),
            ],
        ),
        compiler_params=pltpu.CompilerParams(
            # Directions are independent; neutral on single-TC v5e/v6e.
            # TODO(synk): verify on v7x that this axis shards across both
            # TensorCores; if not, switch to pltpu.CORE_PARALLEL or
            # pl.core_map over pltpu.create_tensorcore_mesh (one dir per core).
            dimension_semantics=("parallel",),
            vmem_limit_bytes=vmem_limit),
    )(xp, whh_t, h0p, c0p)

    # Slice the alignment padding back off. When H % 128 == 0 (production)
    # this is a pure slice; at toy H it needs one small concat because the
    # fwd/bwd slabs are Hp (not H) apart.
    if Hp == H:
        output = out[:, :B, :]
    else:
        output = jnp.concatenate([out[:, :B, :H], out[:, :B, Hp:Hp + H]], axis=-1)
    return output, (h_n[:, :B, :H], c_n[:, :B, :H])


def init_params(key, embedding_dim, hidden_dim):
    """nn.LSTM-style init U(-1/sqrt(H), 1/sqrt(H)), stacked over [fwd, bwd]."""
    k = 1.0 / math.sqrt(hidden_dim)
    shapes = {
        "w_ih": (2, 4 * hidden_dim, embedding_dim),
        "w_hh": (2, 4 * hidden_dim, hidden_dim),
        "b_ih": (2, 4 * hidden_dim),
        "b_hh": (2, 4 * hidden_dim),
    }
    params = {}
    for name, shape in shapes.items():
        key, sub = jax.random.split(key)
        params[name] = jax.random.uniform(sub, shape, jnp.float32, -k, k)
    return params


def _lstm_reference(x, params, hidden=None):
    """Pure-JAX fp32 reference of nn.LSTM(bidirectional=True) forward."""
    T, B, E = x.shape
    H = params["w_hh"].shape[-1]
    if hidden is None:
        h0 = jnp.zeros((2, B, H), jnp.float32)
        c0 = jnp.zeros((2, B, H), jnp.float32)
    else:
        h0, c0 = hidden
    outs, hs, cs = [], [], []
    for d in range(2):
        wih, whh = params["w_ih"][d], params["w_hh"][d]
        b = params["b_ih"][d] + params["b_hh"][d]
        h, c = h0[d], c0[d]
        out_d = [None] * T
        order = range(T) if d == 0 else range(T - 1, -1, -1)
        for t in order:
            g = x[t] @ wih.T + h @ whh.T + b
            i = jax.nn.sigmoid(g[:, 0:H])
            f = jax.nn.sigmoid(g[:, H:2 * H])
            gg = jnp.tanh(g[:, 2 * H:3 * H])
            o = jax.nn.sigmoid(g[:, 3 * H:4 * H])
            c = f * c + i * gg
            h = o * jnp.tanh(c)
            out_d[t] = h
        outs.append(jnp.stack(out_d, 0))
        hs.append(h)
        cs.append(c)
    return jnp.concatenate(outs, -1), jnp.stack(hs, 0), jnp.stack(cs, 0)


if __name__ == "__main__":
    # Small shapes consistent with the module: seq=8, batch=2, embed=16, hidden=32
    T, B, E, H = 8, 2, 16, 32

    key = jax.random.PRNGKey(0)
    k_x, k_p = jax.random.split(key)
    x = jax.random.normal(k_x, (T, B, E), jnp.float32)
    params = init_params(k_p, E, H)

    output, (h_n, c_n) = jax.jit(encoder_forward)(x, params)
    jax.block_until_ready((output, h_n, c_n))

    assert output.shape == (T, B, 2 * H)
    assert h_n.shape == (2, B, H)
    assert c_n.shape == (2, B, H)

    # Check against a pure-JAX fp32 reference (bf16 MXU operands + f32 state
    # keep the drift well below this tolerance at these shapes).
    ref_out, ref_hn, ref_cn = _lstm_reference(x, params)
    assert float(jnp.max(jnp.abs(output - ref_out))) < 5e-2
    assert float(jnp.max(jnp.abs(h_n - ref_hn))) < 5e-2
    assert float(jnp.max(jnp.abs(c_n - ref_cn))) < 5e-2

    print("KERNEL_OK")
</pallas_src>

<mosaic_0001>
module attributes {stable_mosaic.version = 11 : i64} {
  func.func @_bilstm_kernel(%arg0: i32, %arg1: memref<1x8x8x512xf32, #tpu.memory_space<vmem>>, %arg2: memref<1x128x512xbf16, #tpu.memory_space<vmem>>, %arg3: memref<1x8x128xf32, #tpu.memory_space<vmem>>, %arg4: memref<1x8x128xf32, #tpu.memory_space<vmem>>, %arg5: memref<8x8x128xf32, #tpu.memory_space<vmem>>, %arg6: memref<1x8x128xf32, #tpu.memory_space<vmem>>, %arg7: memref<1x8x128xf32, #tpu.memory_space<vmem>>) attributes {dimension_semantics = [#tpu.dimension_semantics<parallel>], iteration_bounds = array<i64: 2>, scalar_prefetch = 0 : i64, scratch_operands = 0 : i64, tpu.core_type = #tpu.core_type<tc>, window_params = [{transform_indices = @transform_0, window_bounds = array<i64: 1, 8, 8, 512>}, {transform_indices = @transform_1, window_bounds = array<i64: 1, 128, 512>}, {transform_indices = @transform_2, window_bounds = array<i64: 1, 8, 128>}, {transform_indices = @transform_3, window_bounds = array<i64: 1, 8, 128>}, {transform_indices = @transform_4, window_bounds = array<i64: 8, 8, 128>}, {transform_indices = @transform_5, window_bounds = array<i64: 1, 8, 128>}, {transform_indices = @transform_6, window_bounds = array<i64: 1, 8, 128>}]} {
    %c0 = arith.constant 0 : index
    %c0_0 = arith.constant 0 : index
    %c0_1 = arith.constant 0 : index
    %0 = vector.load %arg2[%c0, %c0_0, %c0_1] : memref<1x128x512xbf16, #tpu.memory_space<vmem>>, vector<1x128x512xbf16>
    %1 = vector.shape_cast %0 : vector<1x128x512xbf16> to vector<128x512xbf16>
    %c0_i32 = arith.constant 0 : i32
    %2 = arith.cmpi eq, %arg0, %c0_i32 : i32
    %3 = arith.extui %2 : i1 to i32
    %c0_i32_2 = arith.constant 0 : i32
    %4 = arith.cmpi ne, %3, %c0_i32_2 : i32
    scf.if %4 {
      %c0_4 = arith.constant 0 : index
      %c0_5 = arith.constant 0 : index
      %c0_6 = arith.constant 0 : index
      %8 = vector.load %arg3[%c0_4, %c0_5, %c0_6] : memref<1x8x128xf32, #tpu.memory_space<vmem>>, vector<1x8x128xf32>
      %9 = vector.shape_cast %8 : vector<1x8x128xf32> to vector<8x128xf32>
      %c0_7 = arith.constant 0 : index
      %c0_8 = arith.constant 0 : index
      %c0_9 = arith.constant 0 : index
      %10 = vector.load %arg4[%c0_7, %c0_8, %c0_9] : memref<1x8x128xf32, #tpu.memory_space<vmem>>, vector<1x8x128xf32>
      %11 = vector.shape_cast %10 : vector<1x8x128xf32> to vector<8x128xf32>
      %c0_10 = arith.constant 0 : index
      %c0_11 = arith.constant 0 : index
      %c0_12 = arith.constant 0 : index
      %c0_13 = arith.constant 0 : index
      %12 = vector.load %arg1[%c0_10, %c0_11, %c0_12, %c0_13] : memref<1x8x8x512xf32, #tpu.memory_space<vmem>>, vector<1x1x8x512xf32>
      %13 = vector.shape_cast %12 : vector<1x1x8x512xf32> to vector<8x512xf32>
      %14 = arith.truncf %9 : vector<8x128xf32> to vector<8x128xbf16>
      %cst = arith.constant dense<0.000000e+00> : vector<8x512xf32>
      %15 = tpu.matmul %14, %1, %cst {dimension_numbers = #tpu.dot_dimension_numbers<[1], [0], [0], [1], [0, 0, 1, 1], [], []>} : vector<8x128xbf16>, vector<128x512xbf16>, vector<8x512xf32> -> vector<8x512xf32>
      %16 = arith.addf %13, %15 : vector<8x512xf32>
      %17 = vector.extract_strided_slice %16 {offsets = [0, 0], sizes = [8, 384], strides = [1, 1]} : vector<8x512xf32> to vector<8x384xf32>
      %18 = arith.negf %17 : vector<8x384xf32>
      %19 = math.exp %18 : vector<8x384xf32>
      %cst_14 = arith.constant 1.000000e+00 : f32
      %20 = vector.broadcast %cst_14 : f32 to vector<8x384xf32>
      %21 = arith.addf %20, %19 : vector<8x384xf32>
      %22 = arith.divf %20, %21 : vector<8x384xf32>
      %23 = vector.extract_strided_slice %22 {offsets = [0, 0], sizes = [8, 128], strides = [1, 1]} : vector<8x384xf32> to vector<8x128xf32>
      %24 = vector.extract_strided_slice %22 {offsets = [0, 128], sizes = [8, 128], strides = [1, 1]} : vector<8x384xf32> to vector<8x128xf32>
      %25 = vector.extract_strided_slice %22 {offsets = [0, 256], sizes = [8, 128], strides = [1, 1]} : vector<8x384xf32> to vector<8x128xf32>
      %26 = vector.extract_strided_slice %16 {offsets = [0, 384], sizes = [8, 128], strides = [1, 1]} : vector<8x512xf32> to vector<8x128xf32>
      %27 = math.tanh %26 : vector<8x128xf32>
      %28 = arith.mulf %24, %11 : vector<8x128xf32>
      %29 = arith.mulf %23, %27 : vector<8x128xf32>
      %30 = arith.addf %28, %29 : vector<8x128xf32>
      %31 = math.tanh %30 : vector<8x128xf32>
      %32 = arith.mulf %25, %31 : vector<8x128xf32>
      %c0_15 = arith.constant 0 : index
      %c0_16 = arith.constant 0 : index
      %c0_17 = arith.constant 0 : index
      %33 = vector.load %arg5[%c0_15, %c0_16, %c0_17] : memref<8x8x128xf32, #tpu.memory_space<vmem>>, vector<1x8x128xf32>
      %34 = vector.shape_cast %33 : vector<1x8x128xf32> to vector<8x128xf32>
      %35 = vector.shape_cast %32 : vector<8x128xf32> to vector<1x8x128xf32>
      tpu.vector_store %arg5[%c0_15, %c0_16, %c0_17], %35 {strides = array<i32>} : memref<8x8x128xf32, #tpu.memory_space<vmem>>, vector<1x8x128xf32>,
      %c0_18 = arith.constant 0 : index
      %c1 = arith.constant 1 : index
      %c0_19 = arith.constant 0 : index
      %c0_20 = arith.constant 0 : index
      %36 = vector.load %arg1[%c0_18, %c1, %c0_19, %c0_20] : memref<1x8x8x512xf32, #tpu.memory_space<vmem>>, vector<1x1x8x512xf32>
      %37 = vector.shape_cast %36 : vector<1x1x8x512xf32> to vector<8x512xf32>
      %38 = arith.truncf %32 : vector<8x128xf32> to vector<8x128xbf16>
      %cst_21 = arith.constant dense<0.000000e+00> : vector<8x512xf32>
      %39 = tpu.matmul %38, %1, %cst_21 {dimension_numbers = #tpu.dot_dimension_numbers<[1], [0], [0], [1], [0, 0, 1, 1], [], []>} : vector<8x128xbf16>, vector<128x512xbf16>, vector<8x512xf32> -> vector<8x512xf32>
      %40 = arith.addf %37, %39 : vector<8x512xf32>
      %41 = vector.extract_strided_slice %40 {offsets = [0, 0], sizes = [8, 384], strides = [1, 1]} : vector<8x512xf32> to vector<8x384xf32>
      %42 = arith.negf %41 : vector<8x384xf32>
      %43 = math.exp %42 : vector<8x384xf32>
      %cst_22 = arith.constant 1.000000e+00 : f32
      %44 = vector.broadcast %cst_22 : f32 to vector<8x384xf32>
      %45 = arith.addf %44, %43 : vector<8x384xf32>
      %46 = arith.divf %44, %45 : vector<8x384xf32>
      %47 = vector.extract_strided_slice %46 {offsets = [0, 0], sizes = [8, 128], strides = [1, 1]} : vector<8x384xf32> to vector<8x128xf32>
      %48 = vector.extract_strided_slice %46 {offsets = [0, 128], sizes = [8, 128], strides = [1, 1]} : vector<8x384xf32> to vector<8x128xf32>
      %49 = vector.extract_strided_slice %46 {offsets = [0, 256], sizes = [8, 128], strides = [1, 1]} : vector<8x384xf32> to vector<8x128xf32>
      %50 = vector.extract_strided_slice %40 {offsets = [0, 384], sizes = [8, 128], strides = [1, 1]} : vector<8x512xf32> to vector<8x128xf32>
      %51 = math.tanh %50 : vector<8x128xf32>
      %52 = arith.mulf %48, %30 : vector<8x128xf32>
      %53 = arith.mulf %47, %51 : vector<8x128xf32>
      %54 = arith.addf %52, %53 : vector<8x128xf32>
      %55 = math.tanh %54 : vector<8x128xf32>
      %56 = arith.mulf %49, %55 : vector<8x128xf32>
      %c1_23 = arith.constant 1 : index
      %c0_24 = arith.constant 0 : index
      %c0_25 = arith.constant 0 : index
      %57 = vector.load %arg5[%c1_23, %c0_24, %c0_25] : memref<8x8x128xf32, #tpu.memory_space<vmem>>, vector<1x8x128xf32>
      %58 = vector.shape_cast %57 : vector<1x8x128xf32> to vector<8x128xf32>
      %59 = vector.shape_cast %56 : vector<8x128xf32> to vector<1x8x128xf32>
      tpu.vector_store %arg5[%c1_23, %c0_24, %c0_25], %59 {strides = array<i32>} : memref<8x8x128xf32, #tpu.memory_space<vmem>>, vector<1x8x128xf32>,
      %c0_26 = arith.constant 0 : index
      %c2 = arith.constant 2 : index
      %c0_27 = arith.constant 0 : index
      %c0_28 = arith.constant 0 : index
      %60 = vector.load %arg1[%c0_26, %c2, %c0_27, %c0_28] : memref<1x8x8x512xf32, #tpu.memory_space<vmem>>, vector<1x1x8x512xf32>
      %61 = vector.shape_cast %60 : vector<1x1x8x512xf32> to vector<8x512xf32>
      %62 = arith.truncf %56 : vector<8x128xf32> to vector<8x128xbf16>
      %cst_29 = arith.constant dense<0.000000e+00> : vector<8x512xf32>
      %63 = tpu.matmul %62, %1, %cst_29 {dimension_numbers = #tpu.dot_dimension_numbers<[1], [0], [0], [1], [0, 0, 1, 1], [], []>} : vector<8x128xbf16>, vector<128x512xbf16>, vector<8x512xf32> -> vector<8x512xf32>
      %64 = arith.addf %61, %63 : vector<8x512xf32>
      %65 = vector.extract_strided_slice %64 {offsets = [0, 0], sizes = [8, 384], strides = [1, 1]} : vector<8x512xf32> to vector<8x384xf32>
      %66 = arith.negf %65 : vector<8x384xf32>
      %67 = math.exp %66 : vector<8x384xf32>
      %cst_30 = arith.constant 1.000000e+00 : f32
      %68 = vector.broadcast %cst_30 : f32 to vector<8x384xf32>
      %69 = arith.addf %68, %67 : vector<8x384xf32>
      %70 = arith.divf %68, %69 : vector<8x384xf32>
      %71 = vector.extract_strided_slice %70 {offsets = [0, 0], sizes = [8, 128], strides = [1, 1]} : vector<8x384xf32> to vector<8x128xf32>
      %72 = vector.extract_strided_slice %70 {offsets = [0, 128], sizes = [8, 128], strides = [1, 1]} : vector<8x384xf32> to vector<8x128xf32>
      %73 = vector.extract_strided_slice %70 {offsets = [0, 256], sizes = [8, 128], strides = [1, 1]} : vector<8x384xf32> to vector<8x128xf32>
      %74 = vector.extract_strided_slice %64 {offsets = [0, 384], sizes = [8, 128], strides = [1, 1]} : vector<8x512xf32> to vector<8x128xf32>
      %75 = math.tanh %74 : vector<8x128xf32>
      %76 = arith.mulf %72, %54 : vector<8x128xf32>
      %77 = arith.mulf %71, %75 : vector<8x128xf32>
      %78 = arith.addf %76, %77 : vector<8x128xf32>
      %79 = math.tanh %78 : vector<8x128xf32>
      %80 = arith.mulf %73, %79 : vector<8x128xf32>
      %c2_31 = arith.constant 2 : index
      %c0_32 = arith.constant 0 : index
      %c0_33 = arith.constant 0 : index
      %81 = vector.load %arg5[%c2_31, %c0_32, %c0_33] : memref<8x8x128xf32, #tpu.memory_space<vmem>>, vector<1x8x128xf32>
      %82 = vector.shape_cast %81 : vector<1x8x128xf32> to vector<8x128xf32>
      %83 = vector.shape_cast %80 : vector<8x128xf32> to vector<1x8x128xf32>
      tpu.vector_store %arg5[%c2_31, %c0_32, %c0_33], %83 {strides = array<i32>} : memref<8x8x128xf32, #tpu.memory_space<vmem>>, vector<1x8x128xf32>,
      %c0_34 = arith.constant 0 : index
      %c3 = arith.constant 3 : index
      %c0_35 = arith.constant 0 : index
      %c0_36 = arith.constant 0 : index
      %84 = vector.load %arg1[%c0_34, %c3, %c0_35, %c0_36] : memref<1x8x8x512xf32, #tpu.memory_space<vmem>>, vector<1x1x8x512xf32>
      %85 = vector.shape_cast %84 : vector<1x1x8x512xf32> to vector<8x512xf32>
      %86 = arith.truncf %80 : vector<8x128xf32> to vector<8x128xbf16>
      %cst_37 = arith.constant dense<0.000000e+00> : vector<8x512xf32>
      %87 = tpu.matmul %86, %1, %cst_37 {dimension_numbers = #tpu.dot_dimension_numbers<[1], [0], [0], [1], [0, 0, 1, 1], [], []>} : vector<8x128xbf16>, vector<128x512xbf16>, vector<8x512xf32> -> vector<8x512xf32>
      %88 = arith.addf %85, %87 : vector<8x512xf32>
      %89 = vector.extract_strided_slice %88 {offsets = [0, 0], sizes = [8, 384], strides = [1, 1]} : vector<8x512xf32> to vector<8x384xf32>
      %90 = arith.negf %89 : vector<8x384xf32>
      %91 = math.exp %90 : vector<8x384xf32>
      %cst_38 = arith.constant 1.000000e+00 : f32
      %92 = vector.broadcast %cst_38 : f32 to vector<8x384xf32>
      %93 = arith.addf %92, %91 : vector<8x384xf32>
      %94 = arith.divf %92, %93 : vector<8x384xf32>
      %95 = vector.extract_strided_slice %94 {offsets = [0, 0], sizes = [8, 128], strides = [1, 1]} : vector<8x384xf32> to vector<8x128xf32>
      %96 = vector.extract_strided_slice %94 {offsets = [0, 128], sizes = [8, 128], strides = [1, 1]} : vector<8x384xf32> to vector<8x128xf32>
      %97 = vector.extract_strided_slice %94 {offsets = [0, 256], sizes = [8, 128], strides = [1, 1]} : vector<8x384xf32> to vector<8x128xf32>
      %98 = vector.extract_strided_slice %88 {offsets = [0, 384], sizes = [8, 128], strides = [1, 1]} : vector<8x512xf32> to vector<8x128xf32>
      %99 = math.tanh %98 : vector<8x128xf32>
      %100 = arith.mulf %96, %78 : vector<8x128xf32>
      %101 = arith.mulf %95, %99 : vector<8x128xf32>
      %102 = arith.addf %100, %101 : vector<8x128xf32>
      %103 = math.tanh %102 : vector<8x128xf32>
      %104 = arith.mulf %97, %103 : vector<8x128xf32>
      %c3_39 = arith.constant 3 : index
      %c0_40 = arith.constant 0 : index
      %c0_41 = arith.constant 0 : index
      %105 = vector.load %arg5[%c3_39, %c0_40, %c0_41] : memref<8x8x128xf32, #tpu.memory_space<vmem>>, vector<1x8x128xf32>
      %106 = vector.shape_cast %105 : vector<1x8x128xf32> to vector<8x128xf32>
      %107 = vector.shape_cast %104 : vector<8x128xf32> to vector<1x8x128xf32>
      tpu.vector_store %arg5[%c3_39, %c0_40, %c0_41], %107 {strides = array<i32>} : memref<8x8x128xf32, #tpu.memory_space<vmem>>, vector<1x8x128xf32>,
      %c0_42 = arith.constant 0 : index
      %c4 = arith.constant 4 : index
      %c0_43 = arith.constant 0 : index
      %c0_44 = arith.constant 0 : index
      %108 = vector.load %arg1[%c0_42, %c4, %c0_43, %c0_44] : memref<1x8x8x512xf32, #tpu.memory_space<vmem>>, vector<1x1x8x512xf32>
      %109 = vector.shape_cast %108 : vector<1x1x8x512xf32> to vector<8x512xf32>
      %110 = arith.truncf %104 : vector<8x128xf32> to vector<8x128xbf16>
      %cst_45 = arith.constant dense<0.000000e+00> : vector<8x512xf32>
      %111 = tpu.matmul %110, %1, %cst_45 {dimension_numbers = #tpu.dot_dimension_numbers<[1], [0], [0], [1], [0, 0, 1, 1], [], []>} : vector<8x128xbf16>, vector<128x512xbf16>, vector<8x512xf32> -> vector<8x512xf32>
      %112 = arith.addf %109, %111 : vector<8x512xf32>
      %113 = vector.extract_strided_slice %112 {offsets = [0, 0], sizes = [8, 384], strides = [1, 1]} : vector<8x512xf32> to vector<8x384xf32>
      %114 = arith.negf %113 : vector<8x384xf32>
      %115 = math.exp %114 : vector<8x384xf32>
      %cst_46 = arith.constant 1.000000e+00 : f32
      %116 = vector.broadcast %cst_46 : f32 to vector<8x384xf32>
      %117 = arith.addf %116, %115 : vector<8x384xf32>
      %118 = arith.divf %116, %117 : vector<8x384xf32>
      %119 = vector.extract_strided_slice %118 {offsets = [0, 0], sizes = [8, 128], strides = [1, 1]} : vector<8x384xf32> to vector<8x128xf32>
      %120 = vector.extract_strided_slice %118 {offsets = [0, 128], sizes = [8, 128], strides = [1, 1]} : vector<8x384xf32> to vector<8x128xf32>
      %121 = vector.extract_strided_slice %118 {offsets = [0, 256], sizes = [8, 128], strides = [1, 1]} : vector<8x384xf32> to vector<8x128xf32>
      %122 = vector.extract_strided_slice %112 {offsets = [0, 384], sizes = [8, 128], strides = [1, 1]} : vector<8x512xf32> to vector<8x128xf32>
      %123 = math.tanh %122 : vector<8x128xf32>
      %124 = arith.mulf %120, %102 : vector<8x128xf32>
      %125 = arith.mulf %119, %123 : vector<8x128xf32>
      %126 = arith.addf %124, %125 : vector<8x128xf32>
      %127 = math.tanh %126 : vector<8x128xf32>
      %128 = arith.mulf %121, %127 : vector<8x128xf32>
      %c4_47 = arith.constant 4 : index
      %c0_48 = arith.constant 0 : index
      %c0_49 = arith.constant 0 : index
      %129 = vector.load %arg5[%c4_47, %c0_48, %c0_49] : memref<8x8x128xf32, #tpu.memory_space<vmem>>, vector<1x8x128xf32>
      %130 = vector.shape_cast %129 : vector<1x8x128xf32> to vector<8x128xf32>
      %131 = vector.shape_cast %128 : vector<8x128xf32> to vector<1x8x128xf32>
      tpu.vector_store %arg5[%c4_47, %c0_48, %c0_49], %131 {strides = array<i32>} : memref<8x8x128xf32, #tpu.memory_space<vmem>>, vector<1x8x128xf32>,
      %c0_50 = arith.constant 0 : index
      %c5 = arith.constant 5 : index
      %c0_51 = arith.constant 0 : index
      %c0_52 = arith.constant 0 : index
      %132 = vector.load %arg1[%c0_50, %c5, %c0_51, %c0_52] : memref<1x8x8x512xf32, #tpu.memory_space<vmem>>, vector<1x1x8x512xf32>
      %133 = vector.shape_cast %132 : vector<1x1x8x512xf32> to vector<8x512xf32>
      %134 = arith.truncf %128 : vector<8x128xf32> to vector<8x128xbf16>
      %cst_53 = arith.constant dense<0.000000e+00> : vector<8x512xf32>
      %135 = tpu.matmul %134, %1, %cst_53 {dimension_numbers = #tpu.dot_dimension_numbers<[1], [0], [0], [1], [0, 0, 1, 1], [], []>} : vector<8x128xbf16>, vector<128x512xbf16>, vector<8x512xf32> -> vector<8x512xf32>
      %136 = arith.addf %133, %135 : vector<8x512xf32>
      %137 = vector.extract_strided_slice %136 {offsets = [0, 0], sizes = [8, 384], strides = [1, 1]} : vector<8x512xf32> to vector<8x384xf32>
      %138 = arith.negf %137 : vector<8x384xf32>
      %139 = math.exp %138 : vector<8x384xf32>
      %cst_54 = arith.constant 1.000000e+00 : f32
      %140 = vector.broadcast %cst_54 : f32 to vector<8x384xf32>
      %141 = arith.addf %140, %139 : vector<8x384xf32>
      %142 = arith.divf %140, %141 : vector<8x384xf32>
      %143 = vector.extract_strided_slice %142 {offsets = [0, 0], sizes = [8, 128], strides = [1, 1]} : vector<8x384xf32> to vector<8x128xf32>
      %144 = vector.extract_strided_slice %142 {offsets = [0, 128], sizes = [8, 128], strides = [1, 1]} : vector<8x384xf32> to vector<8x128xf32>
      %145 = vector.extract_strided_slice %142 {offsets = [0, 256], sizes = [8, 128], strides = [1, 1]} : vector<8x384xf32> to vector<8x128xf32>
      %146 = vector.extract_strided_slice %136 {offsets = [0, 384], sizes = [8, 128], strides = [1, 1]} : vector<8x512xf32> to vector<8x128xf32>
      %147 = math.tanh %146 : vector<8x128xf32>
      %148 = arith.mulf %144, %126 : vector<8x128xf32>
      %149 = arith.mulf %143, %147 : vector<8x128xf32>
      %150 = arith.addf %148, %149 : vector<8x128xf32>
      %151 = math.tanh %150 : vector<8x128xf32>
      %152 = arith.mulf %145, %151 : vector<8x128xf32>
      %c5_55 = arith.constant 5 : index
      %c0_56 = arith.constant 0 : index
      %c0_57 = arith.constant 0 : index
      %153 = vector.load %arg5[%c5_55, %c0_56, %c0_57] : memref<8x8x128xf32, #tpu.memory_space<vmem>>, vector<1x8x128xf32>
      %154 = vector.shape_cast %153 : vector<1x8x128xf32> to vector<8x128xf32>
      %155 = vector.shape_cast %152 : vector<8x128xf32> to vector<1x8x128xf32>
      tpu.vector_store %arg5[%c5_55, %c0_56, %c0_57], %155 {strides = array<i32>} : memref<8x8x128xf32, #tpu.memory_space<vmem>>, vector<1x8x128xf32>,
      %c0_58 = arith.constant 0 : index
      %c6 = arith.constant 6 : index
      %c0_59 = arith.constant 0 : index
      %c0_60 = arith.constant 0 : index
      %156 = vector.load %arg1[%c0_58, %c6, %c0_59, %c0_60] : memref<1x8x8x512xf32, #tpu.memory_space<vmem>>, vector<1x1x8x512xf32>
      %157 = vector.shape_cast %156 : vector<1x1x8x512xf32> to vector<8x512xf32>
      %158 = arith.truncf %152 : vector<8x128xf32> to vector<8x128xbf16>
      %cst_61 = arith.constant dense<0.000000e+00> : vector<8x512xf32>
      %159 = tpu.matmul %158, %1, %cst_61 {dimension_numbers = #tpu.dot_dimension_numbers<[1], [0], [0], [1], [0, 0, 1, 1], [], []>} : vector<8x128xbf16>, vector<128x512xbf16>, vector<8x512xf32> -> vector<8x512xf32>
      %160 = arith.addf %157, %159 : vector<8x512xf32>
      %161 = vector.extract_strided_slice %160 {offsets = [0, 0], sizes = [8, 384], strides = [1, 1]} : vector<8x512xf32> to vector<8x384xf32>
      %162 = arith.negf %161 : vector<8x384xf32>
      %163 = math.exp %162 : vector<8x384xf32>
      %cst_62 = arith.constant 1.000000e+00 : f32
      %164 = vector.broadcast %cst_62 : f32 to vector<8x384xf32>
      %165 = arith.addf %164, %163 : vector<8x384xf32>
      %166 = arith.divf %164, %165 : vector<8x384xf32>
      %167 = vector.extract_strided_slice %166 {offsets = [0, 0], sizes = [8, 128], strides = [1, 1]} : vector<8x384xf32> to vector<8x128xf32>
      %168 = vector.extract_strided_slice %166 {offsets = [0, 128], sizes = [8, 128], strides = [1, 1]} : vector<8x384xf32> to vector<8x128xf32>
      %169 = vector.extract_strided_slice %166 {offsets = [0, 256], sizes = [8, 128], strides = [1, 1]} : vector<8x384xf32> to vector<8x128xf32>
      %170 = vector.extract_strided_slice %160 {offsets = [0, 384], sizes = [8, 128], strides = [1, 1]} : vector<8x512xf32> to vector<8x128xf32>
      %171 = math.tanh %170 : vector<8x128xf32>
      %172 = arith.mulf %168, %150 : vector<8x128xf32>
      %173 = arith.mulf %167, %171 : vector<8x128xf32>
      %174 = arith.addf %172, %173 : vector<8x128xf32>
      %175 = math.tanh %174 : vector<8x128xf32>
      %176 = arith.mulf %169, %175 : vector<8x128xf32>
      %c6_63 = arith.constant 6 : index
      %c0_64 = arith.constant 0 : index
      %c0_65 = arith.constant 0 : index
      %177 = vector.load %arg5[%c6_63, %c0_64, %c0_65] : memref<8x8x128xf32, #tpu.memory_space<vmem>>, vector<1x8x128xf32>
      %178 = vector.shape_cast %177 : vector<1x8x128xf32> to vector<8x128xf32>
      %179 = vector.shape_cast %176 : vector<8x128xf32> to vector<1x8x128xf32>
      tpu.vector_store %arg5[%c6_63, %c0_64, %c0_65], %179 {strides = array<i32>} : memref<8x8x128xf32, #tpu.memory_space<vmem>>, vector<1x8x128xf32>,
      %c0_66 = arith.constant 0 : index
      %c7 = arith.constant 7 : index
      %c0_67 = arith.constant 0 : index
      %c0_68 = arith.constant 0 : index
      %180 = vector.load %arg1[%c0_66, %c7, %c0_67, %c0_68] : memref<1x8x8x512xf32, #tpu.memory_space<vmem>>, vector<1x1x8x512xf32>
      %181 = vector.shape_cast %180 : vector<1x1x8x512xf32> to vector<8x512xf32>
      %182 = arith.truncf %176 : vector<8x128xf32> to vector<8x128xbf16>
      %cst_69 = arith.constant dense<0.000000e+00> : vector<8x512xf32>
      %183 = tpu.matmul %182, %1, %cst_69 {dimension_numbers = #tpu.dot_dimension_numbers<[1], [0], [0], [1], [0, 0, 1, 1], [], []>} : vector<8x128xbf16>, vector<128x512xbf16>, vector<8x512xf32> -> vector<8x512xf32>
      %184 = arith.addf %181, %183 : vector<8x512xf32>
      %185 = vector.extract_strided_slice %184 {offsets = [0, 0], sizes = [8, 384], strides = [1, 1]} : vector<8x512xf32> to vector<8x384xf32>
      %186 = arith.negf %185 : vector<8x384xf32>
      %187 = math.exp %186 : vector<8x384xf32>
      %cst_70 = arith.constant 1.000000e+00 : f32
      %188 = vector.broadcast %cst_70 : f32 to vector<8x384xf32>
      %189 = arith.addf %188, %187 : vector<8x384xf32>
      %190 = arith.divf %188, %189 : vector<8x384xf32>
      %191 = vector.extract_strided_slice %190 {offsets = [0, 0], sizes = [8, 128], strides = [1, 1]} : vector<8x384xf32> to vector<8x128xf32>
      %192 = vector.extract_strided_slice %190 {offsets = [0, 128], sizes = [8, 128], strides = [1, 1]} : vector<8x384xf32> to vector<8x128xf32>
      %193 = vector.extract_strided_slice %190 {offsets = [0, 256], sizes = [8, 128], strides = [1, 1]} : vector<8x384xf32> to vector<8x128xf32>
      %194 = vector.extract_strided_slice %184 {offsets = [0, 384], sizes = [8, 128], strides = [1, 1]} : vector<8x512xf32> to vector<8x128xf32>
      %195 = math.tanh %194 : vector<8x128xf32>
      %196 = arith.mulf %192, %174 : vector<8x128xf32>
      %197 = arith.mulf %191, %195 : vector<8x128xf32>
      %198 = arith.addf %196, %197 : vector<8x128xf32>
      %199 = math.tanh %198 : vector<8x128xf32>
      %200 = arith.mulf %193, %199 : vector<8x128xf32>
      %c7_71 = arith.constant 7 : index
      %c0_72 = arith.constant 0 : index
      %c0_73 = arith.constant 0 : index
      %201 = vector.load %arg5[%c7_71, %c0_72, %c0_73] : memref<8x8x128xf32, #tpu.memory_space<vmem>>, vector<1x8x128xf32>
      %202 = vector.shape_cast %201 : vector<1x8x128xf32> to vector<8x128xf32>
      %203 = vector.shape_cast %200 : vector<8x128xf32> to vector<1x8x128xf32>
      tpu.vector_store %arg5[%c7_71, %c0_72, %c0_73], %203 {strides = array<i32>} : memref<8x8x128xf32, #tpu.memory_space<vmem>>, vector<1x8x128xf32>,
      %c0_74 = arith.constant 0 : index
      %c0_75 = arith.constant 0 : index
      %c0_76 = arith.constant 0 : index
      %204 = vector.load %arg6[%c0_74, %c0_75, %c0_76] : memref<1x8x128xf32, #tpu.memory_space<vmem>>, vector<1x8x128xf32>
      %205 = vector.shape_cast %204 : vector<1x8x128xf32> to vector<8x128xf32>
      %206 = vector.shape_cast %200 : vector<8x128xf32> to vector<1x8x128xf32>
      tpu.vector_store %arg6[%c0_74, %c0_75, %c0_76], %206 {strides = array<i32>} : memref<1x8x128xf32, #tpu.memory_space<vmem>>, vector<1x8x128xf32>,
      %c0_77 = arith.constant 0 : index
      %c0_78 = arith.constant 0 : index
      %c0_79 = arith.constant 0 : index
      %207 = vector.load %arg7[%c0_77, %c0_78, %c0_79] : memref<1x8x128xf32, #tpu.memory_space<vmem>>, vector<1x8x128xf32>
      %208 = vector.shape_cast %207 : vector<1x8x128xf32> to vector<8x128xf32>
      %209 = vector.shape_cast %198 : vector<8x128xf32> to vector<1x8x128xf32>
      tpu.vector_store %arg7[%c0_77, %c0_78, %c0_79], %209 {strides = array<i32>} : memref<1x8x128xf32, #tpu.memory_space<vmem>>, vector<1x8x128xf32>,
    } else {
    }
    %c1_i32 = arith.constant 1 : i32
    %5 = arith.cmpi eq, %arg0, %c1_i32 : i32
    %6 = arith.extui %5 : i1 to i32
    %c0_i32_3 = arith.constant 0 : i32
    %7 = arith.cmpi ne, %6, %c0_i32_3 : i32
    scf.if %7 {
      %c0_4 = arith.constant 0 : index
      %c0_5 = arith.constant 0 : index
      %c0_6 = arith.constant 0 : index
      %8 = vector.load %arg3[%c0_4, %c0_5, %c0_6] : memref<1x8x128xf32, #tpu.memory_space<vmem>>, vector<1x8x128xf32>
      %9 = vector.shape_cast %8 : vector<1x8x128xf32> to vector<8x128xf32>
      %c0_7 = arith.constant 0 : index
      %c0_8 = arith.constant 0 : index
      %c0_9 = arith.constant 0 : index
      %10 = vector.load %arg4[%c0_7, %c0_8, %c0_9] : memref<1x8x128xf32, #tpu.memory_space<vmem>>, vector<1x8x128xf32>
      %11 = vector.shape_cast %10 : vector<1x8x128xf32> to vector<8x128xf32>
      %c0_10 = arith.constant 0 : index
      %c7 = arith.constant 7 : index
      %c0_11 = arith.constant 0 : index
      %c0_12 = arith.constant 0 : index
      %12 = vector.load %arg1[%c0_10, %c7, %c0_11, %c0_12] : memref<1x8x8x512xf32, #tpu.memory_space<vmem>>, vector<1x1x8x512xf32>
      %13 = vector.shape_cast %12 : vector<1x1x8x512xf32> to vector<8x512xf32>
      %14 = arith.truncf %9 : vector<8x128xf32> to vector<8x128xbf16>
      %cst = arith.constant dense<0.000000e+00> : vector<8x512xf32>
      %15 = tpu.matmul %14, %1, %cst {dimension_numbers = #tpu.dot_dimension_numbers<[1], [0], [0], [1], [0, 0, 1, 1], [], []>} : vector<8x128xbf16>, vector<128x512xbf16>, vector<8x512xf32> -> vector<8x512xf32>
      %16 = arith.addf %13, %15 : vector<8x512xf32>
      %17 = vector.extract_strided_slice %16 {offsets = [0, 0], sizes = [8, 384], strides = [1, 1]} : vector<8x512xf32> to vector<8x384xf32>
      %18 = arith.negf %17 : vector<8x384xf32>
      %19 = math.exp %18 : vector<8x384xf32>
      %cst_13 = arith.constant 1.000000e+00 : f32
      %20 = vector.broadcast %cst_13 : f32 to vector<8x384xf32>
      %21 = arith.addf %20, %19 : vector<8x384xf32>
      %22 = arith.divf %20, %21 : vector<8x384xf32>
      %23 = vector.extract_strided_slice %22 {offsets = [0, 0], sizes = [8, 128], strides = [1, 1]} : vector<8x384xf32> to vector<8x128xf32>
      %24 = vector.extract_strided_slice %22 {offsets = [0, 128], sizes = [8, 128], strides = [1, 1]} : vector<8x384xf32> to vector<8x128xf32>
      %25 = vector.extract_strided_slice %22 {offsets = [0, 256], sizes = [8, 128], strides = [1, 1]} : vector<8x384xf32> to vector<8x128xf32>
      %26 = vector.extract_strided_slice %16 {offsets = [0, 384], sizes = [8, 128], strides = [1, 1]} : vector<8x512xf32> to vector<8x128xf32>
      %27 = math.tanh %26 : vector<8x128xf32>
      %28 = arith.mulf %24, %11 : vector<8x128xf32>
      %29 = arith.mulf %23, %27 : vector<8x128xf32>
      %30 = arith.addf %28, %29 : vector<8x128xf32>
      %31 = math.tanh %30 : vector<8x128xf32>
      %32 = arith.mulf %25, %31 : vector<8x128xf32>
      %c7_14 = arith.constant 7 : index
      %c0_15 = arith.constant 0 : index
      %c0_16 = arith.constant 0 : index
      %33 = vector.load %arg5[%c7_14, %c0_15, %c0_16] : memref<8x8x128xf32, #tpu.memory_space<vmem>>, vector<1x8x128xf32>
      %34 = vector.shape_cast %33 : vector<1x8x128xf32> to vector<8x128xf32>
      %35 = vector.shape_cast %32 : vector<8x128xf32> to vector<1x8x128xf32>
      tpu.vector_store %arg5[%c7_14, %c0_15, %c0_16], %35 {strides = array<i32>} : memref<8x8x128xf32, #tpu.memory_space<vmem>>, vector<1x8x128xf32>,
      %c0_17 = arith.constant 0 : index
      %c6 = arith.constant 6 : index
      %c0_18 = arith.constant 0 : index
      %c0_19 = arith.constant 0 : index
      %36 = vector.load %arg1[%c0_17, %c6, %c0_18, %c0_19] : memref<1x8x8x512xf32, #tpu.memory_space<vmem>>, vector<1x1x8x512xf32>
      %37 = vector.shape_cast %36 : vector<1x1x8x512xf32> to vector<8x512xf32>
      %38 = arith.truncf %32 : vector<8x128xf32> to vector<8x128xbf16>
      %cst_20 = arith.constant dense<0.000000e+00> : vector<8x512xf32>
      %39 = tpu.matmul %38, %1, %cst_20 {dimension_numbers = #tpu.dot_dimension_numbers<[1], [0], [0], [1], [0, 0, 1, 1], [], []>} : vector<8x128xbf16>, vector<128x512xbf16>, vector<8x512xf32> -> vector<8x512xf32>
      %40 = arith.addf %37, %39 : vector<8x512xf32>
      %41 = vector.extract_strided_slice %40 {offsets = [0, 0], sizes = [8, 384], strides = [1, 1]} : vector<8x512xf32> to vector<8x384xf32>
      %42 = arith.negf %41 : vector<8x384xf32>
      %43 = math.exp %42 : vector<8x384xf32>
      %cst_21 = arith.constant 1.000000e+00 : f32
      %44 = vector.broadcast %cst_21 : f32 to vector<8x384xf32>
      %45 = arith.addf %44, %43 : vector<8x384xf32>
      %46 = arith.divf %44, %45 : vector<8x384xf32>
      %47 = vector.extract_strided_slice %46 {offsets = [0, 0], sizes = [8, 128], strides = [1, 1]} : vector<8x384xf32> to vector<8x128xf32>
      %48 = vector.extract_strided_slice %46 {offsets = [0, 128], sizes = [8, 128], strides = [1, 1]} : vector<8x384xf32> to vector<8x128xf32>
      %49 = vector.extract_strided_slice %46 {offsets = [0, 256], sizes = [8, 128], strides = [1, 1]} : vector<8x384xf32> to vector<8x128xf32>
      %50 = vector.extract_strided_slice %40 {offsets = [0, 384], sizes = [8, 128], strides = [1, 1]} : vector<8x512xf32> to vector<8x128xf32>
      %51 = math.tanh %50 : vector<8x128xf32>
      %52 = arith.mulf %48, %30 : vector<8x128xf32>
      %53 = arith.mulf %47, %51 : vector<8x128xf32>
      %54 = arith.addf %52, %53 : vector<8x128xf32>
      %55 = math.tanh %54 : vector<8x128xf32>
      %56 = arith.mulf %49, %55 : vector<8x128xf32>
      %c6_22 = arith.constant 6 : index
      %c0_23 = arith.constant 0 : index
      %c0_24 = arith.constant 0 : index
      %57 = vector.load %arg5[%c6_22, %c0_23, %c0_24] : memref<8x8x128xf32, #tpu.memory_space<vmem>>, vector<1x8x128xf32>
      %58 = vector.shape_cast %57 : vector<1x8x128xf32> to vector<8x128xf32>
      %59 = vector.shape_cast %56 : vector<8x128xf32> to vector<1x8x128xf32>
      tpu.vector_store %arg5[%c6_22, %c0_23, %c0_24], %59 {strides = array<i32>} : memref<8x8x128xf32, #tpu.memory_space<vmem>>, vector<1x8x128xf32>,
      %c0_25 = arith.constant 0 : index
      %c5 = arith.constant 5 : index
      %c0_26 = arith.constant 0 : index
      %c0_27 = arith.constant 0 : index
      %60 = vector.load %arg1[%c0_25, %c5, %c0_26, %c0_27] : memref<1x8x8x512xf32, #tpu.memory_space<vmem>>, vector<1x1x8x512xf32>
      %61 = vector.shape_cast %60 : vector<1x1x8x512xf32> to vector<8x512xf32>
      %62 = arith.truncf %56 : vector<8x128xf32> to vector<8x128xbf16>
      %cst_28 = arith.constant dense<0.000000e+00> : vector<8x512xf32>
      %63 = tpu.matmul %62, %1, %cst_28 {dimension_numbers = #tpu.dot_dimension_numbers<[1], [0], [0], [1], [0, 0, 1, 1], [], []>} : vector<8x128xbf16>, vector<128x512xbf16>, vector<8x512xf32> -> vector<8x512xf32>
      %64 = arith.addf %61, %63 : vector<8x512xf32>
      %65 = vector.extract_strided_slice %64 {offsets = [0, 0], sizes = [8, 384], strides = [1, 1]} : vector<8x512xf32> to vector<8x384xf32>
      %66 = arith.negf %65 : vector<8x384xf32>
      %67 = math.exp %66 : vector<8x384xf32>
      %cst_29 = arith.constant 1.000000e+00 : f32
      %68 = vector.broadcast %cst_29 : f32 to vector<8x384xf32>
      %69 = arith.addf %68, %67 : vector<8x384xf32>
      %70 = arith.divf %68, %69 : vector<8x384xf32>
      %71 = vector.extract_strided_slice %70 {offsets = [0, 0], sizes = [8, 128], strides = [1, 1]} : vector<8x384xf32> to vector<8x128xf32>
      %72 = vector.extract_strided_slice %70 {offsets = [0, 128], sizes = [8, 128], strides = [1, 1]} : vector<8x384xf32> to vector<8x128xf32>
      %73 = vector.extract_strided_slice %70 {offsets = [0, 256], sizes = [8, 128], strides = [1, 1]} : vector<8x384xf32> to vector<8x128xf32>
      %74 = vector.extract_strided_slice %64 {offsets = [0, 384], sizes = [8, 128], strides = [1, 1]} : vector<8x512xf32> to vector<8x128xf32>
      %75 = math.tanh %74 : vector<8x128xf32>
      %76 = arith.mulf %72, %54 : vector<8x128xf32>
      %77 = arith.mulf %71, %75 : vector<8x128xf32>
      %78 = arith.addf %76, %77 : vector<8x128xf32>
      %79 = math.tanh %78 : vector<8x128xf32>
      %80 = arith.mulf %73, %79 : vector<8x128xf32>
      %c5_30 = arith.constant 5 : index
      %c0_31 = arith.constant 0 : index
      %c0_32 = arith.constant 0 : index
      %81 = vector.load %arg5[%c5_30, %c0_31, %c0_32] : memref<8x8x128xf32, #tpu.memory_space<vmem>>, vector<1x8x128xf32>
      %82 = vector.shape_cast %81 : vector<1x8x128xf32> to vector<8x128xf32>
      %83 = vector.shape_cast %80 : vector<8x128xf32> to vector<1x8x128xf32>
      tpu.vector_store %arg5[%c5_30, %c0_31, %c0_32], %83 {strides = array<i32>} : memref<8x8x128xf32, #tpu.memory_space<vmem>>, vector<1x8x128xf32>,
      %c0_33 = arith.constant 0 : index
      %c4 = arith.constant 4 : index
      %c0_34 = arith.constant 0 : index
      %c0_35 = arith.constant 0 : index
      %84 = vector.load %arg1[%c0_33, %c4, %c0_34, %c0_35] : memref<1x8x8x512xf32, #tpu.memory_space<vmem>>, vector<1x1x8x512xf32>
      %85 = vector.shape_cast %84 : vector<1x1x8x512xf32> to vector<8x512xf32>
      %86 = arith.truncf %80 : vector<8x128xf32> to vector<8x128xbf16>
      %cst_36 = arith.constant dense<0.000000e+00> : vector<8x512xf32>
      %87 = tpu.matmul %86, %1, %cst_36 {dimension_numbers = #tpu.dot_dimension_numbers<[1], [0], [0], [1], [0, 0, 1, 1], [], []>} : vector<8x128xbf16>, vector<128x512xbf16>, vector<8x512xf32> -> vector<8x512xf32>
      %88 = arith.addf %85, %87 : vector<8x512xf32>
      %89 = vector.extract_strided_slice %88 {offsets = [0, 0], sizes = [8, 384], strides = [1, 1]} : vector<8x512xf32> to vector<8x384xf32>
      %90 = arith.negf %89 : vector<8x384xf32>
      %91 = math.exp %90 : vector<8x384xf32>
      %cst_37 = arith.constant 1.000000e+00 : f32
      %92 = vector.broadcast %cst_37 : f32 to vector<8x384xf32>
      %93 = arith.addf %92, %91 : vector<8x384xf32>
      %94 = arith.divf %92, %93 : vector<8x384xf32>
      %95 = vector.extract_strided_slice %94 {offsets = [0, 0], sizes = [8, 128], strides = [1, 1]} : vector<8x384xf32> to vector<8x128xf32>
      %96 = vector.extract_strided_slice %94 {offsets = [0, 128], sizes = [8, 128], strides = [1, 1]} : vector<8x384xf32> to vector<8x128xf32>
      %97 = vector.extract_strided_slice %94 {offsets = [0, 256], sizes = [8, 128], strides = [1, 1]} : vector<8x384xf32> to vector<8x128xf32>
      %98 = vector.extract_strided_slice %88 {offsets = [0, 384], sizes = [8, 128], strides = [1, 1]} : vector<8x512xf32> to vector<8x128xf32>
      %99 = math.tanh %98 : vector<8x128xf32>
      %100 = arith.mulf %96, %78 : vector<8x128xf32>
      %101 = arith.mulf %95, %99 : vector<8x128xf32>
      %102 = arith.addf %100, %101 : vector<8x128xf32>
      %103 = math.tanh %102 : vector<8x128xf32>
      %104 = arith.mulf %97, %103 : vector<8x128xf32>
      %c4_38 = arith.constant 4 : index
      %c0_39 = arith.constant 0 : index
      %c0_40 = arith.constant 0 : index
      %105 = vector.load %arg5[%c4_38, %c0_39, %c0_40] : memref<8x8x128xf32, #tpu.memory_space<vmem>>, vector<1x8x128xf32>
      %106 = vector.shape_cast %105 : vector<1x8x128xf32> to vector<8x128xf32>
      %107 = vector.shape_cast %104 : vector<8x128xf32> to vector<1x8x128xf32>
      tpu.vector_store %arg5[%c4_38, %c0_39, %c0_40], %107 {strides = array<i32>} : memref<8x8x128xf32, #tpu.memory_space<vmem>>, vector<1x8x128xf32>,
      %c0_41 = arith.constant 0 : index
      %c3 = arith.constant 3 : index
      %c0_42 = arith.constant 0 : index
      %c0_43 = arith.constant 0 : index
      %108 = vector.load %arg1[%c0_41, %c3, %c0_42, %c0_43] : memref<1x8x8x512xf32, #tpu.memory_space<vmem>>, vector<1x1x8x512xf32>
      %109 = vector.shape_cast %108 : vector<1x1x8x512xf32> to vector<8x512xf32>
      %110 = arith.truncf %104 : vector<8x128xf32> to vector<8x128xbf16>
      %cst_44 = arith.constant dense<0.000000e+00> : vector<8x512xf32>
      %111 = tpu.matmul %110, %1, %cst_44 {dimension_numbers = #tpu.dot_dimension_numbers<[1], [0], [0], [1], [0, 0, 1, 1], [], []>} : vector<8x128xbf16>, vector<128x512xbf16>, vector<8x512xf32> -> vector<8x512xf32>
      %112 = arith.addf %109, %111 : vector<8x512xf32>
      %113 = vector.extract_strided_slice %112 {offsets = [0, 0], sizes = [8, 384], strides = [1, 1]} : vector<8x512xf32> to vector<8x384xf32>
      %114 = arith.negf %113 : vector<8x384xf32>
      %115 = math.exp %114 : vector<8x384xf32>
      %cst_45 = arith.constant 1.000000e+00 : f32
      %116 = vector.broadcast %cst_45 : f32 to vector<8x384xf32>
      %117 = arith.addf %116, %115 : vector<8x384xf32>
      %118 = arith.divf %116, %117 : vector<8x384xf32>
      %119 = vector.extract_strided_slice %118 {offsets = [0, 0], sizes = [8, 128], strides = [1, 1]} : vector<8x384xf32> to vector<8x128xf32>
      %120 = vector.extract_strided_slice %118 {offsets = [0, 128], sizes = [8, 128], strides = [1, 1]} : vector<8x384xf32> to vector<8x128xf32>
      %121 = vector.extract_strided_slice %118 {offsets = [0, 256], sizes = [8, 128], strides = [1, 1]} : vector<8x384xf32> to vector<8x128xf32>
      %122 = vector.extract_strided_slice %112 {offsets = [0, 384], sizes = [8, 128], strides = [1, 1]} : vector<8x512xf32> to vector<8x128xf32>
      %123 = math.tanh %122 : vector<8x128xf32>
      %124 = arith.mulf %120, %102 : vector<8x128xf32>
      %125 = arith.mulf %119, %123 : vector<8x128xf32>
      %126 = arith.addf %124, %125 : vector<8x128xf32>
      %127 = math.tanh %126 : vector<8x128xf32>
      %128 = arith.mulf %121, %127 : vector<8x128xf32>
      %c3_46 = arith.constant 3 : index
      %c0_47 = arith.constant 0 : index
      %c0_48 = arith.constant 0 : index
      %129 = vector.load %arg5[%c3_46, %c0_47, %c0_48] : memref<8x8x128xf32, #tpu.memory_space<vmem>>, vector<1x8x128xf32>
      %130 = vector.shape_cast %129 : vector<1x8x128xf32> to vector<8x128xf32>
      %131 = vector.shape_cast %128 : vector<8x128xf32> to vector<1x8x128xf32>
      tpu.vector_store %arg5[%c3_46, %c0_47, %c0_48], %131 {strides = array<i32>} : memref<8x8x128xf32, #tpu.memory_space<vmem>>, vector<1x8x128xf32>,
      %c0_49 = arith.constant 0 : index
      %c2 = arith.constant 2 : index
      %c0_50 = arith.constant 0 : index
      %c0_51 = arith.constant 0 : index
      %132 = vector.load %arg1[%c0_49, %c2, %c0_50, %c0_51] : memref<1x8x8x512xf32, #tpu.memory_space<vmem>>, vector<1x1x8x512xf32>
      %133 = vector.shape_cast %132 : vector<1x1x8x512xf32> to vector<8x512xf32>
      %134 = arith.truncf %128 : vector<8x128xf32> to vector<8x128xbf16>
      %cst_52 = arith.constant dense<0.000000e+00> : vector<8x512xf32>
      %135 = tpu.matmul %134, %1, %cst_52 {dimension_numbers = #tpu.dot_dimension_numbers<[1], [0], [0], [1], [0, 0, 1, 1], [], []>} : vector<8x128xbf16>, vector<128x512xbf16>, vector<8x512xf32> -> vector<8x512xf32>
      %136 = arith.addf %133, %135 : vector<8x512xf32>
      %137 = vector.extract_strided_slice %136 {offsets = [0, 0], sizes = [8, 384], strides = [1, 1]} : vector<8x512xf32> to vector<8x384xf32>
      %138 = arith.negf %137 : vector<8x384xf32>
      %139 = math.exp %138 : vector<8x384xf32>
      %cst_53 = arith.constant 1.000000e+00 : f32
      %140 = vector.broadcast %cst_53 : f32 to vector<8x384xf32>
      %141 = arith.addf %140, %139 : vector<8x384xf32>
      %142 = arith.divf %140, %141 : vector<8x384xf32>
      %143 = vector.extract_strided_slice %142 {offsets = [0, 0], sizes = [8, 128], strides = [1, 1]} : vector<8x384xf32> to vector<8x128xf32>
      %144 = vector.extract_strided_slice %142 {offsets = [0, 128], sizes = [8, 128], strides = [1, 1]} : vector<8x384xf32> to vector<8x128xf32>
      %145 = vector.extract_strided_slice %142 {offsets = [0, 256], sizes = [8, 128], strides = [1, 1]} : vector<8x384xf32> to vector<8x128xf32>
      %146 = vector.extract_strided_slice %136 {offsets = [0, 384], sizes = [8, 128], strides = [1, 1]} : vector<8x512xf32> to vector<8x128xf32>
      %147 = math.tanh %146 : vector<8x128xf32>
      %148 = arith.mulf %144, %126 : vector<8x128xf32>
      %149 = arith.mulf %143, %147 : vector<8x128xf32>
      %150 = arith.addf %148, %149 : vector<8x128xf32>
      %151 = math.tanh %150 : vector<8x128xf32>
      %152 = arith.mulf %145, %151 : vector<8x128xf32>
      %c2_54 = arith.constant 2 : index
      %c0_55 = arith.constant 0 : index
      %c0_56 = arith.constant 0 : index
      %153 = vector.load %arg5[%c2_54, %c0_55, %c0_56] : memref<8x8x128xf32, #tpu.memory_space<vmem>>, vector<1x8x128xf32>
      %154 = vector.shape_cast %153 : vector<1x8x128xf32> to vector<8x128xf32>
      %155 = vector.shape_cast %152 : vector<8x128xf32> to vector<1x8x128xf32>
      tpu.vector_store %arg5[%c2_54, %c0_55, %c0_56], %155 {strides = array<i32>} : memref<8x8x128xf32, #tpu.memory_space<vmem>>, vector<1x8x128xf32>,
      %c0_57 = arith.constant 0 : index
      %c1 = arith.constant 1 : index
      %c0_58 = arith.constant 0 : index
      %c0_59 = arith.constant 0 : index
      %156 = vector.load %arg1[%c0_57, %c1, %c0_58, %c0_59] : memref<1x8x8x512xf32, #tpu.memory_space<vmem>>, vector<1x1x8x512xf32>
      %157 = vector.shape_cast %156 : vector<1x1x8x512xf32> to vector<8x512xf32>
      %158 = arith.truncf %152 : vector<8x128xf32> to vector<8x128xbf16>
      %cst_60 = arith.constant dense<0.000000e+00> : vector<8x512xf32>
      %159 = tpu.matmul %158, %1, %cst_60 {dimension_numbers = #tpu.dot_dimension_numbers<[1], [0], [0], [1], [0, 0, 1, 1], [], []>} : vector<8x128xbf16>, vector<128x512xbf16>, vector<8x512xf32> -> vector<8x512xf32>
      %160 = arith.addf %157, %159 : vector<8x512xf32>
      %161 = vector.extract_strided_slice %160 {offsets = [0, 0], sizes = [8, 384], strides = [1, 1]} : vector<8x512xf32> to vector<8x384xf32>
      %162 = arith.negf %161 : vector<8x384xf32>
      %163 = math.exp %162 : vector<8x384xf32>
      %cst_61 = arith.constant 1.000000e+00 : f32
      %164 = vector.broadcast %cst_61 : f32 to vector<8x384xf32>
      %165 = arith.addf %164, %163 : vector<8x384xf32>
      %166 = arith.divf %164, %165 : vector<8x384xf32>
      %167 = vector.extract_strided_slice %166 {offsets = [0, 0], sizes = [8, 128], strides = [1, 1]} : vector<8x384xf32> to vector<8x128xf32>
      %168 = vector.extract_strided_slice %166 {offsets = [0, 128], sizes = [8, 128], strides = [1, 1]} : vector<8x384xf32> to vector<8x128xf32>
      %169 = vector.extract_strided_slice %166 {offsets = [0, 256], sizes = [8, 128], strides = [1, 1]} : vector<8x384xf32> to vector<8x128xf32>
      %170 = vector.extract_strided_slice %160 {offsets = [0, 384], sizes = [8, 128], strides = [1, 1]} : vector<8x512xf32> to vector<8x128xf32>
      %171 = math.tanh %170 : vector<8x128xf32>
      %172 = arith.mulf %168, %150 : vector<8x128xf32>
      %173 = arith.mulf %167, %171 : vector<8x128xf32>
      %174 = arith.addf %172, %173 : vector<8x128xf32>
      %175 = math.tanh %174 : vector<8x128xf32>
      %176 = arith.mulf %169, %175 : vector<8x128xf32>
      %c1_62 = arith.constant 1 : index
      %c0_63 = arith.constant 0 : index
      %c0_64 = arith.constant 0 : index
      %177 = vector.load %arg5[%c1_62, %c0_63, %c0_64] : memref<8x8x128xf32, #tpu.memory_space<vmem>>, vector<1x8x128xf32>
      %178 = vector.shape_cast %177 : vector<1x8x128xf32> to vector<8x128xf32>
      %179 = vector.shape_cast %176 : vector<8x128xf32> to vector<1x8x128xf32>
      tpu.vector_store %arg5[%c1_62, %c0_63, %c0_64], %179 {strides = array<i32>} : memref<8x8x128xf32, #tpu.memory_space<vmem>>, vector<1x8x128xf32>,
      %c0_65 = arith.constant 0 : index
      %c0_66 = arith.constant 0 : index
      %c0_67 = arith.constant 0 : index
      %c0_68 = arith.constant 0 : index
      %180 = vector.load %arg1[%c0_65, %c0_66, %c0_67, %c0_68] : memref<1x8x8x512xf32, #tpu.memory_space<vmem>>, vector<1x1x8x512xf32>
      %181 = vector.shape_cast %180 : vector<1x1x8x512xf32> to vector<8x512xf32>
      %182 = arith.truncf %176 : vector<8x128xf32> to vector<8x128xbf16>
      %cst_69 = arith.constant dense<0.000000e+00> : vector<8x512xf32>
      %183 = tpu.matmul %182, %1, %cst_69 {dimension_numbers = #tpu.dot_dimension_numbers<[1], [0], [0], [1], [0, 0, 1, 1], [], []>} : vector<8x128xbf16>, vector<128x512xbf16>, vector<8x512xf32> -> vector<8x512xf32>
      %184 = arith.addf %181, %183 : vector<8x512xf32>
      %185 = vector.extract_strided_slice %184 {offsets = [0, 0], sizes = [8, 384], strides = [1, 1]} : vector<8x512xf32> to vector<8x384xf32>
      %186 = arith.negf %185 : vector<8x384xf32>
      %187 = math.exp %186 : vector<8x384xf32>
      %cst_70 = arith.constant 1.000000e+00 : f32
      %188 = vector.broadcast %cst_70 : f32 to vector<8x384xf32>
      %189 = arith.addf %188, %187 : vector<8x384xf32>
      %190 = arith.divf %188, %189 : vector<8x384xf32>
      %191 = vector.extract_strided_slice %190 {offsets = [0, 0], sizes = [8, 128], strides = [1, 1]} : vector<8x384xf32> to vector<8x128xf32>
      %192 = vector.extract_strided_slice %190 {offsets = [0, 128], sizes = [8, 128], strides = [1, 1]} : vector<8x384xf32> to vector<8x128xf32>
      %193 = vector.extract_strided_slice %190 {offsets = [0, 256], sizes = [8, 128], strides = [1, 1]} : vector<8x384xf32> to vector<8x128xf32>
      %194 = vector.extract_strided_slice %184 {offsets = [0, 384], sizes = [8, 128], strides = [1, 1]} : vector<8x512xf32> to vector<8x128xf32>
      %195 = math.tanh %194 : vector<8x128xf32>
      %196 = arith.mulf %192, %174 : vector<8x128xf32>
      %197 = arith.mulf %191, %195 : vector<8x128xf32>
      %198 = arith.addf %196, %197 : vector<8x128xf32>
      %199 = math.tanh %198 : vector<8x128xf32>
      %200 = arith.mulf %193, %199 : vector<8x128xf32>
      %c0_71 = arith.constant 0 : index
      %c0_72 = arith.constant 0 : index
      %c0_73 = arith.constant 0 : index
      %201 = vector.load %arg5[%c0_71, %c0_72, %c0_73] : memref<8x8x128xf32, #tpu.memory_space<vmem>>, vector<1x8x128xf32>
      %202 = vector.shape_cast %201 : vector<1x8x128xf32> to vector<8x128xf32>
      %203 = vector.shape_cast %200 : vector<8x128xf32> to vector<1x8x128xf32>
      tpu.vector_store %arg5[%c0_71, %c0_72, %c0_73], %203 {strides = array<i32>} : memref<8x8x128xf32, #tpu.memory_space<vmem>>, vector<1x8x128xf32>,
      %c0_74 = arith.constant 0 : index
      %c0_75 = arith.constant 0 : index
      %c0_76 = arith.constant 0 : index
      %204 = vector.load %arg6[%c0_74, %c0_75, %c0_76] : memref<1x8x128xf32, #tpu.memory_space<vmem>>, vector<1x8x128xf32>
      %205 = vector.shape_cast %204 : vector<1x8x128xf32> to vector<8x128xf32>
      %206 = vector.shape_cast %200 : vector<8x128xf32> to vector<1x8x128xf32>
      tpu.vector_store %arg6[%c0_74, %c0_75, %c0_76], %206 {strides = array<i32>} : memref<1x8x128xf32, #tpu.memory_space<vmem>>, vector<1x8x128xf32>,
      %c0_77 = arith.constant 0 : index
      %c0_78 = arith.constant 0 : index
      %c0_79 = arith.constant 0 : index
      %207 = vector.load %arg7[%c0_77, %c0_78, %c0_79] : memref<1x8x128xf32, #tpu.memory_space<vmem>>, vector<1x8x128xf32>
      %208 = vector.shape_cast %207 : vector<1x8x128xf32> to vector<8x128xf32>
      %209 = vector.shape_cast %198 : vector<8x128xf32> to vector<1x8x128xf32>
      tpu.vector_store %arg7[%c0_77, %c0_78, %c0_79], %209 {strides = array<i32>} : memref<1x8x128xf32, #tpu.memory_space<vmem>>, vector<1x8x128xf32>,
    } else {
    }
    return
  }
  func.func @transform_0(%arg0: i32) -> (i32, i32, i32, i32) {
    %c0_i32 = arith.constant 0 : i32
    %c0_i32_0 = arith.constant 0 : i32
    %c0_i32_1 = arith.constant 0 : i32
    %c0_i32_2 = arith.constant 0 : i32
    return %arg0, %c0_i32, %c0_i32_0, %c0_i32_1 : i32, i32, i32, i32
  }
  func.func @transform_1(%arg0: i32) -> (i32, i32, i32) {
    %c0_i32 = arith.constant 0 : i32
    %c0_i32_0 = arith.constant 0 : i32
    %c0_i32_1 = arith.constant 0 : i32
    return %arg0, %c0_i32, %c0_i32_0 : i32, i32, i32
  }
  func.func @transform_2(%arg0: i32) -> (i32, i32, i32) {
    %c0_i32 = arith.constant 0 : i32
    %c0_i32_0 = arith.constant 0 : i32
    %c0_i32_1 = arith.constant 0 : i32
    return %arg0, %c0_i32, %c0_i32_0 : i32, i32, i32
  }
  func.func @transform_3(%arg0: i32) -> (i32, i32, i32) {
    %c0_i32 = arith.constant 0 : i32
    %c0_i32_0 = arith.constant 0 : i32
    %c0_i32_1 = arith.constant 0 : i32
    return %arg0, %c0_i32, %c0_i32_0 : i32, i32, i32
  }
  func.func @transform_4(%arg0: i32) -> (i32, i32, i32) {
    %c0_i32 = arith.constant 0 : i32
    %c0_i32_0 = arith.constant 0 : i32
    %c0_i32_1 = arith.constant 0 : i32
    return %c0_i32, %c0_i32_0, %arg0 : i32, i32, i32
  }
  func.func @transform_5(%arg0: i32) -> (i32, i32, i32) {
    %c0_i32 = arith.constant 0 : i32
    %c0_i32_0 = arith.constant 0 : i32
    %c0_i32_1 = arith.constant 0 : i32
    return %arg0, %c0_i32, %c0_i32_0 : i32, i32, i32
  }
  func.func @transform_6(%arg0: i32) -> (i32, i32, i32) {
    %c0_i32 = arith.constant 0 : i32
    %c0_i32_0 = arith.constant 0 : i32
    %c0_i32_1 = arith.constant 0 : i32
    return %arg0, %c0_i32, %c0_i32_0 : i32, i32, i32
  }
}

</mosaic_0001>

<llo_original>
// kernel: encoder_forward.1
$region0: #{encoder_forward.1}
  #allocation0 [shape = 'u32[]', space=smem, size = 0x4, offset = 0x4, fixed_abs, tag = 'smem constant byte address 0x4 - core index']
  #allocation1 [shape = 'u32[72,128]{1,0:T(1,128)}', space=vmem, size = 0x9000, scoped, tag = 'internal scratch']
  %s0 = inlined_call_operand.vmem [shape: f32[2,8,8,512], index: 0, kind: input, shape index: {}]
  %s1 = inlined_call_operand.vmem [shape: bf16[2,128,512], index: 1, kind: input, shape index: {}]
  %s2 = inlined_call_operand.vmem [shape: f32[2,8,128], index: 2, kind: input, shape index: {}, may-alias: {2,3}]
  %s3 = inlined_call_operand.vmem [shape: f32[2,8,128], index: 3, kind: input, shape index: {}, may-alias: {2,3}]
  %s4 = inlined_call_operand.vmem [shape: f32[8,8,256], index: 4, kind: output, shape index: {0}]
  %s5 = inlined_call_operand.vmem [shape: f32[2,8,128], index: 5, kind: output, shape index: {1}]
  %s6 = inlined_call_operand.vmem [shape: f32[2,8,128], index: 6, kind: output, shape index: {2}]
  %7 = xla_tuple %s4, %s5, %s6
  %s8 = sld [smem:[#allocation0]]
  $region107: #{encoder_forward.1} parent=0
    _
  %s10 = ssub.s32 1, %s8
  %s11 = scalar_select 0, %s10, %s8
  $region1: #{encoder_forward.1} parent=0
    #allocation2 [shape = 'u8[65536]{0}', space=vmem, size = 0x10000, scoped, tag = 'output window, operand 0']
    loop: start=0, step=1, limit=4
    $region2: #{encoder_forward.1} parent=1 // loop_pre_header
      _
    $region3: #{encoder_forward.1} parent=1 // loop_header
      %s13 = sphi 0, %s17
      %p14 = scmp.ge.s32.totalorder %s13, 4
      %s23 = sphi 0, %s25
      %s26 = sphi 0, %s23
      %s27 = sphi 0, %s26
      %s43 = sphi 0, %s27
      %s49 = sphi 0, %s51
      %s52 = sphi 0, %s49
      %s53 = sphi 0, %s52
      %s69 = sphi 0, %s53
      %s75 = sphi 0, %s77
      %s78 = sphi 0, %s75
      %s79 = sphi 0, %s78
      %s95 = sphi 0, %s79
      %s101 = sphi 0, %s103
      %s104 = sphi 0, %s101
      %s105 = sphi 0, %s104
      %s121 = sphi 0, %s105
      %s127 = sphi 0, %s129
      %s130 = sphi 0, %s127
      %s131 = sphi 0, %s130
      %s147 = sphi 0, %s131
      %s153 = sphi 0, %s155
      %s156 = sphi 0, %s153
      %s157 = sphi 0, %s156
      %s173 = sphi 0, %s157
      %s179 = sphi 0, %s181
      %s182 = sphi 0, %s179
      %s183 = sphi 0, %s182
      %s199 = sphi 0, %s183
    $region4: #{encoder_forward.1} parent=1 // loop_header_branch
      %16 = sbr.rel (%p14) target = $region8
    $region5: #{encoder_forward.1} parent=1 // loop_body
      %s18 = ssub.s32 %s13, 1
      %s19 = ssub.s32 %s13, 2
      %s20 = sadd.s32 %s13, 1
      %s21 = ssub.s32 %s13, %s20
      %p22 = scmp.eq.s32.totalorder %s21, 0
      %s24 = sadd.s32 %s23, 1
      %s25 = scalar_select %p22, %s23, %s24
      %p28 = pneg %p22
      %p29 = scmp.eq.s32.totalorder %s13, 1
      %p30 = por %p28, %p29
      %p31 = scmp.ne.s32.totalorder %s23, %s26
      %p32 = scmp.eq.s32.totalorder %s13, 0
      %p33 = por %p31, %p32
      %p34 = scmp.ne.s32.totalorder %s23, %s26
      %p35 = scmp.eq.s32.totalorder %s18, 1
      %p36 = por %p34, %p35
      %p37 = scmp.ne.s32.totalorder %s26, %s27
      %p38 = scmp.eq.s32.totalorder %s18, 0
      %p39 = por %p37, %p38
      %p40 = scmp.ne.s32.totalorder %s26, %s27
      %p41 = scmp.eq.s32.totalorder %s19, 1
      %p42 = por %p40, %p41
      %p44 = scmp.ne.s32.totalorder %s27, %s43
      %p45 = scmp.eq.s32.totalorder %s19, 0
      %p46 = por %p44, %p45
      %s47 = ssub.s32 %s13, %s20
      %p48 = scmp.eq.s32.totalorder %s47, 0
      %s50 = sadd.s32 %s49, 1
      %s51 = scalar_select %p48, %s49, %s50
      %p54 = pneg %p48
      %p55 = scmp.eq.s32.totalorder %s13, 1
      %p56 = por %p54, %p55
      %p57 = scmp.ne.s32.totalorder %s49, %s52
      %p58 = scmp.eq.s32.totalorder %s13, 0
      %p59 = por %p57, %p58
      %p60 = scmp.ne.s32.totalorder %s49, %s52
      %p61 = scmp.eq.s32.totalorder %s18, 1
      %p62 = por %p60, %p61
      %p63 = scmp.ne.s32.totalorder %s52, %s53
      %p64 = scmp.eq.s32.totalorder %s18, 0
      %p65 = por %p63, %p64
      %p66 = scmp.ne.s32.totalorder %s52, %s53
      %p67 = scmp.eq.s32.totalorder %s19, 1
      %p68 = por %p66, %p67
      %p70 = scmp.ne.s32.totalorder %s53, %s69
      %p71 = scmp.eq.s32.totalorder %s19, 0
      %p72 = por %p70, %p71
      %s73 = ssub.s32 %s13, %s20
      %p74 = scmp.eq.s32.totalorder %s73, 0
      %s76 = sadd.s32 %s75, 1
      %s77 = scalar_select %p74, %s75, %s76
      %p80 = pneg %p74
      %p81 = scmp.eq.s32.totalorder %s13, 1
      %p82 = por %p80, %p81
      %p83 = scmp.ne.s32.totalorder %s75, %s78
      %p84 = scmp.eq.s32.totalorder %s13, 0
      %p85 = por %p83, %p84
      %p86 = scmp.ne.s32.totalorder %s75, %s78
      %p87 = scmp.eq.s32.totalorder %s18, 1
      %p88 = por %p86, %p87
      %p89 = scmp.ne.s32.totalorder %s78, %s79
      %p90 = scmp.eq.s32.totalorder %s18, 0
      %p91 = por %p89, %p90
      %p92 = scmp.ne.s32.totalorder %s78, %s79
      %p93 = scmp.eq.s32.totalorder %s19, 1
      %p94 = por %p92, %p93
      %p96 = scmp.ne.s32.totalorder %s79, %s95
      %p97 = scmp.eq.s32.totalorder %s19, 0
      %p98 = por %p96, %p97
      %s99 = ssub.s32 %s13, %s20
      %p100 = scmp.eq.s32.totalorder %s99, 0
      %s102 = sadd.s32 %s101, 1
      %s103 = scalar_select %p100, %s101, %s102
      %p106 = pneg %p100
      %p107 = scmp.eq.s32.totalorder %s13, 1
      %p108 = por %p106, %p107
      %p109 = scmp.ne.s32.totalorder %s101, %s104
      %p110 = scmp.eq.s32.totalorder %s13, 0
      %p111 = por %p109, %p110
      %p112 = scmp.ne.s32.totalorder %s101, %s104
      %p113 = scmp.eq.s32.totalorder %s18, 1
      %p114 = por %p112, %p113
      %p115 = scmp.ne.s32.totalorder %s104, %s105
      %p116 = scmp.eq.s32.totalorder %s18, 0
      %p117 = por %p115, %p116
      %p118 = scmp.ne.s32.totalorder %s104, %s105
      %p119 = scmp.eq.s32.totalorder %s19, 1
      %p120 = por %p118, %p119
      %p122 = scmp.ne.s32.totalorder %s105, %s121
      %p123 = scmp.eq.s32.totalorder %s19, 0
      %p124 = por %p122, %p123
      %s125 = ssub.s32 %s13, %s20
      %p126 = scmp.eq.s32.totalorder %s125, 0
      %s128 = sadd.s32 %s127, 1
      %s129 = scalar_select %p126, %s127, %s128
      %p132 = pneg %p126
      %p133 = scmp.eq.s32.totalorder %s13, 1
      %p134 = por %p132, %p133
      %p135 = scmp.ne.s32.totalorder %s127, %s130
      %p136 = scmp.eq.s32.totalorder %s13, 0
      %p137 = por %p135, %p136
      %p138 = scmp.ne.s32.totalorder %s127, %s130
      %p139 = scmp.eq.s32.totalorder %s18, 1
      %p140 = por %p138, %p139
      %p141 = scmp.ne.s32.totalorder %s130, %s131
      %p142 = scmp.eq.s32.totalorder %s18, 0
      %p143 = por %p141, %p142
      %p144 = scmp.ne.s32.totalorder %s130, %s131
      %p145 = scmp.eq.s32.totalorder %s19, 1
      %p146 = por %p144, %p145
      %p148 = scmp.ne.s32.totalorder %s131, %s147
      %p149 = scmp.eq.s32.totalorder %s19, 0
      %p150 = por %p148, %p149
      %s151 = ssub.s32 %s13, %s20
      %p152 = scmp.eq.s32.totalorder %s151, 0
      %s154 = sadd.s32 %s153, 1
      %s155 = scalar_select %p152, %s153, %s154
      %p158 = pneg %p152
      %p159 = scmp.eq.s32.totalorder %s13, 1
      %p160 = por %p158, %p159
      %p161 = scmp.ne.s32.totalorder %s153, %s156
      %p162 = scmp.eq.s32.totalorder %s13, 0
      %p163 = por %p161, %p162
      %p164 = scmp.ne.s32.totalorder %s153, %s156
      %p165 = scmp.eq.s32.totalorder %s18, 1
      %p166 = por %p164, %p165
      %p167 = scmp.ne.s32.totalorder %s156, %s157
      %p168 = scmp.eq.s32.totalorder %s18, 0
      %p169 = por %p167, %p168
      %p170 = scmp.ne.s32.totalorder %s156, %s157
      %p171 = scmp.eq.s32.totalorder %s19, 1
      %p172 = por %p170, %p171
      %p174 = scmp.ne.s32.totalorder %s157, %s173
      %p175 = scmp.eq.s32.totalorder %s19, 0
      %p176 = por %p174, %p175
      %s177 = ssub.s32 %s13, %s20
      %p178 = scmp.eq.s32.totalorder %s177, 0
      %s180 = sadd.s32 %s179, 1
      %s181 = scalar_select %p178, %s179, %s180
      %p184 = pneg %p178
      %p185 = scmp.eq.s32.totalorder %s13, 1
      %p186 = por %p184, %p185
      %p187 = scmp.ne.s32.totalorder %s179, %s182
      %p188 = scmp.eq.s32.totalorder %s13, 0
      %p189 = por %p187, %p188
      %p190 = scmp.ne.s32.totalorder %s179, %s182
      %p191 = scmp.eq.s32.totalorder %s18, 1
      %p192 = por %p190, %p191
      %p193 = scmp.ne.s32.totalorder %s182, %s183
      %p194 = scmp.eq.s32.totalorder %s18, 0
      %p195 = por %p193, %p194
      %p196 = scmp.ne.s32.totalorder %s182, %s183
      %p197 = scmp.eq.s32.totalorder %s19, 1
      %p198 = por %p196, %p197
      %p200 = scmp.ne.s32.totalorder %s183, %s199
      %p201 = scmp.eq.s32.totalorder %s19, 0
      %p202 = por %p200, %p201
      %p203 = scmp.le.s32.totalorder 1, %s13
      %p204 = scmp.lt.s32.totalorder %s13, 3
      %p205 = pnand %p203, %p204
      %p206 = pneg %p205
      // Predicated region
      $region9: #{encoder_forward.1} parent=5 // pred_check
        _
      $region10: #{encoder_forward.1} parent=5 // pred_check_branch
        %208 = sbr.rel (%p205) target = $region12
      $region11: #{encoder_forward.1} parent=5 // pred_region
        %s209 = ssub.s32 %s13, 1
      $region12: #{encoder_forward.1} parent=5 // pred_fallthru
        _
      %p210 = scmp.lt.s32.totalorder %s13, 2
      // Predicated region
      $region13: #{encoder_forward.1} parent=5 // pred_check
        %p211 = pneg %p210
      $region14: #{encoder_forward.1} parent=5 // pred_check_branch
        %213 = sbr.rel (%p211) target = $region16
      $region15: #{encoder_forward.1} parent=5 // pred_region
        // Predicated region
        $region17: #{encoder_forward.1} parent=15 // pred_check
          %p214 = pneg %p33
        $region18: #{encoder_forward.1} parent=15 // pred_check_branch
          %216 = sbr.rel (%p214) target = $region20
        $region19: #{encoder_forward.1} parent=15 // pred_region
          %p217 = scmp.lt.s32.totalorder %s13, 1
          %s218 = scalar_select %p217, %s13, 1
          %s219 = smul.addr %s218, 32
          %s220 = smul.addr %s219, 8
          %s221 = scalar_lea.vmem %s0, %s220
        $region20: #{encoder_forward.1} parent=15 // pred_fallthru
          _
        // Predicated region
        $region21: #{encoder_forward.1} parent=15 // pred_check
          %p222 = pneg %p59
        $region22: #{encoder_forward.1} parent=15 // pred_check_branch
          %224 = sbr.rel (%p222) target = $region24
        $region23: #{encoder_forward.1} parent=15 // pred_region
          %p225 = scmp.lt.s32.totalorder %s13, 1
          %s226 = scalar_select %p225, %s13, 1
          %s227 = smul.addr %s226, 64
          %s228 = smul.addr %s227, 4
          %s229 = scalar_lea.vmem %s1, %s228
        $region24: #{encoder_forward.1} parent=15 // pred_fallthru
          _
        // Predicated region
        $region25: #{encoder_forward.1} parent=15 // pred_check
          %p230 = pneg %p85
        $region26: #{encoder_forward.1} parent=15 // pred_check_branch
          %232 = sbr.rel (%p230) target = $region28
        $region27: #{encoder_forward.1} parent=15 // pred_region
          %p233 = scmp.lt.s32.totalorder %s13, 1
          %s234 = scalar_select %p233, %s13, 1
          %s235 = smul.addr %s234, 8
          %s236 = scalar_lea.vmem %s2, %s235
        $region28: #{encoder_forward.1} parent=15 // pred_fallthru
          _
        // Predicated region
        $region29: #{encoder_forward.1} parent=15 // pred_check
          %p237 = pneg %p111
        $region30: #{encoder_forward.1} parent=15 // pred_check_branch
          %239 = sbr.rel (%p237) target = $region32
        $region31: #{encoder_forward.1} parent=15 // pred_region
          %p240 = scmp.lt.s32.totalorder %s13, 1
          %s241 = scalar_select %p240, %s13, 1
          %s242 = smul.addr %s241, 8
          %s243 = scalar_lea.vmem %s3, %s242
        $region32: #{encoder_forward.1} parent=15 // pred_fallthru
          _
      $region16: #{encoder_forward.1} parent=5 // pred_fallthru
        _
      %p244 = scmp.le.s32.totalorder 1, %s13
      %p245 = scmp.lt.s32.totalorder %s13, 3
      %p246 = pnand %p244, %p245
      %p247 = pneg %p246
      // Predicated region
      $region33: #{encoder_forward.1} parent=5 // pred_check
        _
      $region34: #{encoder_forward.1} parent=5 // pred_check_branch
        %249 = sbr.rel (%p246) target = $region36
      $region35: #{encoder_forward.1} parent=5 // pred_region
        %s250 = ssub.s32 %s13, 1
        %p251 = scmp.lt.s32.totalorder %s18, 1
        %s252 = scalar_select %p251, %s18, 1
        %s253 = smul.addr %s252, 32
        %s254 = smul.addr %s253, 8
        %s255 = scalar_lea.vmem %s0, %s254
        %p256 = pneg %p39
        %p257 = pneg %p36
        %p258 = scmp.lt.s32.totalorder %s18, 1
        %s259 = scalar_select %p258, %s18, 1
        %s260 = smul.addr %s259, 64
        %s261 = smul.addr %s260, 4
        %s262 = scalar_lea.vmem %s1, %s261
        %p263 = pneg %p65
        %p264 = pneg %p62
        %p265 = scmp.lt.s32.totalorder %s18, 1
        %s266 = scalar_select %p265, %s18, 1
        %s267 = smul.addr %s266, 8
        %s268 = scalar_lea.vmem %s2, %s267
        %p269 = pneg %p91
        %p270 = pneg %p88
        %p271 = scmp.lt.s32.totalorder %s18, 1
        %s272 = scalar_select %p271, %s18, 1
        %s273 = smul.addr %s272, 8
        %s274 = scalar_lea.vmem %s3, %s273
        %p275 = pneg %p117
        %p276 = pneg %p114
        %p277 = pneg %p143
        %p278 = pneg %p140
        %s279 = sand.u32 %s130, 1
        %s280 = sand.u32 %s130, 1
        %s281 = smul.addr %s280, 64
        %s282 = scalar_lea.vmem [#allocation2], %s281
        %p283 = pneg %p169
        %p284 = pneg %p166
        %p285 = scmp.lt.s32.totalorder %s18, 1
        %s286 = scalar_select %p285, %s18, 1
        %s287 = smul.addr %s286, 8
        %s288 = scalar_lea.vmem %s5, %s287
        %p289 = pneg %p195
        %p290 = pneg %p192
        %p291 = scmp.lt.s32.totalorder %s18, 1
        %s292 = scalar_select %p291, %s18, 1
        %s293 = smul.addr %s292, 8
        %s294 = scalar_lea.vmem %s6, %s293
        %p295 = scmp.lt.s32.totalorder %s18, 1
        %s296 = scalar_select %p295, %s18, 1
        %s297 = smul.addr %s296, 32
        %s298 = smul.addr %s297, 8
        %s299 = scalar_lea.vmem %s0, %s298
        %p300 = scmp.lt.s32.totalorder %s18, 1
        %s301 = scalar_select %p300, %s18, 1
        %s302 = smul.addr %s301, 64
        %s303 = smul.addr %s302, 4
        %s304 = scalar_lea.vmem %s1, %s303
        %p305 = scmp.lt.s32.totalorder %s18, 1
        %s306 = scalar_select %p305, %s18, 1
        %s307 = smul.addr %s306, 8
        %s308 = scalar_lea.vmem %s2, %s307
        %p309 = scmp.lt.s32.totalorder %s18, 1
        %s310 = scalar_select %p309, %s18, 1
        %s311 = smul.addr %s310, 8
        %s312 = scalar_lea.vmem %s3, %s311
        %p313 = scmp.lt.s32.totalorder %s18, 1
        %s314 = scalar_select %p313, %s18, 1
        %s315 = smul.addr %s314, 8
        %s316 = scalar_lea.vmem %s5, %s315
        %p317 = scmp.lt.s32.totalorder %s18, 1
        %s318 = scalar_select %p317, %s18, 1
        %s319 = smul.addr %s318, 8
        %s320 = scalar_lea.vmem %s6, %s319
        %v321 = vld [vmem:[%s304] sm:$0xff]
        %v322 = vld [vmem:[%s304 + $0x8] sm:$0xff]
        %v323 = vld [vmem:[%s304 + $0x10] sm:$0xff]
        %v324 = vld [vmem:[%s304 + $0x18] sm:$0xff]
        %v325 = vld [vmem:[%s304 + $0x20] sm:$0xff]
        %v326 = vld [vmem:[%s304 + $0x28] sm:$0xff]
        %v327 = vld [vmem:[%s304 + $0x30] sm:$0xff]
        %v328 = vld [vmem:[%s304 + $0x38] sm:$0xff]
        %v329 = vld [vmem:[%s304 + $0x40] sm:$0xff]
        %v330 = vld [vmem:[%s304 + $0x48] sm:$0xff]
        %v331 = vld [vmem:[%s304 + $0x50] sm:$0xff]
        %v332 = vld [vmem:[%s304 + $0x58] sm:$0xff]
        %v333 = vld [vmem:[%s304 + $0x60] sm:$0xff]
        %v334 = vld [vmem:[%s304 + $0x68] sm:$0xff]
        %v335 = vld [vmem:[%s304 + $0x70] sm:$0xff]
        %v336 = vld [vmem:[%s304 + $0x78] sm:$0xff]
        %v337 = vld [vmem:[%s304 + $0x80] sm:$0xff]
        %v338 = vld [vmem:[%s304 + $0x88] sm:$0xff]
        %v339 = vld [vmem:[%s304 + $0x90] sm:$0xff]
        %v340 = vld [vmem:[%s304 + $0x98] sm:$0xff]
        %v341 = vld [vmem:[%s304 + $0xa0] sm:$0xff]
        %v342 = vld [vmem:[%s304 + $0xa8] sm:$0xff]
        %v343 = vld [vmem:[%s304 + $0xb0] sm:$0xff]
        %v344 = vld [vmem:[%s304 + $0xb8] sm:$0xff]
        %v345 = vld [vmem:[%s304 + $0xc0] sm:$0xff]
        %v346 = vld [vmem:[%s304 + $0xc8] sm:$0xff]
        %v347 = vld [vmem:[%s304 + $0xd0] sm:$0xff]
        %v348 = vld [vmem:[%s304 + $0xd8] sm:$0xff]
        %v349 = vld [vmem:[%s304 + $0xe0] sm:$0xff]
        %v350 = vld [vmem:[%s304 + $0xe8] sm:$0xff]
        %v351 = vld [vmem:[%s304 + $0xf0] sm:$0xff]
        %v352 = vld [vmem:[%s304 + $0xf8] sm:$0xff]
        %p353 = scmp.eq.s32.totalorder %s18, 0
        // Predicated region
        $region37: #{encoder_forward.1} parent=35 // pred_check
          %p354 = pneg %p353
        $region38: #{encoder_forward.1} parent=35 // pred_check_branch
          %356 = sbr.rel (%p354) target = $region40
        $region39: #{encoder_forward.1} parent=35 // pred_region
          %v357 = vld [vmem:[%s308] sm:$0xff]
          %v358 = vld [vmem:[%s312] sm:$0xff]
          %v359 = vld [vmem:[%s299] sm:$0xff]
          %v360 = vld [vmem:[%s299 + $0x8] sm:$0xff]
          %v361 = vld [vmem:[%s299 + $0x10] sm:$0xff]
          %v362 = vld [vmem:[%s299 + $0x18] sm:$0xff]
          %v363 = vpack.c.bf16 %v357, %v357
          %v396 = vunpack.c.l.b16 %v321
          %v397 = vunpack.c.h.b16 %v321
          %v398 = vunpack.c.l.b16 %v322
          %v399 = vunpack.c.h.b16 %v322
          %v400 = vunpack.c.l.b16 %v323
          %v401 = vunpack.c.h.b16 %v323
          %v402 = vunpack.c.l.b16 %v324
          %v403 = vunpack.c.h.b16 %v324
          %v404 = vunpack.c.l.b16 %v325
          %v405 = vunpack.c.h.b16 %v325
          %v406 = vunpack.c.l.b16 %v326
          %v407 = vunpack.c.h.b16 %v326
          %v408 = vunpack.c.l.b16 %v327
          %v409 = vunpack.c.h.b16 %v327
          %v410 = vunpack.c.l.b16 %v328
          %v411 = vunpack.c.h.b16 %v328
          %v412 = vunpack.c.l.b16 %v329
          %v413 = vunpack.c.h.b16 %v329
          %v414 = vunpack.c.l.b16 %v330
          %v415 = vunpack.c.h.b16 %v330
          %v416 = vunpack.c.l.b16 %v331
          %v417 = vunpack.c.h.b16 %v331
          %v418 = vunpack.c.l.b16 %v332
          %v419 = vunpack.c.h.b16 %v332
          %v420 = vunpack.c.l.b16 %v333
          %v421 = vunpack.c.h.b16 %v333
          %v422 = vunpack.c.l.b16 %v334
          %v423 = vunpack.c.h.b16 %v334
          %v424 = vunpack.c.l.b16 %v335
          %v425 = vunpack.c.h.b16 %v335
          %v426 = vunpack.c.l.b16 %v336
          %v427 = vunpack.c.h.b16 %v336
          %v428 = vunpack.c.l.b16 %v337
          %v429 = vunpack.c.h.b16 %v337
          %v430 = vunpack.c.l.b16 %v338
          %v431 = vunpack.c.h.b16 %v338
          %v432 = vunpack.c.l.b16 %v339
          %v433 = vunpack.c.h.b16 %v339
          %v434 = vunpack.c.l.b16 %v340
          %v435 = vunpack.c.h.b16 %v340
          %v436 = vunpack.c.l.b16 %v341
          %v437 = vunpack.c.h.b16 %v341
          %v438 = vunpack.c.l.b16 %v342
          %v439 = vunpack.c.h.b16 %v342
          %v440 = vunpack.c.l.b16 %v343
          %v441 = vunpack.c.h.b16 %v343
          %v442 = vunpack.c.l.b16 %v344
          %v443 = vunpack.c.h.b16 %v344
          %v444 = vunpack.c.l.b16 %v345
          %v445 = vunpack.c.h.b16 %v345
          %v446 = vunpack.c.l.b16 %v346
          %v447 = vunpack.c.h.b16 %v346
          %v448 = vunpack.c.l.b16 %v347
          %v449 = vunpack.c.h.b16 %v347
          %v450 = vunpack.c.l.b16 %v348
          %v451 = vunpack.c.h.b16 %v348
          %v452 = vunpack.c.l.b16 %v349
          %v453 = vunpack.c.h.b16 %v349
          %v454 = vunpack.c.l.b16 %v350
          %v455 = vunpack.c.h.b16 %v350
          %v456 = vunpack.c.l.b16 %v351
          %v457 = vunpack.c.h.b16 %v351
          %v458 = vunpack.c.l.b16 %v352
          %v459 = vunpack.c.h.b16 %v352
          %v460 = vpack.c.b16 %v400, %v396
          %v461 = vpack.c.b16 %v401, %v397
          %v462 = vpack.c.b16 %v402, %v398
          %v463 = vpack.c.b16 %v403, %v399
          %v464 = vpack.c.b16 %v408, %v404
          %v465 = vpack.c.b16 %v409, %v405
          %v466 = vpack.c.b16 %v410, %v406
          %v467 = vpack.c.b16 %v411, %v407
          %v468 = vpack.c.b16 %v416, %v412
          %v469 = vpack.c.b16 %v417, %v413
          %v470 = vpack.c.b16 %v418, %v414
          %v471 = vpack.c.b16 %v419, %v415
          %v472 = vpack.c.b16 %v424, %v420
          %v473 = vpack.c.b16 %v425, %v421
          %v474 = vpack.c.b16 %v426, %v422
          %v475 = vpack.c.b16 %v427, %v423
          %v476 = vpack.c.b16 %v432, %v428
          %v477 = vpack.c.b16 %v433, %v429
          %v478 = vpack.c.b16 %v434, %v430
          %v479 = vpack.c.b16 %v435, %v431
          %v480 = vpack.c.b16 %v440, %v436
          %v481 = vpack.c.b16 %v441, %v437
          %v482 = vpack.c.b16 %v442, %v438
          %v483 = vpack.c.b16 %v443, %v439
          %v484 = vpack.c.b16 %v448, %v444
          %v485 = vpack.c.b16 %v449, %v445
          %v486 = vpack.c.b16 %v450, %v446
          %v487 = vpack.c.b16 %v451, %v447
          %v488 = vpack.c.b16 %v456, %v452
          %v489 = vpack.c.b16 %v457, %v453
          %v490 = vpack.c.b16 %v458, %v454
          %v491 = vpack.c.b16 %v459, %v455
          %524 = vmatpush.bf16.msra.mxu0 %v488
          %525 = vmatpush.bf16.msra.mxu0 %v484
          %526 = vmatpush.bf16.msra.mxu0 %v480
          %527 = vmatpush.bf16.msra.mxu0 %v476
          %528 = vmatpush.bf16.msra.mxu0 %v472
          %529 = vmatpush.bf16.msra.mxu0 %v468
          %530 = vmatpush.bf16.msra.mxu0 %v464
          %531 = vmatpush.bf16.msra.mxu0 %v460
          %532 = vmatmul.bf16.gmra.mxu0 %v363
          %v533 = vpop.f32.mrf.mxu0
          %v534 = vadd.f32 0.0, %v533
          %v535 = vpop.f32.mrf.mxu0
          %536 = vdwg.mxu0
          %537 = vmatpush.bf16.msra.mxu0 %v489
          %538 = vmatpush.bf16.msra.mxu0 %v485
          %539 = vmatpush.bf16.msra.mxu0 %v481
          %540 = vmatpush.bf16.msra.mxu0 %v477
          %541 = vmatpush.bf16.msra.mxu0 %v473
          %542 = vmatpush.bf16.msra.mxu0 %v469
          %543 = vmatpush.bf16.msra.mxu0 %v465
          %544 = vmatpush.bf16.msra.mxu0 %v461
          %545 = vmatmul.bf16.gmra.mxu0 %v363
          %v546 = vpop.f32.mrf.mxu0
          %v547 = vadd.f32 0.0, %v546
          %v548 = vpop.f32.mrf.mxu0
          %549 = vdwg.mxu0
          %550 = vmatpush.bf16.msra.mxu0 %v490
          %551 = vmatpush.bf16.msra.mxu0 %v486
          %552 = vmatpush.bf16.msra.mxu0 %v482
          %553 = vmatpush.bf16.msra.mxu0 %v478
          %554 = vmatpush.bf16.msra.mxu0 %v474
          %555 = vmatpush.bf16.msra.mxu0 %v470
          %556 = vmatpush.bf16.msra.mxu0 %v466
          %557 = vmatpush.bf16.msra.mxu0 %v462
          %558 = vmatmul.bf16.gmra.mxu0 %v363
          %v559 = vpop.f32.mrf.mxu0
          %v560 = vadd.f32 0.0, %v559
          %v561 = vpop.f32.mrf.mxu0
          %562 = vdwg.mxu0
          %563 = vmatpush.bf16.msra.mxu0 %v491
          %564 = vmatpush.bf16.msra.mxu0 %v487
          %565 = vmatpush.bf16.msra.mxu0 %v483
          %566 = vmatpush.bf16.msra.mxu0 %v479
          %567 = vmatpush.bf16.msra.mxu0 %v475
          %568 = vmatpush.bf16.msra.mxu0 %v471
          %569 = vmatpush.bf16.msra.mxu0 %v467
          %570 = vmatpush.bf16.msra.mxu0 %v463
          %571 = vmatmul.bf16.gmra.mxu0 %v363
          %v572 = vpop.f32.mrf.mxu0
          %v573 = vadd.f32 0.0, %v572
          %v574 = vpop.f32.mrf.mxu0
          %575 = vdwg.mxu0
          %v576 = vadd.f32 %v359, %v534
          %v577 = vadd.f32 %v360, %v547
          %v578 = vadd.f32 %v361, %v560
          %v579 = vadd.f32 %v362, %v573
          %v580 = vxor.u32 %v576, 2147483648
          %v581 = vxor.u32 %v577, 2147483648
          %v582 = vxor.u32 %v578, 2147483648
          %v583 = vmul.f32 %v580, 1.442695
          %v584 = vpow.pop %v583
          %v585 = vmul.f32 %v581, 1.442695
          %v586 = vpow.pop %v585
          %v587 = vmul.f32 %v582, 1.442695
          %v588 = vpow.pop %v587
          %v589 = vadd.f32 %v584, 1.0
          %v590 = vadd.f32 %v586, 1.0
          %v591 = vadd.f32 %v588, 1.0
          %v592 = vrcp.pop %v589
          %v593 = vmul.f32 %v589, %v592
          %v594 = vsub.f32 1.0, %v593
          %v595 = vmul.f32 %v592, %v594
          %v596 = vadd.f32 %v592, %v595
          %vm597 = vweird.f32 %v589
          %vm598 = vweird.f32 %v592
          %vm599 = vmor %vm597, %vm598
          %v600 = vsel %vm599, %v592, %v596
          %v601 = vand.u32 2147483647, %v589
          %vm602 = vcmp.eq.f32.partialorder %v601, 8.507059e+37
          %v603 = vand.u32 %v589, 2147483648
          %v604 = vor.u32 1.1754944e-38, %v603
          %v605 = vsel %vm602, %v604, %v600
          %v606 = vmul.f32 1.0, %v605
          %v607 = vrcp.pop %v590
          %v608 = vmul.f32 %v590, %v607
          %v609 = vsub.f32 1.0, %v608
          %v610 = vmul.f32 %v607, %v609
          %v611 = vadd.f32 %v607, %v610
          %vm612 = vweird.f32 %v590
          %vm613 = vweird.f32 %v607
          %vm614 = vmor %vm612, %vm613
          %v615 = vsel %vm614, %v607, %v611
          %v616 = vand.u32 2147483647, %v590
          %vm617 = vcmp.eq.f32.partialorder %v616, 8.507059e+37
          %v618 = vand.u32 %v590, 2147483648
          %v619 = vor.u32 1.1754944e-38, %v618
          %v620 = vsel %vm617, %v619, %v615
          %v621 = vmul.f32 1.0, %v620
          %v622 = vrcp.pop %v591
          %v623 = vmul.f32 %v591, %v622
          %v624 = vsub.f32 1.0, %v623
          %v625 = vmul.f32 %v622, %v624
          %v626 = vadd.f32 %v622, %v625
          %vm627 = vweird.f32 %v591
          %vm628 = vweird.f32 %v622
          %vm629 = vmor %vm627, %vm628
          %v630 = vsel %vm629, %v622, %v626
          %v631 = vand.u32 2147483647, %v591
          %vm632 = vcmp.eq.f32.partialorder %v631, 8.507059e+37
          %v633 = vand.u32 %v591, 2147483648
          %v634 = vor.u32 1.1754944e-38, %v633
          %v635 = vsel %vm632, %v634, %v630
          %v636 = vmul.f32 1.0, %v635
          %v637 = vtanh.pop %v579
          %v638 = vmul.f32 %v621, %v358
          %v639 = vmul.f32 %v606, %v637
          %v640 = vadd.f32 %v638, %v639
          %v641 = vtanh.pop %v640
          %v642 = vmul.f32 %v636, %v641
          %643 = vst [vmem:[%s282] sm:$0xff] %v642
          %s644 = scalar_lea.vmem %s299, 32
          %v645 = vld [vmem:[%s644] sm:$0xff]
          %v646 = vld [vmem:[%s644 + $0x8] sm:$0xff]
          %v647 = vld [vmem:[%s644 + $0x10] sm:$0xff]
          %v648 = vld [vmem:[%s644 + $0x18] sm:$0xff]
          %v649 = vpack.c.bf16 %v642, %v642
          %650 = vmatpush.bf16.msra.mxu0 %v488
          %651 = vmatpush.bf16.msra.mxu0 %v484
          %652 = vmatpush.bf16.msra.mxu0 %v480
          %653 = vmatpush.bf16.msra.mxu0 %v476
          %654 = vmatpush.bf16.msra.mxu0 %v472
          %655 = vmatpush.bf16.msra.mxu0 %v468
          %656 = vmatpush.bf16.msra.mxu0 %v464
          %657 = vmatpush.bf16.msra.mxu0 %v460
          %658 = vmatmul.bf16.gmra.mxu0 %v649
          %v659 = vpop.f32.mrf.mxu0
          %v660 = vadd.f32 0.0, %v659
          %v661 = vpop.f32.mrf.mxu0
          %662 = vdwg.mxu0
          %663 = vmatpush.bf16.msra.mxu0 %v489
          %664 = vmatpush.bf16.msra.mxu0 %v485
          %665 = vmatpush.bf16.msra.mxu0 %v481
          %666 = vmatpush.bf16.msra.mxu0 %v477
          %667 = vmatpush.bf16.msra.mxu0 %v473
          %668 = vmatpush.bf16.msra.mxu0 %v469
          %669 = vmatpush.bf16.msra.mxu0 %v465
          %670 = vmatpush.bf16.msra.mxu0 %v461
          %671 = vmatmul.bf16.gmra.mxu0 %v649
          %v672 = vpop.f32.mrf.mxu0
          %v673 = vadd.f32 0.0, %v672
          %v674 = vpop.f32.mrf.mxu0
          %675 = vdwg.mxu0
          %676 = vmatpush.bf16.msra.mxu0 %v490
          %677 = vmatpush.bf16.msra.mxu0 %v486
          %678 = vmatpush.bf16.msra.mxu0 %v482
          %679 = vmatpush.bf16.msra.mxu0 %v478
          %680 = vmatpush.bf16.msra.mxu0 %v474
          %681 = vmatpush.bf16.msra.mxu0 %v470
          %682 = vmatpush.bf16.msra.mxu0 %v466
          %683 = vmatpush.bf16.msra.mxu0 %v462
          %684 = vmatmul.bf16.gmra.mxu0 %v649
          %v685 = vpop.f32.mrf.mxu0
          %v686 = vadd.f32 0.0, %v685
          %v687 = vpop.f32.mrf.mxu0
          %688 = vdwg.mxu0
          %689 = vmatpush.bf16.msra.mxu0 %v491
          %690 = vmatpush.bf16.msra.mxu0 %v487
          %691 = vmatpush.bf16.msra.mxu0 %v483
          %692 = vmatpush.bf16.msra.mxu0 %v479
          %693 = vmatpush.bf16.msra.mxu0 %v475
          %694 = vmatpush.bf16.msra.mxu0 %v471
          %695 = vmatpush.bf16.msra.mxu0 %v467
          %696 = vmatpush.bf16.msra.mxu0 %v463
          %697 = vmatmul.bf16.gmra.mxu0 %v649
          %v698 = vpop.f32.mrf.mxu0
          %v699 = vadd.f32 0.0, %v698
          %v700 = vpop.f32.mrf.mxu0
          %701 = vdwg.mxu0
          %v702 = vadd.f32 %v645, %v660
          %v703 = vadd.f32 %v646, %v673
          %v704 = vadd.f32 %v647, %v686
          %v705 = vadd.f32 %v648, %v699
          %v706 = vxor.u32 %v702, 2147483648
          %v707 = vxor.u32 %v703, 2147483648
          %v708 = vxor.u32 %v704, 2147483648
          %v709 = vmul.f32 %v706, 1.442695
          %v710 = vpow.pop %v709
          %v711 = vmul.f32 %v707, 1.442695
          %v712 = vpow.pop %v711
          %v713 = vmul.f32 %v708, 1.442695
          %v714 = vpow.pop %v713
          %v715 = vadd.f32 %v710, 1.0
          %v716 = vadd.f32 %v712, 1.0
          %v717 = vadd.f32 %v714, 1.0
          %v718 = vrcp.pop %v715
          %v719 = vmul.f32 %v715, %v718
          %v720 = vsub.f32 1.0, %v719
          %v721 = vmul.f32 %v718, %v720
          %v722 = vadd.f32 %v718, %v721
          %vm723 = vweird.f32 %v715
          %vm724 = vweird.f32 %v718
          %vm725 = vmor %vm723, %vm724
          %v726 = vsel %vm725, %v718, %v722
          %v727 = vand.u32 2147483647, %v715
          %vm728 = vcmp.eq.f32.partialorder %v727, 8.507059e+37
          %v729 = vand.u32 %v715, 2147483648
          %v730 = vor.u32 1.1754944e-38, %v729
          %v731 = vsel %vm728, %v730, %v726
          %v732 = vmul.f32 1.0, %v731
          %v733 = vrcp.pop %v716
          %v734 = vmul.f32 %v716, %v733
          %v735 = vsub.f32 1.0, %v734
          %v736 = vmul.f32 %v733, %v735
          %v737 = vadd.f32 %v733, %v736
          %vm738 = vweird.f32 %v716
          %vm739 = vweird.f32 %v733
          %vm740 = vmor %vm738, %vm739
          %v741 = vsel %vm740, %v733, %v737
          %v742 = vand.u32 2147483647, %v716
          %vm743 = vcmp.eq.f32.partialorder %v742, 8.507059e+37
          %v744 = vand.u32 %v716, 2147483648
          %v745 = vor.u32 1.1754944e-38, %v744
          %v746 = vsel %vm743, %v745, %v741
          %v747 = vmul.f32 1.0, %v746
          %v748 = vrcp.pop %v717
          %v749 = vmul.f32 %v717, %v748
          %v750 = vsub.f32 1.0, %v749
          %v751 = vmul.f32 %v748, %v750
          %v752 = vadd.f32 %v748, %v751
          %vm753 = vweird.f32 %v717
          %vm754 = vweird.f32 %v748
          %vm755 = vmor %vm753, %vm754
          %v756 = vsel %vm755, %v748, %v752
          %v757 = vand.u32 2147483647, %v717
          %vm758 = vcmp.eq.f32.partialorder %v757, 8.507059e+37
          %v759 = vand.u32 %v717, 2147483648
          %v760 = vor.u32 1.1754944e-38, %v759
          %v761 = vsel %vm758, %v760, %v756
          %v762 = vmul.f32 1.0, %v761
          %v763 = vtanh.pop %v705
          %v764 = vmul.f32 %v747, %v640
          %v765 = vmul.f32 %v732, %v763
          %v766 = vadd.f32 %v764, %v765
          %v767 = vtanh.pop %v766
          %v768 = vmul.f32 %v762, %v767
          %s769 = scalar_lea.vmem %s282, 8 [#allocation2]
          %770 = vst [vmem:[%s769] sm:$0xff] %v768
          %s771 = scalar_lea.vmem %s299, 64
          %v772 = vld [vmem:[%s771] sm:$0xff]
          %v773 = vld [vmem:[%s771 + $0x8] sm:$0xff]
          %v774 = vld [vmem:[%s771 + $0x10] sm:$0xff]
          %v775 = vld [vmem:[%s771 + $0x18] sm:$0xff]
          %v776 = vpack.c.bf16 %v768, %v768
          %777 = vmatpush.bf16.msra.mxu0 %v488
          %778 = vmatpush.bf16.msra.mxu0 %v484
          %779 = vmatpush.bf16.msra.mxu0 %v480
          %780 = vmatpush.bf16.msra.mxu0 %v476
          %781 = vmatpush.bf16.msra.mxu0 %v472
          %782 = vmatpush.bf16.msra.mxu0 %v468
          %783 = vmatpush.bf16.msra.mxu0 %v464
          %784 = vmatpush.bf16.msra.mxu0 %v460
          %785 = vmatmul.bf16.gmra.mxu0 %v776
          %v786 = vpop.f32.mrf.mxu0
          %v787 = vadd.f32 0.0, %v786
          %v788 = vpop.f32.mrf.mxu0
          %789 = vdwg.mxu0
          %790 = vmatpush.bf16.msra.mxu0 %v489
          %791 = vmatpush.bf16.msra.mxu0 %v485
          %792 = vmatpush.bf16.msra.mxu0 %v481
          %793 = vmatpush.bf16.msra.mxu0 %v477
          %794 = vmatpush.bf16.msra.mxu0 %v473
          %795 = vmatpush.bf16.msra.mxu0 %v469
          %796 = vmatpush.bf16.msra.mxu0 %v465
          %797 = vmatpush.bf16.msra.mxu0 %v461
          %798 = vmatmul.bf16.gmra.mxu0 %v776
          %v799 = vpop.f32.mrf.mxu0
          %v800 = vadd.f32 0.0, %v799
          %v801 = vpop.f32.mrf.mxu0
          %802 = vdwg.mxu0
          %803 = vmatpush.bf16.msra.mxu0 %v490
          %804 = vmatpush.bf16.msra.mxu0 %v486
          %805 = vmatpush.bf16.msra.mxu0 %v482
          %806 = vmatpush.bf16.msra.mxu0 %v478
          %807 = vmatpush.bf16.msra.mxu0 %v474
          %808 = vmatpush.bf16.msra.mxu0 %v470
          %809 = vmatpush.bf16.msra.mxu0 %v466
          %810 = vmatpush.bf16.msra.mxu0 %v462
          %811 = vmatmul.bf16.gmra.mxu0 %v776
          %v812 = vpop.f32.mrf.mxu0
          %v813 = vadd.f32 0.0, %v812
          %v814 = vpop.f32.mrf.mxu0
          %815 = vdwg.mxu0
          %816 = vmatpush.bf16.msra.mxu0 %v491
          %817 = vmatpush.bf16.msra.mxu0 %v487
          %818 = vmatpush.bf16.msra.mxu0 %v483
          %819 = vmatpush.bf16.msra.mxu0 %v479
          %820 = vmatpush.bf16.msra.mxu0 %v475
          %821 = vmatpush.bf16.msra.mxu0 %v471
          %822 = vmatpush.bf16.msra.mxu0 %v467
          %823 = vmatpush.bf16.msra.mxu0 %v463
          %824 = vmatmul.bf16.gmra.mxu0 %v776
          %v825 = vpop.f32.mrf.mxu0
          %v826 = vadd.f32 0.0, %v825
          %v827 = vpop.f32.mrf.mxu0
          %828 = vdwg.mxu0
          %v829 = vadd.f32 %v772, %v787
          %v830 = vadd.f32 %v773, %v800
          %v831 = vadd.f32 %v774, %v813
          %v832 = vadd.f32 %v775, %v826
          %v833 = vxor.u32 %v829, 2147483648
          %v834 = vxor.u32 %v830, 2147483648
          %v835 = vxor.u32 %v831, 2147483648
          %v836 = vmul.f32 %v833, 1.442695
          %v837 = vpow.pop %v836
          %v838 = vmul.f32 %v834, 1.442695
          %v839 = vpow.pop %v838
          %v840 = vmul.f32 %v835, 1.442695
          %v841 = vpow.pop %v840
          %v842 = vadd.f32 %v837, 1.0
          %v843 = vadd.f32 %v839, 1.0
          %v844 = vadd.f32 %v841, 1.0
          %v845 = vrcp.pop %v842
          %v846 = vmul.f32 %v842, %v845
          %v847 = vsub.f32 1.0, %v846
          %v848 = vmul.f32 %v845, %v847
          %v849 = vadd.f32 %v845, %v848
          %vm850 = vweird.f32 %v842
          %vm851 = vweird.f32 %v845
          %vm852 = vmor %vm850, %vm851
          %v853 = vsel %vm852, %v845, %v849
          %v854 = vand.u32 2147483647, %v842
          %vm855 = vcmp.eq.f32.partialorder %v854, 8.507059e+37
          %v856 = vand.u32 %v842, 2147483648
          %v857 = vor.u32 1.1754944e-38, %v856
          %v858 = vsel %vm855, %v857, %v853
          %v859 = vmul.f32 1.0, %v858
          %v860 = vrcp.pop %v843
          %v861 = vmul.f32 %v843, %v860
          %v862 = vsub.f32 1.0, %v861
          %v863 = vmul.f32 %v860, %v862
          %v864 = vadd.f32 %v860, %v863
          %vm865 = vweird.f32 %v843
          %vm866 = vweird.f32 %v860
          %vm867 = vmor %vm865, %vm866
          %v868 = vsel %vm867, %v860, %v864
          %v869 = vand.u32 2147483647, %v843
          %vm870 = vcmp.eq.f32.partialorder %v869, 8.507059e+37
          %v871 = vand.u32 %v843, 2147483648
          %v872 = vor.u32 1.1754944e-38, %v871
          %v873 = vsel %vm870, %v872, %v868
          %v874 = vmul.f32 1.0, %v873
          %v875 = vrcp.pop %v844
          %v876 = vmul.f32 %v844, %v875
          %v877 = vsub.f32 1.0, %v876
          %v878 = vmul.f32 %v875, %v877
          %v879 = vadd.f32 %v875, %v878
          %vm880 = vweird.f32 %v844
          %vm881 = vweird.f32 %v875
          %vm882 = vmor %vm880, %vm881
          %v883 = vsel %vm882, %v875, %v879
          %v884 = vand.u32 2147483647, %v844
          %vm885 = vcmp.eq.f32.partialorder %v884, 8.507059e+37
          %v886 = vand.u32 %v844, 2147483648
          %v887 = vor.u32 1.1754944e-38, %v886
          %v888 = vsel %vm885, %v887, %v883
          %v889 = vmul.f32 1.0, %v888
          %v890 = vtanh.pop %v832
          %v891 = vmul.f32 %v874, %v766
          %v892 = vmul.f32 %v859, %v890
          %v893 = vadd.f32 %v891, %v892
          %v894 = vtanh.pop %v893
          %v895 = vmul.f32 %v889, %v894
          %s896 = scalar_lea.vmem %s282, 16 [#allocation2]
          %897 = vst [vmem:[%s896] sm:$0xff] %v895
          %s898 = scalar_lea.vmem %s299, 96
          %v899 = vld [vmem:[%s898] sm:$0xff]
          %v900 = vld [vmem:[%s898 + $0x8] sm:$0xff]
          %v901 = vld [vmem:[%s898 + $0x10] sm:$0xff]
          %v902 = vld [vmem:[%s898 + $0x18] sm:$0xff]
          %v903 = vpack.c.bf16 %v895, %v895
          %904 = vmatpush.bf16.msra.mxu0 %v488
          %905 = vmatpush.bf16.msra.mxu0 %v484
          %906 = vmatpush.bf16.msra.mxu0 %v480
          %907 = vmatpush.bf16.msra.mxu0 %v476
          %908 = vmatpush.bf16.msra.mxu0 %v472
          %909 = vmatpush.bf16.msra.mxu0 %v468
          %910 = vmatpush.bf16.msra.mxu0 %v464
          %911 = vmatpush.bf16.msra.mxu0 %v460
          %912 = vmatmul.bf16.gmra.mxu0 %v903
          %v913 = vpop.f32.mrf.mxu0
          %v914 = vadd.f32 0.0, %v913
          %v915 = vpop.f32.mrf.mxu0
          %916 = vdwg.mxu0
          %917 = vmatpush.bf16.msra.mxu0 %v489
          %918 = vmatpush.bf16.msra.mxu0 %v485
          %919 = vmatpush.bf16.msra.mxu0 %v481
          %920 = vmatpush.bf16.msra.mxu0 %v477
          %921 = vmatpush.bf16.msra.mxu0 %v473
          %922 = vmatpush.bf16.msra.mxu0 %v469
          %923 = vmatpush.bf16.msra.mxu0 %v465
          %924 = vmatpush.bf16.msra.mxu0 %v461
          %925 = vmatmul.bf16.gmra.mxu0 %v903
          %v926 = vpop.f32.mrf.mxu0
          %v927 = vadd.f32 0.0, %v926
          %v928 = vpop.f32.mrf.mxu0
          %929 = vdwg.mxu0
          %930 = vmatpush.bf16.msra.mxu0 %v490
          %931 = vmatpush.bf16.msra.mxu0 %v486
          %932 = vmatpush.bf16.msra.mxu0 %v482
          %933 = vmatpush.bf16.msra.mxu0 %v478
          %934 = vmatpush.bf16.msra.mxu0 %v474
          %935 = vmatpush.bf16.msra.mxu0 %v470
          %936 = vmatpush.bf16.msra.mxu0 %v466
          %937 = vmatpush.bf16.msra.mxu0 %v462
          %938 = vmatmul.bf16.gmra.mxu0 %v903
          %v939 = vpop.f32.mrf.mxu0
          %v940 = vadd.f32 0.0, %v939
          %v941 = vpop.f32.mrf.mxu0
          %942 = vdwg.mxu0
          %943 = vmatpush.bf16.msra.mxu0 %v491
          %944 = vmatpush.bf16.msra.mxu0 %v487
          %945 = vmatpush.bf16.msra.mxu0 %v483
          %946 = vmatpush.bf16.msra.mxu0 %v479
          %947 = vmatpush.bf16.msra.mxu0 %v475
          %948 = vmatpush.bf16.msra.mxu0 %v471
          %949 = vmatpush.bf16.msra.mxu0 %v467
          %950 = vmatpush.bf16.msra.mxu0 %v463
          %951 = vmatmul.bf16.gmra.mxu0 %v903
          %v952 = vpop.f32.mrf.mxu0
          %v953 = vadd.f32 0.0, %v952
          %v954 = vpop.f32.mrf.mxu0
          %955 = vdwg.mxu0
          %v956 = vadd.f32 %v899, %v914
          %v957 = vadd.f32 %v900, %v927
          %v958 = vadd.f32 %v901, %v940
          %v959 = vadd.f32 %v902, %v953
          %v960 = vxor.u32 %v956, 2147483648
          %v961 = vxor.u32 %v957, 2147483648
          %v962 = vxor.u32 %v958, 2147483648
          %v963 = vmul.f32 %v960, 1.442695
          %v964 = vpow.pop %v963
          %v965 = vmul.f32 %v961, 1.442695
          %v966 = vpow.pop %v965
          %v967 = vmul.f32 %v962, 1.442695
          %v968 = vpow.pop %v967
          %v969 = vadd.f32 %v964, 1.0
          %v970 = vadd.f32 %v966, 1.0
          %v971 = vadd.f32 %v968, 1.0
          %v972 = vrcp.pop %v969
          %v973 = vmul.f32 %v969, %v972
          %v974 = vsub.f32 1.0, %v973
          %v975 = vmul.f32 %v972, %v974
          %v976 = vadd.f32 %v972, %v975
          %vm977 = vweird.f32 %v969
          %vm978 = vweird.f32 %v972
          %vm979 = vmor %vm977, %vm978
          %v980 = vsel %vm979, %v972, %v976
          %v981 = vand.u32 2147483647, %v969
          %vm982 = vcmp.eq.f32.partialorder %v981, 8.507059e+37
          %v983 = vand.u32 %v969, 2147483648
          %v984 = vor.u32 1.1754944e-38, %v983
          %v985 = vsel %vm982, %v984, %v980
          %v986 = vmul.f32 1.0, %v985
          %v987 = vrcp.pop %v970
          %v988 = vmul.f32 %v970, %v987
          %v989 = vsub.f32 1.0, %v988
          %v990 = vmul.f32 %v987, %v989
          %v991 = vadd.f32 %v987, %v990
          %vm992 = vweird.f32 %v970
          %vm993 = vweird.f32 %v987
          %vm994 = vmor %vm992, %vm993
          %v995 = vsel %vm994, %v987, %v991
          %v996 = vand.u32 2147483647, %v970
          %vm997 = vcmp.eq.f32.partialorder %v996, 8.507059e+37
          %v998 = vand.u32 %v970, 2147483648
          %v999 = vor.u32 1.1754944e-38, %v998
          %v1000 = vsel %vm997, %v999, %v995
          %v1001 = vmul.f32 1.0, %v1000
          %v1002 = vrcp.pop %v971
          %v1003 = vmul.f32 %v971, %v1002
          %v1004 = vsub.f32 1.0, %v1003
          %v1005 = vmul.f32 %v1002, %v1004
          %v1006 = vadd.f32 %v1002, %v1005
          %vm1007 = vweird.f32 %v971
          %vm1008 = vweird.f32 %v1002
          %vm1009 = vmor %vm1007, %vm1008
          %v1010 = vsel %vm1009, %v1002, %v1006
          %v1011 = vand.u32 2147483647, %v971
          %vm1012 = vcmp.eq.f32.partialorder %v1011, 8.507059e+37
          %v1013 = vand.u32 %v971, 2147483648
          %v1014 = vor.u32 1.1754944e-38, %v1013
          %v1015 = vsel %vm1012, %v1014, %v1010
          %v1016 = vmul.f32 1.0, %v1015
          %v1017 = vtanh.pop %v959
          %v1018 = vmul.f32 %v1001, %v893
          %v1019 = vmul.f32 %v986, %v1017
          %v1020 = vadd.f32 %v1018, %v1019
          %v1021 = vtanh.pop %v1020
          %v1022 = vmul.f32 %v1016, %v1021
          %s1023 = scalar_lea.vmem %s282, 24 [#allocation2]
          %1024 = vst [vmem:[%s1023] sm:$0xff] %v1022
          %s1025 = scalar_lea.vmem %s299, 128
          %v1026 = vld [vmem:[%s1025] sm:$0xff]
          %v1027 = vld [vmem:[%s1025 + $0x8] sm:$0xff]
          %v1028 = vld [vmem:[%s1025 + $0x10] sm:$0xff]
          %v1029 = vld [vmem:[%s1025 + $0x18] sm:$0xff]
          %v1030 = vpack.c.bf16 %v1022, %v1022
          %1031 = vmatpush.bf16.msra.mxu0 %v488
          %1032 = vmatpush.bf16.msra.mxu0 %v484
          %1033 = vmatpush.bf16.msra.mxu0 %v480
          %1034 = vmatpush.bf16.msra.mxu0 %v476
          %1035 = vmatpush.bf16.msra.mxu0 %v472
          %1036 = vmatpush.bf16.msra.mxu0 %v468
          %1037 = vmatpush.bf16.msra.mxu0 %v464
          %1038 = vmatpush.bf16.msra.mxu0 %v460
          %1039 = vmatmul.bf16.gmra.mxu0 %v1030
          %v1040 = vpop.f32.mrf.mxu0
          %v1041 = vadd.f32 0.0, %v1040
          %v1042 = vpop.f32.mrf.mxu0
          %1043 = vdwg.mxu0
          %1044 = vmatpush.bf16.msra.mxu0 %v489
          %1045 = vmatpush.bf16.msra.mxu0 %v485
          %1046 = vmatpush.bf16.msra.mxu0 %v481
          %1047 = vmatpush.bf16.msra.mxu0 %v477
          %1048 = vmatpush.bf16.msra.mxu0 %v473
          %1049 = vmatpush.bf16.msra.mxu0 %v469
          %1050 = vmatpush.bf16.msra.mxu0 %v465
          %1051 = vmatpush.bf16.msra.mxu0 %v461
          %1052 = vmatmul.bf16.gmra.mxu0 %v1030
          %v1053 = vpop.f32.mrf.mxu0
          %v1054 = vadd.f32 0.0, %v1053
          %v1055 = vpop.f32.mrf.mxu0
          %1056 = vdwg.mxu0
          %1057 = vmatpush.bf16.msra.mxu0 %v490
          %1058 = vmatpush.bf16.msra.mxu0 %v486
          %1059 = vmatpush.bf16.msra.mxu0 %v482
          %1060 = vmatpush.bf16.msra.mxu0 %v478
          %1061 = vmatpush.bf16.msra.mxu0 %v474
          %1062 = vmatpush.bf16.msra.mxu0 %v470
          %1063 = vmatpush.bf16.msra.mxu0 %v466
          %1064 = vmatpush.bf16.msra.mxu0 %v462
          %1065 = vmatmul.bf16.gmra.mxu0 %v1030
          %v1066 = vpop.f32.mrf.mxu0
          %v1067 = vadd.f32 0.0, %v1066
          %v1068 = vpop.f32.mrf.mxu0
          %1069 = vdwg.mxu0
          %1070 = vmatpush.bf16.msra.mxu0 %v491
          %1071 = vmatpush.bf16.msra.mxu0 %v487
          %1072 = vmatpush.bf16.msra.mxu0 %v483
          %1073 = vmatpush.bf16.msra.mxu0 %v479
          %1074 = vmatpush.bf16.msra.mxu0 %v475
          %1075 = vmatpush.bf16.msra.mxu0 %v471
          %1076 = vmatpush.bf16.msra.mxu0 %v467
          %1077 = vmatpush.bf16.msra.mxu0 %v463
          %1078 = vmatmul.bf16.gmra.mxu0 %v1030
          %v1079 = vpop.f32.mrf.mxu0
          %v1080 = vadd.f32 0.0, %v1079
          %v1081 = vpop.f32.mrf.mxu0
          %1082 = vdwg.mxu0
          %v1083 = vadd.f32 %v1026, %v1041
          %v1084 = vadd.f32 %v1027, %v1054
          %v1085 = vadd.f32 %v1028, %v1067
          %v1086 = vadd.f32 %v1029, %v1080
          %v1087 = vxor.u32 %v1083, 2147483648
          %v1088 = vxor.u32 %v1084, 2147483648
          %v1089 = vxor.u32 %v1085, 2147483648
          %v1090 = vmul.f32 %v1087, 1.442695
          %v1091 = vpow.pop %v1090
          %v1092 = vmul.f32 %v1088, 1.442695
          %v1093 = vpow.pop %v1092
          %v1094 = vmul.f32 %v1089, 1.442695
          %v1095 = vpow.pop %v1094
          %v1096 = vadd.f32 %v1091, 1.0
          %v1097 = vadd.f32 %v1093, 1.0
          %v1098 = vadd.f32 %v1095, 1.0
          %v1099 = vrcp.pop %v1096
          %v1100 = vmul.f32 %v1096, %v1099
          %v1101 = vsub.f32 1.0, %v1100
          %v1102 = vmul.f32 %v1099, %v1101
          %v1103 = vadd.f32 %v1099, %v1102
          %vm1104 = vweird.f32 %v1096
          %vm1105 = vweird.f32 %v1099
          %vm1106 = vmor %vm1104, %vm1105
          %v1107 = vsel %vm1106, %v1099, %v1103
          %v1108 = vand.u32 2147483647, %v1096
          %vm1109 = vcmp.eq.f32.partialorder %v1108, 8.507059e+37
          %v1110 = vand.u32 %v1096, 2147483648
          %v1111 = vor.u32 1.1754944e-38, %v1110
          %v1112 = vsel %vm1109, %v1111, %v1107
          %v1113 = vmul.f32 1.0, %v1112
          %v1114 = vrcp.pop %v1097
          %v1115 = vmul.f32 %v1097, %v1114
          %v1116 = vsub.f32 1.0, %v1115
          %v1117 = vmul.f32 %v1114, %v1116
          %v1118 = vadd.f32 %v1114, %v1117
          %vm1119 = vweird.f32 %v1097
          %vm1120 = vweird.f32 %v1114
          %vm1121 = vmor %vm1119, %vm1120
          %v1122 = vsel %vm1121, %v1114, %v1118
          %v1123 = vand.u32 2147483647, %v1097
          %vm1124 = vcmp.eq.f32.partialorder %v1123, 8.507059e+37
          %v1125 = vand.u32 %v1097, 2147483648
          %v1126 = vor.u32 1.1754944e-38, %v1125
          %v1127 = vsel %vm1124, %v1126, %v1122
          %v1128 = vmul.f32 1.0, %v1127
          %v1129 = vrcp.pop %v1098
          %v1130 = vmul.f32 %v1098, %v1129
          %v1131 = vsub.f32 1.0, %v1130
          %v1132 = vmul.f32 %v1129, %v1131
          %v1133 = vadd.f32 %v1129, %v1132
          %vm1134 = vweird.f32 %v1098
          %vm1135 = vweird.f32 %v1129
          %vm1136 = vmor %vm1134, %vm1135
          %v1137 = vsel %vm1136, %v1129, %v1133
          %v1138 = vand.u32 2147483647, %v1098
          %vm1139 = vcmp.eq.f32.partialorder %v1138, 8.507059e+37
          %v1140 = vand.u32 %v1098, 2147483648
          %v1141 = vor.u32 1.1754944e-38, %v1140
          %v1142 = vsel %vm1139, %v1141, %v1137
          %v1143 = vmul.f32 1.0, %v1142
          %v1144 = vtanh.pop %v1086
          %v1145 = vmul.f32 %v1128, %v1020
          %v1146 = vmul.f32 %v1113, %v1144
          %v1147 = vadd.f32 %v1145, %v1146
          %v1148 = vtanh.pop %v1147
          %v1149 = vmul.f32 %v1143, %v1148
          %s1150 = scalar_lea.vmem %s282, 32 [#allocation2]
          %1151 = vst [vmem:[%s1150] sm:$0xff] %v1149
          %s1152 = scalar_lea.vmem %s299, 160
          %v1153 = vld [vmem:[%s1152] sm:$0xff]
          %v1154 = vld [vmem:[%s1152 + $0x8] sm:$0xff]
          %v1155 = vld [vmem:[%s1152 + $0x10] sm:$0xff]
          %v1156 = vld [vmem:[%s1152 + $0x18] sm:$0xff]
          %v1157 = vpack.c.bf16 %v1149, %v1149
          %1158 = vmatpush.bf16.msra.mxu0 %v488
          %1159 = vmatpush.bf16.msra.mxu0 %v484
          %1160 = vmatpush.bf16.msra.mxu0 %v480
          %1161 = vmatpush.bf16.msra.mxu0 %v476
          %1162 = vmatpush.bf16.msra.mxu0 %v472
          %1163 = vmatpush.bf16.msra.mxu0 %v468
          %1164 = vmatpush.bf16.msra.mxu0 %v464
          %1165 = vmatpush.bf16.msra.mxu0 %v460
          %1166 = vmatmul.bf16.gmra.mxu0 %v1157
          %v1167 = vpop.f32.mrf.mxu0
          %v1168 = vadd.f32 0.0, %v1167
          %v1169 = vpop.f32.mrf.mxu0
          %1170 = vdwg.mxu0
          %1171 = vmatpush.bf16.msra.mxu0 %v489
          %1172 = vmatpush.bf16.msra.mxu0 %v485
          %1173 = vmatpush.bf16.msra.mxu0 %v481
          %1174 = vmatpush.bf16.msra.mxu0 %v477
          %1175 = vmatpush.bf16.msra.mxu0 %v473
          %1176 = vmatpush.bf16.msra.mxu0 %v469
          %1177 = vmatpush.bf16.msra.mxu0 %v465
          %1178 = vmatpush.bf16.msra.mxu0 %v461
          %1179 = vmatmul.bf16.gmra.mxu0 %v1157
          %v1180 = vpop.f32.mrf.mxu0
          %v1181 = vadd.f32 0.0, %v1180
          %v1182 = vpop.f32.mrf.mxu0
          %1183 = vdwg.mxu0
          %1184 = vmatpush.bf16.msra.mxu0 %v490
          %1185 = vmatpush.bf16.msra.mxu0 %v486
          %1186 = vmatpush.bf16.msra.mxu0 %v482
          %1187 = vmatpush.bf16.msra.mxu0 %v478
          %1188 = vmatpush.bf16.msra.mxu0 %v474
          %1189 = vmatpush.bf16.msra.mxu0 %v470
          %1190 = vmatpush.bf16.msra.mxu0 %v466
          %1191 = vmatpush.bf16.msra.mxu0 %v462
          %1192 = vmatmul.bf16.gmra.mxu0 %v1157
          %v1193 = vpop.f32.mrf.mxu0
          %v1194 = vadd.f32 0.0, %v1193
          %v1195 = vpop.f32.mrf.mxu0
          %1196 = vdwg.mxu0
          %1197 = vmatpush.bf16.msra.mxu0 %v491
          %1198 = vmatpush.bf16.msra.mxu0 %v487
          %1199 = vmatpush.bf16.msra.mxu0 %v483
          %1200 = vmatpush.bf16.msra.mxu0 %v479
          %1201 = vmatpush.bf16.msra.mxu0 %v475
          %1202 = vmatpush.bf16.msra.mxu0 %v471
          %1203 = vmatpush.bf16.msra.mxu0 %v467
          %1204 = vmatpush.bf16.msra.mxu0 %v463
          %1205 = vmatmul.bf16.gmra.mxu0 %v1157
          %v1206 = vpop.f32.mrf.mxu0
          %v1207 = vadd.f32 0.0, %v1206
          %v1208 = vpop.f32.mrf.mxu0
          %1209 = vdwg.mxu0
          %v1210 = vadd.f32 %v1153, %v1168
          %v1211 = vadd.f32 %v1154, %v1181
          %v1212 = vadd.f32 %v1155, %v1194
          %v1213 = vadd.f32 %v1156, %v1207
          %v1214 = vxor.u32 %v1210, 2147483648
          %v1215 = vxor.u32 %v1211, 2147483648
          %v1216 = vxor.u32 %v1212, 2147483648
          %v1217 = vmul.f32 %v1214, 1.442695
          %v1218 = vpow.pop %v1217
          %v1219 = vmul.f32 %v1215, 1.442695
          %v1220 = vpow.pop %v1219
          %v1221 = vmul.f32 %v1216, 1.442695
          %v1222 = vpow.pop %v1221
          %v1223 = vadd.f32 %v1218, 1.0
          %v1224 = vadd.f32 %v1220, 1.0
          %v1225 = vadd.f32 %v1222, 1.0
          %v1226 = vrcp.pop %v1223
          %v1227 = vmul.f32 %v1223, %v1226
          %v1228 = vsub.f32 1.0, %v1227
          %v1229 = vmul.f32 %v1226, %v1228
          %v1230 = vadd.f32 %v1226, %v1229
          %vm1231 = vweird.f32 %v1223
          %vm1232 = vweird.f32 %v1226
          %vm1233 = vmor %vm1231, %vm1232
          %v1234 = vsel %vm1233, %v1226, %v1230
          %v1235 = vand.u32 2147483647, %v1223
          %vm1236 = vcmp.eq.f32.partialorder %v1235, 8.507059e+37
          %v1237 = vand.u32 %v1223, 2147483648
          %v1238 = vor.u32 1.1754944e-38, %v1237
          %v1239 = vsel %vm1236, %v1238, %v1234
          %v1240 = vmul.f32 1.0, %v1239
          %v1241 = vrcp.pop %v1224
          %v1242 = vmul.f32 %v1224, %v1241
          %v1243 = vsub.f32 1.0, %v1242
          %v1244 = vmul.f32 %v1241, %v1243
          %v1245 = vadd.f32 %v1241, %v1244
          %vm1246 = vweird.f32 %v1224
          %vm1247 = vweird.f32 %v1241
          %vm1248 = vmor %vm1246, %vm1247
          %v1249 = vsel %vm1248, %v1241, %v1245
          %v1250 = vand.u32 2147483647, %v1224
          %vm1251 = vcmp.eq.f32.partialorder %v1250, 8.507059e+37
          %v1252 = vand.u32 %v1224, 2147483648
          %v1253 = vor.u32 1.1754944e-38, %v1252
          %v1254 = vsel %vm1251, %v1253, %v1249
          %v1255 = vmul.f32 1.0, %v1254
          %v1256 = vrcp.pop %v1225
          %v1257 = vmul.f32 %v1225, %v1256
          %v1258 = vsub.f32 1.0, %v1257
          %v1259 = vmul.f32 %v1256, %v1258
          %v1260 = vadd.f32 %v1256, %v1259
          %vm1261 = vweird.f32 %v1225
          %vm1262 = vweird.f32 %v1256
          %vm1263 = vmor %vm1261, %vm1262
          %v1264 = vsel %vm1263, %v1256, %v1260
          %v1265 = vand.u32 2147483647, %v1225
          %vm1266 = vcmp.eq.f32.partialorder %v1265, 8.507059e+37
          %v1267 = vand.u32 %v1225, 2147483648
          %v1268 = vor.u32 1.1754944e-38, %v1267
          %v1269 = vsel %vm1266, %v1268, %v1264
          %v1270 = vmul.f32 1.0, %v1269
          %v1271 = vtanh.pop %v1213
          %v1272 = vmul.f32 %v1255, %v1147
          %v1273 = vmul.f32 %v1240, %v1271
          %v1274 = vadd.f32 %v1272, %v1273
          %v1275 = vtanh.pop %v1274
          %v1276 = vmul.f32 %v1270, %v1275
          %s1277 = scalar_lea.vmem %s282, 40 [#allocation2]
          %1278 = vst [vmem:[%s1277] sm:$0xff] %v1276
          %s1279 = scalar_lea.vmem %s299, 192
          %v1280 = vld [vmem:[%s1279] sm:$0xff]
          %v1281 = vld [vmem:[%s1279 + $0x8] sm:$0xff]
          %v1282 = vld [vmem:[%s1279 + $0x10] sm:$0xff]
          %v1283 = vld [vmem:[%s1279 + $0x18] sm:$0xff]
          %v1284 = vpack.c.bf16 %v1276, %v1276
          %1285 = vmatpush.bf16.msra.mxu0 %v488
          %1286 = vmatpush.bf16.msra.mxu0 %v484
          %1287 = vmatpush.bf16.msra.mxu0 %v480
          %1288 = vmatpush.bf16.msra.mxu0 %v476
          %1289 = vmatpush.bf16.msra.mxu0 %v472
          %1290 = vmatpush.bf16.msra.mxu0 %v468
          %1291 = vmatpush.bf16.msra.mxu0 %v464
          %1292 = vmatpush.bf16.msra.mxu0 %v460
          %1293 = vmatmul.bf16.gmra.mxu0 %v1284
          %v1294 = vpop.f32.mrf.mxu0
          %v1295 = vadd.f32 0.0, %v1294
          %v1296 = vpop.f32.mrf.mxu0
          %1297 = vdwg.mxu0
          %1298 = vmatpush.bf16.msra.mxu0 %v489
          %1299 = vmatpush.bf16.msra.mxu0 %v485
          %1300 = vmatpush.bf16.msra.mxu0 %v481
          %1301 = vmatpush.bf16.msra.mxu0 %v477
          %1302 = vmatpush.bf16.msra.mxu0 %v473
          %1303 = vmatpush.bf16.msra.mxu0 %v469
          %1304 = vmatpush.bf16.msra.mxu0 %v465
          %1305 = vmatpush.bf16.msra.mxu0 %v461
          %1306 = vmatmul.bf16.gmra.mxu0 %v1284
          %v1307 = vpop.f32.mrf.mxu0
          %v1308 = vadd.f32 0.0, %v1307
          %v1309 = vpop.f32.mrf.mxu0
          %1310 = vdwg.mxu0
          %1311 = vmatpush.bf16.msra.mxu0 %v490
          %1312 = vmatpush.bf16.msra.mxu0 %v486
          %1313 = vmatpush.bf16.msra.mxu0 %v482
          %1314 = vmatpush.bf16.msra.mxu0 %v478
          %1315 = vmatpush.bf16.msra.mxu0 %v474
          %1316 = vmatpush.bf16.msra.mxu0 %v470
          %1317 = vmatpush.bf16.msra.mxu0 %v466
          %1318 = vmatpush.bf16.msra.mxu0 %v462
          %1319 = vmatmul.bf16.gmra.mxu0 %v1284
          %v1320 = vpop.f32.mrf.mxu0
          %v1321 = vadd.f32 0.0, %v1320
          %v1322 = vpop.f32.mrf.mxu0
          %1323 = vdwg.mxu0
          %1324 = vmatpush.bf16.msra.mxu0 %v491
          %1325 = vmatpush.bf16.msra.mxu0 %v487
          %1326 = vmatpush.bf16.msra.mxu0 %v483
          %1327 = vmatpush.bf16.msra.mxu0 %v479
          %1328 = vmatpush.bf16.msra.mxu0 %v475
          %1329 = vmatpush.bf16.msra.mxu0 %v471
          %1330 = vmatpush.bf16.msra.mxu0 %v467
          %1331 = vmatpush.bf16.msra.mxu0 %v463
          %1332 = vmatmul.bf16.gmra.mxu0 %v1284
          %v1333 = vpop.f32.mrf.mxu0
          %v1334 = vadd.f32 0.0, %v1333
          %v1335 = vpop.f32.mrf.mxu0
          %1336 = vdwg.mxu0
          %v1337 = vadd.f32 %v1280, %v1295
          %v1338 = vadd.f32 %v1281, %v1308
          %v1339 = vadd.f32 %v1282, %v1321
          %v1340 = vadd.f32 %v1283, %v1334
          %v1341 = vxor.u32 %v1337, 2147483648
          %v1342 = vxor.u32 %v1338, 2147483648
          %v1343 = vxor.u32 %v1339, 2147483648
          %v1344 = vmul.f32 %v1341, 1.442695
          %v1345 = vpow.pop %v1344
          %v1346 = vmul.f32 %v1342, 1.442695
          %v1347 = vpow.pop %v1346
          %v1348 = vmul.f32 %v1343, 1.442695
          %v1349 = vpow.pop %v1348
          %v1350 = vadd.f32 %v1345, 1.0
          %v1351 = vadd.f32 %v1347, 1.0
          %v1352 = vadd.f32 %v1349, 1.0
          %v1353 = vrcp.pop %v1350
          %v1354 = vmul.f32 %v1350, %v1353
          %v1355 = vsub.f32 1.0, %v1354
          %v1356 = vmul.f32 %v1353, %v1355
          %v1357 = vadd.f32 %v1353, %v1356
          %vm1358 = vweird.f32 %v1350
          %vm1359 = vweird.f32 %v1353
          %vm1360 = vmor %vm1358, %vm1359
          %v1361 = vsel %vm1360, %v1353, %v1357
          %v1362 = vand.u32 2147483647, %v1350
          %vm1363 = vcmp.eq.f32.partialorder %v1362, 8.507059e+37
          %v1364 = vand.u32 %v1350, 2147483648
          %v1365 = vor.u32 1.1754944e-38, %v1364
          %v1366 = vsel %vm1363, %v1365, %v1361
          %v1367 = vmul.f32 1.0, %v1366
          %v1368 = vrcp.pop %v1351
          %v1369 = vmul.f32 %v1351, %v1368
          %v1370 = vsub.f32 1.0, %v1369
          %v1371 = vmul.f32 %v1368, %v1370
          %v1372 = vadd.f32 %v1368, %v1371
          %vm1373 = vweird.f32 %v1351
          %vm1374 = vweird.f32 %v1368
          %vm1375 = vmor %vm1373, %vm1374
          %v1376 = vsel %vm1375, %v1368, %v1372
          %v1377 = vand.u32 2147483647, %v1351
          %vm1378 = vcmp.eq.f32.partialorder %v1377, 8.507059e+37
          %v1379 = vand.u32 %v1351, 2147483648
          %v1380 = vor.u32 1.1754944e-38, %v1379
          %v1381 = vsel %vm1378, %v1380, %v1376
          %v1382 = vmul.f32 1.0, %v1381
          %v1383 = vrcp.pop %v1352
          %v1384 = vmul.f32 %v1352, %v1383
          %v1385 = vsub.f32 1.0, %v1384
          %v1386 = vmul.f32 %v1383, %v1385
          %v1387 = vadd.f32 %v1383, %v1386
          %vm1388 = vweird.f32 %v1352
          %vm1389 = vweird.f32 %v1383
          %vm1390 = vmor %vm1388, %vm1389
          %v1391 = vsel %vm1390, %v1383, %v1387
          %v1392 = vand.u32 2147483647, %v1352
          %vm1393 = vcmp.eq.f32.partialorder %v1392, 8.507059e+37
          %v1394 = vand.u32 %v1352, 2147483648
          %v1395 = vor.u32 1.1754944e-38, %v1394
          %v1396 = vsel %vm1393, %v1395, %v1391
          %v1397 = vmul.f32 1.0, %v1396
          %v1398 = vtanh.pop %v1340
          %v1399 = vmul.f32 %v1382, %v1274
          %v1400 = vmul.f32 %v1367, %v1398
          %v1401 = vadd.f32 %v1399, %v1400
          %v1402 = vtanh.pop %v1401
          %v1403 = vmul.f32 %v1397, %v1402
          %s1404 = scalar_lea.vmem %s282, 48 [#allocation2]
          %1405 = vst [vmem:[%s1404] sm:$0xff] %v1403
          %s1406 = scalar_lea.vmem %s299, 224
          %v1407 = vld [vmem:[%s1406] sm:$0xff]
          %v1408 = vld [vmem:[%s1406 + $0x8] sm:$0xff]
          %v1409 = vld [vmem:[%s1406 + $0x10] sm:$0xff]
          %v1410 = vld [vmem:[%s1406 + $0x18] sm:$0xff]
          %v1411 = vpack.c.bf16 %v1403, %v1403
          %1412 = vmatpush.bf16.msra.mxu0 %v488
          %1413 = vmatpush.bf16.msra.mxu0 %v484
          %1414 = vmatpush.bf16.msra.mxu0 %v480
          %1415 = vmatpush.bf16.msra.mxu0 %v476
          %1416 = vmatpush.bf16.msra.mxu0 %v472
          %1417 = vmatpush.bf16.msra.mxu0 %v468
          %1418 = vmatpush.bf16.msra.mxu0 %v464
          %1419 = vmatpush.bf16.msra.mxu0 %v460
          %1420 = vmatmul.bf16.gmra.mxu0 %v1411
          %v1421 = vpop.f32.mrf.mxu0
          %v1422 = vadd.f32 0.0, %v1421
          %v1423 = vpop.f32.mrf.mxu0
          %1424 = vdwg.mxu0
          %1425 = vmatpush.bf16.msra.mxu0 %v489
          %1426 = vmatpush.bf16.msra.mxu0 %v485
          %1427 = vmatpush.bf16.msra.mxu0 %v481
          %1428 = vmatpush.bf16.msra.mxu0 %v477
          %1429 = vmatpush.bf16.msra.mxu0 %v473
          %1430 = vmatpush.bf16.msra.mxu0 %v469
          %1431 = vmatpush.bf16.msra.mxu0 %v465
          %1432 = vmatpush.bf16.msra.mxu0 %v461
          %1433 = vmatmul.bf16.gmra.mxu0 %v1411
          %v1434 = vpop.f32.mrf.mxu0
          %v1435 = vadd.f32 0.0, %v1434
          %v1436 = vpop.f32.mrf.mxu0
          %1437 = vdwg.mxu0
          %1438 = vmatpush.bf16.msra.mxu0 %v490
          %1439 = vmatpush.bf16.msra.mxu0 %v486
          %1440 = vmatpush.bf16.msra.mxu0 %v482
          %1441 = vmatpush.bf16.msra.mxu0 %v478
          %1442 = vmatpush.bf16.msra.mxu0 %v474
          %1443 = vmatpush.bf16.msra.mxu0 %v470
          %1444 = vmatpush.bf16.msra.mxu0 %v466
          %1445 = vmatpush.bf16.msra.mxu0 %v462
          %1446 = vmatmul.bf16.gmra.mxu0 %v1411
          %v1447 = vpop.f32.mrf.mxu0
          %v1448 = vadd.f32 0.0, %v1447
          %v1449 = vpop.f32.mrf.mxu0
          %1450 = vdwg.mxu0
          %1451 = vmatpush.bf16.msra.mxu0 %v491
          %1452 = vmatpush.bf16.msra.mxu0 %v487
          %1453 = vmatpush.bf16.msra.mxu0 %v483
          %1454 = vmatpush.bf16.msra.mxu0 %v479
          %1455 = vmatpush.bf16.msra.mxu0 %v475
          %1456 = vmatpush.bf16.msra.mxu0 %v471
          %1457 = vmatpush.bf16.msra.mxu0 %v467
          %1458 = vmatpush.bf16.msra.mxu0 %v463
          %1459 = vmatmul.bf16.gmra.mxu0 %v1411
          %v1460 = vpop.f32.mrf.mxu0
          %v1461 = vadd.f32 0.0, %v1460
          %v1462 = vpop.f32.mrf.mxu0
          %1463 = vdwg.mxu0
          %v1464 = vadd.f32 %v1407, %v1422
          %v1465 = vadd.f32 %v1408, %v1435
          %v1466 = vadd.f32 %v1409, %v1448
          %v1467 = vadd.f32 %v1410, %v1461
          %v1468 = vxor.u32 %v1464, 2147483648
          %v1469 = vxor.u32 %v1465, 2147483648
          %v1470 = vxor.u32 %v1466, 2147483648
          %v1471 = vmul.f32 %v1468, 1.442695
          %v1472 = vpow.pop %v1471
          %v1473 = vmul.f32 %v1469, 1.442695
          %v1474 = vpow.pop %v1473
          %v1475 = vmul.f32 %v1470, 1.442695
          %v1476 = vpow.pop %v1475
          %v1477 = vadd.f32 %v1472, 1.0
          %v1478 = vadd.f32 %v1474, 1.0
          %v1479 = vadd.f32 %v1476, 1.0
          %v1480 = vrcp.pop %v1477
          %v1481 = vmul.f32 %v1477, %v1480
          %v1482 = vsub.f32 1.0, %v1481
          %v1483 = vmul.f32 %v1480, %v1482
          %v1484 = vadd.f32 %v1480, %v1483
          %vm1485 = vweird.f32 %v1477
          %vm1486 = vweird.f32 %v1480
          %vm1487 = vmor %vm1485, %vm1486
          %v1488 = vsel %vm1487, %v1480, %v1484
          %v1489 = vand.u32 2147483647, %v1477
          %vm1490 = vcmp.eq.f32.partialorder %v1489, 8.507059e+37
          %v1491 = vand.u32 %v1477, 2147483648
          %v1492 = vor.u32 1.1754944e-38, %v1491
          %v1493 = vsel %vm1490, %v1492, %v1488
          %v1494 = vmul.f32 1.0, %v1493
          %v1495 = vrcp.pop %v1478
          %v1496 = vmul.f32 %v1478, %v1495
          %v1497 = vsub.f32 1.0, %v1496
          %v1498 = vmul.f32 %v1495, %v1497
          %v1499 = vadd.f32 %v1495, %v1498
          %vm1500 = vweird.f32 %v1478
          %vm1501 = vweird.f32 %v1495
          %vm1502 = vmor %vm1500, %vm1501
          %v1503 = vsel %vm1502, %v1495, %v1499
          %v1504 = vand.u32 2147483647, %v1478
          %vm1505 = vcmp.eq.f32.partialorder %v1504, 8.507059e+37
          %v1506 = vand.u32 %v1478, 2147483648
          %v1507 = vor.u32 1.1754944e-38, %v1506
          %v1508 = vsel %vm1505, %v1507, %v1503
          %v1509 = vmul.f32 1.0, %v1508
          %v1510 = vrcp.pop %v1479
          %v1511 = vmul.f32 %v1479, %v1510
          %v1512 = vsub.f32 1.0, %v1511
          %v1513 = vmul.f32 %v1510, %v1512
          %v1514 = vadd.f32 %v1510, %v1513
          %vm1515 = vweird.f32 %v1479
          %vm1516 = vweird.f32 %v1510
          %vm1517 = vmor %vm1515, %vm1516
          %v1518 = vsel %vm1517, %v1510, %v1514
          %v1519 = vand.u32 2147483647, %v1479
          %vm1520 = vcmp.eq.f32.partialorder %v1519, 8.507059e+37
          %v1521 = vand.u32 %v1479, 2147483648
          %v1522 = vor.u32 1.1754944e-38, %v1521
          %v1523 = vsel %vm1520, %v1522, %v1518
          %v1524 = vmul.f32 1.0, %v1523
          %v1525 = vtanh.pop %v1467
          %v1526 = vmul.f32 %v1509, %v1401
          %v1527 = vmul.f32 %v1494, %v1525
          %v1528 = vadd.f32 %v1526, %v1527
          %v1529 = vtanh.pop %v1528
          %v1530 = vmul.f32 %v1524, %v1529
          %s1531 = scalar_lea.vmem %s282, 56 [#allocation2]
          %1532 = vst [vmem:[%s1531] sm:$0xff] %v1530
          %1533 = vst [vmem:[%s316] sm:$0xff] %v1530
          %1534 = vst [vmem:[%s320] sm:$0xff] %v1528
        $region40: #{encoder_forward.1} parent=35 // pred_fallthru
          _
        %p1535 = scmp.eq.s32.totalorder %s18, 1
        // Predicated region
        $region41: #{encoder_forward.1} parent=35 // pred_check
          %p1536 = pneg %p1535
        $region42: #{encoder_forward.1} parent=35 // pred_check_branch
          %1538 = sbr.rel (%p1536) target = $region44
        $region43: #{encoder_forward.1} parent=35 // pred_region
          %v1539 = vld [vmem:[%s308] sm:$0xff]
          %v1540 = vld [vmem:[%s312] sm:$0xff]
          %s1541 = scalar_lea.vmem %s299, 224
          %v1542 = vld [vmem:[%s1541] sm:$0xff]
          %v1543 = vld [vmem:[%s1541 + $0x8] sm:$0xff]
          %v1544 = vld [vmem:[%s1541 + $0x10] sm:$0xff]
          %v1545 = vld [vmem:[%s1541 + $0x18] sm:$0xff]
          %v1546 = vpack.c.bf16 %v1539, %v1539
          %v1579 = vunpack.c.l.b16 %v321
          %v1580 = vunpack.c.h.b16 %v321
          %v1581 = vunpack.c.l.b16 %v322
          %v1582 = vunpack.c.h.b16 %v322
          %v1583 = vunpack.c.l.b16 %v323
          %v1584 = vunpack.c.h.b16 %v323
          %v1585 = vunpack.c.l.b16 %v324
          %v1586 = vunpack.c.h.b16 %v324
          %v1587 = vunpack.c.l.b16 %v325
          %v1588 = vunpack.c.h.b16 %v325
          %v1589 = vunpack.c.l.b16 %v326
          %v1590 = vunpack.c.h.b16 %v326
          %v1591 = vunpack.c.l.b16 %v327
          %v1592 = vunpack.c.h.b16 %v327
          %v1593 = vunpack.c.l.b16 %v328
          %v1594 = vunpack.c.h.b16 %v328
          %v1595 = vunpack.c.l.b16 %v329
          %v1596 = vunpack.c.h.b16 %v329
          %v1597 = vunpack.c.l.b16 %v330
          %v1598 = vunpack.c.h.b16 %v330
          %v1599 = vunpack.c.l.b16 %v331
          %v1600 = vunpack.c.h.b16 %v331
          %v1601 = vunpack.c.l.b16 %v332
          %v1602 = vunpack.c.h.b16 %v332
          %v1603 = vunpack.c.l.b16 %v333
          %v1604 = vunpack.c.h.b16 %v333
          %v1605 = vunpack.c.l.b16 %v334
          %v1606 = vunpack.c.h.b16 %v334
          %v1607 = vunpack.c.l.b16 %v335
          %v1608 = vunpack.c.h.b16 %v335
          %v1609 = vunpack.c.l.b16 %v336
          %v1610 = vunpack.c.h.b16 %v336
          %v1611 = vunpack.c.l.b16 %v337
          %v1612 = vunpack.c.h.b16 %v337
          %v1613 = vunpack.c.l.b16 %v338
          %v1614 = vunpack.c.h.b16 %v338
          %v1615 = vunpack.c.l.b16 %v339
          %v1616 = vunpack.c.h.b16 %v339
          %v1617 = vunpack.c.l.b16 %v340
          %v1618 = vunpack.c.h.b16 %v340
          %v1619 = vunpack.c.l.b16 %v341
          %v1620 = vunpack.c.h.b16 %v341
          %v1621 = vunpack.c.l.b16 %v342
          %v1622 = vunpack.c.h.b16 %v342
          %v1623 = vunpack.c.l.b16 %v343
          %v1624 = vunpack.c.h.b16 %v343
          %v1625 = vunpack.c.l.b16 %v344
          %v1626 = vunpack.c.h.b16 %v344
          %v1627 = vunpack.c.l.b16 %v345
          %v1628 = vunpack.c.h.b16 %v345
          %v1629 = vunpack.c.l.b16 %v346
          %v1630 = vunpack.c.h.b16 %v346
          %v1631 = vunpack.c.l.b16 %v347
          %v1632 = vunpack.c.h.b16 %v347
          %v1633 = vunpack.c.l.b16 %v348
          %v1634 = vunpack.c.h.b16 %v348
          %v1635 = vunpack.c.l.b16 %v349
          %v1636 = vunpack.c.h.b16 %v349
          %v1637 = vunpack.c.l.b16 %v350
          %v1638 = vunpack.c.h.b16 %v350
          %v1639 = vunpack.c.l.b16 %v351
          %v1640 = vunpack.c.h.b16 %v351
          %v1641 = vunpack.c.l.b16 %v352
          %v1642 = vunpack.c.h.b16 %v352
          %v1643 = vpack.c.b16 %v1583, %v1579
          %v1644 = vpack.c.b16 %v1584, %v1580
          %v1645 = vpack.c.b16 %v1585, %v1581
          %v1646 = vpack.c.b16 %v1586, %v1582
          %v1647 = vpack.c.b16 %v1591, %v1587
          %v1648 = vpack.c.b16 %v1592, %v1588
          %v1649 = vpack.c.b16 %v1593, %v1589
          %v1650 = vpack.c.b16 %v1594, %v1590
          %v1651 = vpack.c.b16 %v1599, %v1595
          %v1652 = vpack.c.b16 %v1600, %v1596
          %v1653 = vpack.c.b16 %v1601, %v1597
          %v1654 = vpack.c.b16 %v1602, %v1598
          %v1655 = vpack.c.b16 %v1607, %v1603
          %v1656 = vpack.c.b16 %v1608, %v1604
          %v1657 = vpack.c.b16 %v1609, %v1605
          %v1658 = vpack.c.b16 %v1610, %v1606
          %v1659 = vpack.c.b16 %v1615, %v1611
          %v1660 = vpack.c.b16 %v1616, %v1612
          %v1661 = vpack.c.b16 %v1617, %v1613
          %v1662 = vpack.c.b16 %v1618, %v1614
          %v1663 = vpack.c.b16 %v1623, %v1619
          %v1664 = vpack.c.b16 %v1624, %v1620
          %v1665 = vpack.c.b16 %v1625, %v1621
          %v1666 = vpack.c.b16 %v1626, %v1622
          %v1667 = vpack.c.b16 %v1631, %v1627
          %v1668 = vpack.c.b16 %v1632, %v1628
          %v1669 = vpack.c.b16 %v1633, %v1629
          %v1670 = vpack.c.b16 %v1634, %v1630
          %v1671 = vpack.c.b16 %v1639, %v1635
          %v1672 = vpack.c.b16 %v1640, %v1636
          %v1673 = vpack.c.b16 %v1641, %v1637
          %v1674 = vpack.c.b16 %v1642, %v1638
          %1707 = vmatpush.bf16.msra.mxu0 %v1671
          %1708 = vmatpush.bf16.msra.mxu0 %v1667
          %1709 = vmatpush.bf16.msra.mxu0 %v1663
          %1710 = vmatpush.bf16.msra.mxu0 %v1659
          %1711 = vmatpush.bf16.msra.mxu0 %v1655
          %1712 = vmatpush.bf16.msra.mxu0 %v1651
          %1713 = vmatpush.bf16.msra.mxu0 %v1647
          %1714 = vmatpush.bf16.msra.mxu0 %v1643
          %1715 = vmatmul.bf16.gmra.mxu0 %v1546
          %v1716 = vpop.f32.mrf.mxu0
          %v1717 = vadd.f32 0.0, %v1716
          %v1718 = vpop.f32.mrf.mxu0
          %1719 = vdwg.mxu0
          %1720 = vmatpush.bf16.msra.mxu0 %v1672
          %1721 = vmatpush.bf16.msra.mxu0 %v1668
          %1722 = vmatpush.bf16.msra.mxu0 %v1664
          %1723 = vmatpush.bf16.msra.mxu0 %v1660
          %1724 = vmatpush.bf16.msra.mxu0 %v1656
          %1725 = vmatpush.bf16.msra.mxu0 %v1652
          %1726 = vmatpush.bf16.msra.mxu0 %v1648
          %1727 = vmatpush.bf16.msra.mxu0 %v1644
          %1728 = vmatmul.bf16.gmra.mxu0 %v1546
          %v1729 = vpop.f32.mrf.mxu0
          %v1730 = vadd.f32 0.0, %v1729
          %v1731 = vpop.f32.mrf.mxu0
          %1732 = vdwg.mxu0
          %1733 = vmatpush.bf16.msra.mxu0 %v1673
          %1734 = vmatpush.bf16.msra.mxu0 %v1669
          %1735 = vmatpush.bf16.msra.mxu0 %v1665
          %1736 = vmatpush.bf16.msra.mxu0 %v1661
          %1737 = vmatpush.bf16.msra.mxu0 %v1657
          %1738 = vmatpush.bf16.msra.mxu0 %v1653
          %1739 = vmatpush.bf16.msra.mxu0 %v1649
          %1740 = vmatpush.bf16.msra.mxu0 %v1645
          %1741 = vmatmul.bf16.gmra.mxu0 %v1546
          %v1742 = vpop.f32.mrf.mxu0
          %v1743 = vadd.f32 0.0, %v1742
          %v1744 = vpop.f32.mrf.mxu0
          %1745 = vdwg.mxu0
          %1746 = vmatpush.bf16.msra.mxu0 %v1674
          %1747 = vmatpush.bf16.msra.mxu0 %v1670
          %1748 = vmatpush.bf16.msra.mxu0 %v1666
          %1749 = vmatpush.bf16.msra.mxu0 %v1662
          %1750 = vmatpush.bf16.msra.mxu0 %v1658
          %1751 = vmatpush.bf16.msra.mxu0 %v1654
          %1752 = vmatpush.bf16.msra.mxu0 %v1650
          %1753 = vmatpush.bf16.msra.mxu0 %v1646
          %1754 = vmatmul.bf16.gmra.mxu0 %v1546
          %v1755 = vpop.f32.mrf.mxu0
          %v1756 = vadd.f32 0.0, %v1755
          %v1757 = vpop.f32.mrf.mxu0
          %1758 = vdwg.mxu0
          %v1759 = vadd.f32 %v1542, %v1717
          %v1760 = vadd.f32 %v1543, %v1730
          %v1761 = vadd.f32 %v1544, %v1743
          %v1762 = vadd.f32 %v1545, %v1756
          %v1763 = vxor.u32 %v1759, 2147483648
          %v1764 = vxor.u32 %v1760, 2147483648
          %v1765 = vxor.u32 %v1761, 2147483648
          %v1766 = vmul.f32 %v1763, 1.442695
          %v1767 = vpow.pop %v1766
          %v1768 = vmul.f32 %v1764, 1.442695
          %v1769 = vpow.pop %v1768
          %v1770 = vmul.f32 %v1765, 1.442695
          %v1771 = vpow.pop %v1770
          %v1772 = vadd.f32 %v1767, 1.0
          %v1773 = vadd.f32 %v1769, 1.0
          %v1774 = vadd.f32 %v1771, 1.0
          %v1775 = vrcp.pop %v1772
          %v1776 = vmul.f32 %v1772, %v1775
          %v1777 = vsub.f32 1.0, %v1776
          %v1778 = vmul.f32 %v1775, %v1777
          %v1779 = vadd.f32 %v1775, %v1778
          %vm1780 = vweird.f32 %v1772
          %vm1781 = vweird.f32 %v1775
          %vm1782 = vmor %vm1780, %vm1781
          %v1783 = vsel %vm1782, %v1775, %v1779
          %v1784 = vand.u32 2147483647, %v1772
          %vm1785 = vcmp.eq.f32.partialorder %v1784, 8.507059e+37
          %v1786 = vand.u32 %v1772, 2147483648
          %v1787 = vor.u32 1.1754944e-38, %v1786
          %v1788 = vsel %vm1785, %v1787, %v1783
          %v1789 = vmul.f32 1.0, %v1788
          %v1790 = vrcp.pop %v1773
          %v1791 = vmul.f32 %v1773, %v1790
          %v1792 = vsub.f32 1.0, %v1791
          %v1793 = vmul.f32 %v1790, %v1792
          %v1794 = vadd.f32 %v1790, %v1793
          %vm1795 = vweird.f32 %v1773
          %vm1796 = vweird.f32 %v1790
          %vm1797 = vmor %vm1795, %vm1796
          %v1798 = vsel %vm1797, %v1790, %v1794
          %v1799 = vand.u32 2147483647, %v1773
          %vm1800 = vcmp.eq.f32.partialorder %v1799, 8.507059e+37
          %v1801 = vand.u32 %v1773, 2147483648
          %v1802 = vor.u32 1.1754944e-38, %v1801
          %v1803 = vsel %vm1800, %v1802, %v1798
          %v1804 = vmul.f32 1.0, %v1803
          %v1805 = vrcp.pop %v1774
          %v1806 = vmul.f32 %v1774, %v1805
          %v1807 = vsub.f32 1.0, %v1806
          %v1808 = vmul.f32 %v1805, %v1807
          %v1809 = vadd.f32 %v1805, %v1808
          %vm1810 = vweird.f32 %v1774
          %vm1811 = vweird.f32 %v1805
          %vm1812 = vmor %vm1810, %vm1811
          %v1813 = vsel %vm1812, %v1805, %v1809
          %v1814 = vand.u32 2147483647, %v1774
          %vm1815 = vcmp.eq.f32.partialorder %v1814, 8.507059e+37
          %v1816 = vand.u32 %v1774, 2147483648
          %v1817 = vor.u32 1.1754944e-38, %v1816
          %v1818 = vsel %vm1815, %v1817, %v1813
          %v1819 = vmul.f32 1.0, %v1818
          %v1820 = vtanh.pop %v1762
          %v1821 = vmul.f32 %v1804, %v1540
          %v1822 = vmul.f32 %v1789, %v1820
          %v1823 = vadd.f32 %v1821, %v1822
          %v1824 = vtanh.pop %v1823
          %v1825 = vmul.f32 %v1819, %v1824
          %s1826 = scalar_lea.vmem %s282, 56 [#allocation2]
          %1827 = vst [vmem:[%s1826] sm:$0xff] %v1825
          %s1828 = scalar_lea.vmem %s299, 192
          %v1829 = vld [vmem:[%s1828] sm:$0xff]
          %v1830 = vld [vmem:[%s1828 + $0x8] sm:$0xff]
          %v1831 = vld [vmem:[%s1828 + $0x10] sm:$0xff]
          %v1832 = vld [vmem:[%s1828 + $0x18] sm:$0xff]
          %v1833 = vpack.c.bf16 %v1825, %v1825
          %1834 = vmatpush.bf16.msra.mxu0 %v1671
          %1835 = vmatpush.bf16.msra.mxu0 %v1667
          %1836 = vmatpush.bf16.msra.mxu0 %v1663
          %1837 = vmatpush.bf16.msra.mxu0 %v1659
          %1838 = vmatpush.bf16.msra.mxu0 %v1655
          %1839 = vmatpush.bf16.msra.mxu0 %v1651
          %1840 = vmatpush.bf16.msra.mxu0 %v1647
          %1841 = vmatpush.bf16.msra.mxu0 %v1643
          %1842 = vmatmul.bf16.gmra.mxu0 %v1833
          %v1843 = vpop.f32.mrf.mxu0
          %v1844 = vadd.f32 0.0, %v1843
          %v1845 = vpop.f32.mrf.mxu0
          %1846 = vdwg.mxu0
          %1847 = vmatpush.bf16.msra.mxu0 %v1672
          %1848 = vmatpush.bf16.msra.mxu0 %v1668
          %1849 = vmatpush.bf16.msra.mxu0 %v1664
          %1850 = vmatpush.bf16.msra.mxu0 %v1660
          %1851 = vmatpush.bf16.msra.mxu0 %v1656
          %1852 = vmatpush.bf16.msra.mxu0 %v1652
          %1853 = vmatpush.bf16.msra.mxu0 %v1648
          %1854 = vmatpush.bf16.msra.mxu0 %v1644
          %1855 = vmatmul.bf16.gmra.mxu0 %v1833
          %v1856 = vpop.f32.mrf.mxu0
          %v1857 = vadd.f32 0.0, %v1856
          %v1858 = vpop.f32.mrf.mxu0
          %1859 = vdwg.mxu0
          %1860 = vmatpush.bf16.msra.mxu0 %v1673
          %1861 = vmatpush.bf16.msra.mxu0 %v1669
          %1862 = vmatpush.bf16.msra.mxu0 %v1665
          %1863 = vmatpush.bf16.msra.mxu0 %v1661
          %1864 = vmatpush.bf16.msra.mxu0 %v1657
          %1865 = vmatpush.bf16.msra.mxu0 %v1653
          %1866 = vmatpush.bf16.msra.mxu0 %v1649
          %1867 = vmatpush.bf16.msra.mxu0 %v1645
          %1868 = vmatmul.bf16.gmra.mxu0 %v1833
          %v1869 = vpop.f32.mrf.mxu0
          %v1870 = vadd.f32 0.0, %v1869
          %v1871 = vpop.f32.mrf.mxu0
          %1872 = vdwg.mxu0
          %1873 = vmatpush.bf16.msra.mxu0 %v1674
          %1874 = vmatpush.bf16.msra.mxu0 %v1670
          %1875 = vmatpush.bf16.msra.mxu0 %v1666
          %1876 = vmatpush.bf16.msra.mxu0 %v1662
          %1877 = vmatpush.bf16.msra.mxu0 %v1658
          %1878 = vmatpush.bf16.msra.mxu0 %v1654
          %1879 = vmatpush.bf16.msra.mxu0 %v1650
          %1880 = vmatpush.bf16.msra.mxu0 %v1646
          %1881 = vmatmul.bf16.gmra.mxu0 %v1833
          %v1882 = vpop.f32.mrf.mxu0
          %v1883 = vadd.f32 0.0, %v1882
          %v1884 = vpop.f32.mrf.mxu0
          %1885 = vdwg.mxu0
          %v1886 = vadd.f32 %v1829, %v1844
          %v1887 = vadd.f32 %v1830, %v1857
          %v1888 = vadd.f32 %v1831, %v1870
          %v1889 = vadd.f32 %v1832, %v1883
          %v1890 = vxor.u32 %v1886, 2147483648
          %v1891 = vxor.u32 %v1887, 2147483648
          %v1892 = vxor.u32 %v1888, 2147483648
          %v1893 = vmul.f32 %v1890, 1.442695
          %v1894 = vpow.pop %v1893
          %v1895 = vmul.f32 %v1891, 1.442695
          %v1896 = vpow.pop %v1895
          %v1897 = vmul.f32 %v1892, 1.442695
          %v1898 = vpow.pop %v1897
          %v1899 = vadd.f32 %v1894, 1.0
          %v1900 = vadd.f32 %v1896, 1.0
          %v1901 = vadd.f32 %v1898, 1.0
          %v1902 = vrcp.pop %v1899
          %v1903 = vmul.f32 %v1899, %v1902
          %v1904 = vsub.f32 1.0, %v1903
          %v1905 = vmul.f32 %v1902, %v1904
          %v1906 = vadd.f32 %v1902, %v1905
          %vm1907 = vweird.f32 %v1899
          %vm1908 = vweird.f32 %v1902
          %vm1909 = vmor %vm1907, %vm1908
          %v1910 = vsel %vm1909, %v1902, %v1906
          %v1911 = vand.u32 2147483647, %v1899
          %vm1912 = vcmp.eq.f32.partialorder %v1911, 8.507059e+37
          %v1913 = vand.u32 %v1899, 2147483648
          %v1914 = vor.u32 1.1754944e-38, %v1913
          %v1915 = vsel %vm1912, %v1914, %v1910
          %v1916 = vmul.f32 1.0, %v1915
          %v1917 = vrcp.pop %v1900
          %v1918 = vmul.f32 %v1900, %v1917
          %v1919 = vsub.f32 1.0, %v1918
          %v1920 = vmul.f32 %v1917, %v1919
          %v1921 = vadd.f32 %v1917, %v1920
          %vm1922 = vweird.f32 %v1900
          %vm1923 = vweird.f32 %v1917
          %vm1924 = vmor %vm1922, %vm1923
          %v1925 = vsel %vm1924, %v1917, %v1921
          %v1926 = vand.u32 2147483647, %v1900
          %vm1927 = vcmp.eq.f32.partialorder %v1926, 8.507059e+37
          %v1928 = vand.u32 %v1900, 2147483648
          %v1929 = vor.u32 1.1754944e-38, %v1928
          %v1930 = vsel %vm1927, %v1929, %v1925
          %v1931 = vmul.f32 1.0, %v1930
          %v1932 = vrcp.pop %v1901
          %v1933 = vmul.f32 %v1901, %v1932
          %v1934 = vsub.f32 1.0, %v1933
          %v1935 = vmul.f32 %v1932, %v1934
          %v1936 = vadd.f32 %v1932, %v1935
          %vm1937 = vweird.f32 %v1901
          %vm1938 = vweird.f32 %v1932
          %vm1939 = vmor %vm1937, %vm1938
          %v1940 = vsel %vm1939, %v1932, %v1936
          %v1941 = vand.u32 2147483647, %v1901
          %vm1942 = vcmp.eq.f32.partialorder %v1941, 8.507059e+37
          %v1943 = vand.u32 %v1901, 2147483648
          %v1944 = vor.u32 1.1754944e-38, %v1943
          %v1945 = vsel %vm1942, %v1944, %v1940
          %v1946 = vmul.f32 1.0, %v1945
          %v1947 = vtanh.pop %v1889
          %v1948 = vmul.f32 %v1931, %v1823
          %v1949 = vmul.f32 %v1916, %v1947
          %v1950 = vadd.f32 %v1948, %v1949
          %v1951 = vtanh.pop %v1950
          %v1952 = vmul.f32 %v1946, %v1951
          %s1953 = scalar_lea.vmem %s282, 48 [#allocation2]
          %1954 = vst [vmem:[%s1953] sm:$0xff] %v1952
          %s1955 = scalar_lea.vmem %s299, 160
          %v1956 = vld [vmem:[%s1955] sm:$0xff]
          %v1957 = vld [vmem:[%s1955 + $0x8] sm:$0xff]
          %v1958 = vld [vmem:[%s1955 + $0x10] sm:$0xff]
          %v1959 = vld [vmem:[%s1955 + $0x18] sm:$0xff]
          %v1960 = vpack.c.bf16 %v1952, %v1952
          %1961 = vmatpush.bf16.msra.mxu0 %v1671
          %1962 = vmatpush.bf16.msra.mxu0 %v1667
          %1963 = vmatpush.bf16.msra.mxu0 %v1663
          %1964 = vmatpush.bf16.msra.mxu0 %v1659
          %1965 = vmatpush.bf16.msra.mxu0 %v1655
          %1966 = vmatpush.bf16.msra.mxu0 %v1651
          %1967 = vmatpush.bf16.msra.mxu0 %v1647
          %1968 = vmatpush.bf16.msra.mxu0 %v1643
          %1969 = vmatmul.bf16.gmra.mxu0 %v1960
          %v1970 = vpop.f32.mrf.mxu0
          %v1971 = vadd.f32 0.0, %v1970
          %v1972 = vpop.f32.mrf.mxu0
          %1973 = vdwg.mxu0
          %1974 = vmatpush.bf16.msra.mxu0 %v1672
          %1975 = vmatpush.bf16.msra.mxu0 %v1668
          %1976 = vmatpush.bf16.msra.mxu0 %v1664
          %1977 = vmatpush.bf16.msra.mxu0 %v1660
          %1978 = vmatpush.bf16.msra.mxu0 %v1656
          %1979 = vmatpush.bf16.msra.mxu0 %v1652
          %1980 = vmatpush.bf16.msra.mxu0 %v1648
          %1981 = vmatpush.bf16.msra.mxu0 %v1644
          %1982 = vmatmul.bf16.gmra.mxu0 %v1960
          %v1983 = vpop.f32.mrf.mxu0
          %v1984 = vadd.f32 0.0, %v1983
          %v1985 = vpop.f32.mrf.mxu0
          %1986 = vdwg.mxu0
          %1987 = vmatpush.bf16.msra.mxu0 %v1673
          %1988 = vmatpush.bf16.msra.mxu0 %v1669
          %1989 = vmatpush.bf16.msra.mxu0 %v1665
          %1990 = vmatpush.bf16.msra.mxu0 %v1661
          %1991 = vmatpush.bf16.msra.mxu0 %v1657
          %1992 = vmatpush.bf16.msra.mxu0 %v1653
          %1993 = vmatpush.bf16.msra.mxu0 %v1649
          %1994 = vmatpush.bf16.msra.mxu0 %v1645
          %1995 = vmatmul.bf16.gmra.mxu0 %v1960
          %v1996 = vpop.f32.mrf.mxu0
          %v1997 = vadd.f32 0.0, %v1996
          %v1998 = vpop.f32.mrf.mxu0
          %1999 = vdwg.mxu0
          %2000 = vmatpush.bf16.msra.mxu0 %v1674
          %2001 = vmatpush.bf16.msra.mxu0 %v1670
          %2002 = vmatpush.bf16.msra.mxu0 %v1666
          %2003 = vmatpush.bf16.msra.mxu0 %v1662
          %2004 = vmatpush.bf16.msra.mxu0 %v1658
          %2005 = vmatpush.bf16.msra.mxu0 %v1654
          %2006 = vmatpush.bf16.msra.mxu0 %v1650
          %2007 = vmatpush.bf16.msra.mxu0 %v1646
          %2008 = vmatmul.bf16.gmra.mxu0 %v1960
          %v2009 = vpop.f32.mrf.mxu0
          %v2010 = vadd.f32 0.0, %v2009
          %v2011 = vpop.f32.mrf.mxu0
          %2012 = vdwg.mxu0
          %v2013 = vadd.f32 %v1956, %v1971
          %v2014 = vadd.f32 %v1957, %v1984
          %v2015 = vadd.f32 %v1958, %v1997
          %v2016 = vadd.f32 %v1959, %v2010
          %v2017 = vxor.u32 %v2013, 2147483648
          %v2018 = vxor.u32 %v2014, 2147483648
          %v2019 = vxor.u32 %v2015, 2147483648
          %v2020 = vmul.f32 %v2017, 1.442695
          %v2021 = vpow.pop %v2020
          %v2022 = vmul.f32 %v2018, 1.442695
          %v2023 = vpow.pop %v2022
          %v2024 = vmul.f32 %v2019, 1.442695
          %v2025 = vpow.pop %v2024
          %v2026 = vadd.f32 %v2021, 1.0
          %v2027 = vadd.f32 %v2023, 1.0
          %v2028 = vadd.f32 %v2025, 1.0
          %v2029 = vrcp.pop %v2026
          %v2030 = vmul.f32 %v2026, %v2029
          %v2031 = vsub.f32 1.0, %v2030
          %v2032 = vmul.f32 %v2029, %v2031
          %v2033 = vadd.f32 %v2029, %v2032
          %vm2034 = vweird.f32 %v2026
          %vm2035 = vweird.f32 %v2029
          %vm2036 = vmor %vm2034, %vm2035
          %v2037 = vsel %vm2036, %v2029, %v2033
          %v2038 = vand.u32 2147483647, %v2026
          %vm2039 = vcmp.eq.f32.partialorder %v2038, 8.507059e+37
          %v2040 = vand.u32 %v2026, 2147483648
          %v2041 = vor.u32 1.1754944e-38, %v2040
          %v2042 = vsel %vm2039, %v2041, %v2037
          %v2043 = vmul.f32 1.0, %v2042
          %v2044 = vrcp.pop %v2027
          %v2045 = vmul.f32 %v2027, %v2044
          %v2046 = vsub.f32 1.0, %v2045
          %v2047 = vmul.f32 %v2044, %v2046
          %v2048 = vadd.f32 %v2044, %v2047
          %vm2049 = vweird.f32 %v2027
          %vm2050 = vweird.f32 %v2044
          %vm2051 = vmor %vm2049, %vm2050
          %v2052 = vsel %vm2051, %v2044, %v2048
          %v2053 = vand.u32 2147483647, %v2027
          %vm2054 = vcmp.eq.f32.partialorder %v2053, 8.507059e+37
          %v2055 = vand.u32 %v2027, 2147483648
          %v2056 = vor.u32 1.1754944e-38, %v2055
          %v2057 = vsel %vm2054, %v2056, %v2052
          %v2058 = vmul.f32 1.0, %v2057
          %v2059 = vrcp.pop %v2028
          %v2060 = vmul.f32 %v2028, %v2059
          %v2061 = vsub.f32 1.0, %v2060
          %v2062 = vmul.f32 %v2059, %v2061
          %v2063 = vadd.f32 %v2059, %v2062
          %vm2064 = vweird.f32 %v2028
          %vm2065 = vweird.f32 %v2059
          %vm2066 = vmor %vm2064, %vm2065
          %v2067 = vsel %vm2066, %v2059, %v2063
          %v2068 = vand.u32 2147483647, %v2028
          %vm2069 = vcmp.eq.f32.partialorder %v2068, 8.507059e+37
          %v2070 = vand.u32 %v2028, 2147483648
          %v2071 = vor.u32 1.1754944e-38, %v2070
          %v2072 = vsel %vm2069, %v2071, %v2067
          %v2073 = vmul.f32 1.0, %v2072
          %v2074 = vtanh.pop %v2016
          %v2075 = vmul.f32 %v2058, %v1950
          %v2076 = vmul.f32 %v2043, %v2074
          %v2077 = vadd.f32 %v2075, %v2076
          %v2078 = vtanh.pop %v2077
          %v2079 = vmul.f32 %v2073, %v2078
          %s2080 = scalar_lea.vmem %s282, 40 [#allocation2]
          %2081 = vst [vmem:[%s2080] sm:$0xff] %v2079
          %s2082 = scalar_lea.vmem %s299, 128
          %v2083 = vld [vmem:[%s2082] sm:$0xff]
          %v2084 = vld [vmem:[%s2082 + $0x8] sm:$0xff]
          %v2085 = vld [vmem:[%s2082 + $0x10] sm:$0xff]
          %v2086 = vld [vmem:[%s2082 + $0x18] sm:$0xff]
          %v2087 = vpack.c.bf16 %v2079, %v2079
          %2088 = vmatpush.bf16.msra.mxu0 %v1671
          %2089 = vmatpush.bf16.msra.mxu0 %v1667
          %2090 = vmatpush.bf16.msra.mxu0 %v1663
          %2091 = vmatpush.bf16.msra.mxu0 %v1659
          %2092 = vmatpush.bf16.msra.mxu0 %v1655
          %2093 = vmatpush.bf16.msra.mxu0 %v1651
          %2094 = vmatpush.bf16.msra.mxu0 %v1647
          %2095 = vmatpush.bf16.msra.mxu0 %v1643
          %2096 = vmatmul.bf16.gmra.mxu0 %v2087
          %v2097 = vpop.f32.mrf.mxu0
          %v2098 = vadd.f32 0.0, %v2097
          %v2099 = vpop.f32.mrf.mxu0
          %2100 = vdwg.mxu0
          %2101 = vmatpush.bf16.msra.mxu0 %v1672
          %2102 = vmatpush.bf16.msra.mxu0 %v1668
          %2103 = vmatpush.bf16.msra.mxu0 %v1664
          %2104 = vmatpush.bf16.msra.mxu0 %v1660
          %2105 = vmatpush.bf16.msra.mxu0 %v1656
          %2106 = vmatpush.bf16.msra.mxu0 %v1652
          %2107 = vmatpush.bf16.msra.mxu0 %v1648
          %2108 = vmatpush.bf16.msra.mxu0 %v1644
          %2109 = vmatmul.bf16.gmra.mxu0 %v2087
          %v2110 = vpop.f32.mrf.mxu0
          %v2111 = vadd.f32 0.0, %v2110
          %v2112 = vpop.f32.mrf.mxu0
          %2113 = vdwg.mxu0
          %2114 = vmatpush.bf16.msra.mxu0 %v1673
          %2115 = vmatpush.bf16.msra.mxu0 %v1669
          %2116 = vmatpush.bf16.msra.mxu0 %v1665
          %2117 = vmatpush.bf16.msra.mxu0 %v1661
          %2118 = vmatpush.bf16.msra.mxu0 %v1657
          %2119 = vmatpush.bf16.msra.mxu0 %v1653
          %2120 = vmatpush.bf16.msra.mxu0 %v1649
          %2121 = vmatpush.bf16.msra.mxu0 %v1645
          %2122 = vmatmul.bf16.gmra.mxu0 %v2087
          %v2123 = vpop.f32.mrf.mxu0
          %v2124 = vadd.f32 0.0, %v2123
          %v2125 = vpop.f32.mrf.mxu0
          %2126 = vdwg.mxu0
          %2127 = vmatpush.bf16.msra.mxu0 %v1674
          %2128 = vmatpush.bf16.msra.mxu0 %v1670
          %2129 = vmatpush.bf16.msra.mxu0 %v1666
          %2130 = vmatpush.bf16.msra.mxu0 %v1662
          %2131 = vmatpush.bf16.msra.mxu0 %v1658
          %2132 = vmatpush.bf16.msra.mxu0 %v1654
          %2133 = vmatpush.bf16.msra.mxu0 %v1650
          %2134 = vmatpush.bf16.msra.mxu0 %v1646
          %2135 = vmatmul.bf16.gmra.mxu0 %v2087
          %v2136 = vpop.f32.mrf.mxu0
          %v2137 = vadd.f32 0.0, %v2136
          %v2138 = vpop.f32.mrf.mxu0
          %2139 = vdwg.mxu0
          %v2140 = vadd.f32 %v2083, %v2098
          %v2141 = vadd.f32 %v2084, %v2111
          %v2142 = vadd.f32 %v2085, %v2124
          %v2143 = vadd.f32 %v2086, %v2137
          %v2144 = vxor.u32 %v2140, 2147483648
          %v2145 = vxor.u32 %v2141, 2147483648
          %v2146 = vxor.u32 %v2142, 2147483648
          %v2147 = vmul.f32 %v2144, 1.442695
          %v2148 = vpow.pop %v2147
          %v2149 = vmul.f32 %v2145, 1.442695
          %v2150 = vpow.pop %v2149
          %v2151 = vmul.f32 %v2146, 1.442695
          %v2152 = vpow.pop %v2151
          %v2153 = vadd.f32 %v2148, 1.0
          %v2154 = vadd.f32 %v2150, 1.0
          %v2155 = vadd.f32 %v2152, 1.0
          %v2156 = vrcp.pop %v2153
          %v2157 = vmul.f32 %v2153, %v2156
          %v2158 = vsub.f32 1.0, %v2157
          %v2159 = vmul.f32 %v2156, %v2158
          %v2160 = vadd.f32 %v2156, %v2159
          %vm2161 = vweird.f32 %v2153
          %vm2162 = vweird.f32 %v2156
          %vm2163 = vmor %vm2161, %vm2162
          %v2164 = vsel %vm2163, %v2156, %v2160
          %v2165 = vand.u32 2147483647, %v2153
          %vm2166 = vcmp.eq.f32.partialorder %v2165, 8.507059e+37
          %v2167 = vand.u32 %v2153, 2147483648
          %v2168 = vor.u32 1.1754944e-38, %v2167
          %v2169 = vsel %vm2166, %v2168, %v2164
          %v2170 = vmul.f32 1.0, %v2169
          %v2171 = vrcp.pop %v2154
          %v2172 = vmul.f32 %v2154, %v2171
          %v2173 = vsub.f32 1.0, %v2172
          %v2174 = vmul.f32 %v2171, %v2173
          %v2175 = vadd.f32 %v2171, %v2174
          %vm2176 = vweird.f32 %v2154
          %vm2177 = vweird.f32 %v2171
          %vm2178 = vmor %vm2176, %vm2177
          %v2179 = vsel %vm2178, %v2171, %v2175
          %v2180 = vand.u32 2147483647, %v2154
          %vm2181 = vcmp.eq.f32.partialorder %v2180, 8.507059e+37
          %v2182 = vand.u32 %v2154, 2147483648
          %v2183 = vor.u32 1.1754944e-38, %v2182
          %v2184 = vsel %vm2181, %v2183, %v2179
          %v2185 = vmul.f32 1.0, %v2184
          %v2186 = vrcp.pop %v2155
          %v2187 = vmul.f32 %v2155, %v2186
          %v2188 = vsub.f32 1.0, %v2187
          %v2189 = vmul.f32 %v2186, %v2188
          %v2190 = vadd.f32 %v2186, %v2189
          %vm2191 = vweird.f32 %v2155
          %vm2192 = vweird.f32 %v2186
          %vm2193 = vmor %vm2191, %vm2192
          %v2194 = vsel %vm2193, %v2186, %v2190
          %v2195 = vand.u32 2147483647, %v2155
          %vm2196 = vcmp.eq.f32.partialorder %v2195, 8.507059e+37
          %v2197 = vand.u32 %v2155, 2147483648
          %v2198 = vor.u32 1.1754944e-38, %v2197
          %v2199 = vsel %vm2196, %v2198, %v2194
          %v2200 = vmul.f32 1.0, %v2199
          %v2201 = vtanh.pop %v2143
          %v2202 = vmul.f32 %v2185, %v2077
          %v2203 = vmul.f32 %v2170, %v2201
          %v2204 = vadd.f32 %v2202, %v2203
          %v2205 = vtanh.pop %v2204
          %v2206 = vmul.f32 %v2200, %v2205
          %s2207 = scalar_lea.vmem %s282, 32 [#allocation2]
          %2208 = vst [vmem:[%s2207] sm:$0xff] %v2206
          %s2209 = scalar_lea.vmem %s299, 96
          %v2210 = vld [vmem:[%s2209] sm:$0xff]
          %v2211 = vld [vmem:[%s2209 + $0x8] sm:$0xff]
          %v2212 = vld [vmem:[%s2209 + $0x10] sm:$0xff]
          %v2213 = vld [vmem:[%s2209 + $0x18] sm:$0xff]
          %v2214 = vpack.c.bf16 %v2206, %v2206
          %2215 = vmatpush.bf16.msra.mxu0 %v1671
          %2216 = vmatpush.bf16.msra.mxu0 %v1667
          %2217 = vmatpush.bf16.msra.mxu0 %v1663
          %2218 = vmatpush.bf16.msra.mxu0 %v1659
          %2219 = vmatpush.bf16.msra.mxu0 %v1655
          %2220 = vmatpush.bf16.msra.mxu0 %v1651
          %2221 = vmatpush.bf16.msra.mxu0 %v1647
          %2222 = vmatpush.bf16.msra.mxu0 %v1643
          %2223 = vmatmul.bf16.gmra.mxu0 %v2214
          %v2224 = vpop.f32.mrf.mxu0
          %v2225 = vadd.f32 0.0, %v2224
          %v2226 = vpop.f32.mrf.mxu0
          %2227 = vdwg.mxu0
          %2228 = vmatpush.bf16.msra.mxu0 %v1672
          %2229 = vmatpush.bf16.msra.mxu0 %v1668
          %2230 = vmatpush.bf16.msra.mxu0 %v1664
          %2231 = vmatpush.bf16.msra.mxu0 %v1660
          %2232 = vmatpush.bf16.msra.mxu0 %v1656
          %2233 = vmatpush.bf16.msra.mxu0 %v1652
          %2234 = vmatpush.bf16.msra.mxu0 %v1648
          %2235 = vmatpush.bf16.msra.mxu0 %v1644
          %2236 = vmatmul.bf16.gmra.mxu0 %v2214
          %v2237 = vpop.f32.mrf.mxu0
          %v2238 = vadd.f32 0.0, %v2237
          %v2239 = vpop.f32.mrf.mxu0
          %2240 = vdwg.mxu0
          %2241 = vmatpush.bf16.msra.mxu0 %v1673
          %2242 = vmatpush.bf16.msra.mxu0 %v1669
          %2243 = vmatpush.bf16.msra.mxu0 %v1665
          %2244 = vmatpush.bf16.msra.mxu0 %v1661
          %2245 = vmatpush.bf16.msra.mxu0 %v1657
          %2246 = vmatpush.bf16.msra.mxu0 %v1653
          %2247 = vmatpush.bf16.msra.mxu0 %v1649
          %2248 = vmatpush.bf16.msra.mxu0 %v1645
          %2249 = vmatmul.bf16.gmra.mxu0 %v2214
          %v2250 = vpop.f32.mrf.mxu0
          %v2251 = vadd.f32 0.0, %v2250
          %v2252 = vpop.f32.mrf.mxu0
          %2253 = vdwg.mxu0
          %2254 = vmatpush.bf16.msra.mxu0 %v1674
          %2255 = vmatpush.bf16.msra.mxu0 %v1670
          %2256 = vmatpush.bf16.msra.mxu0 %v1666
          %2257 = vmatpush.bf16.msra.mxu0 %v1662
          %2258 = vmatpush.bf16.msra.mxu0 %v1658
          %2259 = vmatpush.bf16.msra.mxu0 %v1654
          %2260 = vmatpush.bf16.msra.mxu0 %v1650
          %2261 = vmatpush.bf16.msra.mxu0 %v1646
          %2262 = vmatmul.bf16.gmra.mxu0 %v2214
          %v2263 = vpop.f32.mrf.mxu0
          %v2264 = vadd.f32 0.0, %v2263
          %v2265 = vpop.f32.mrf.mxu0
          %2266 = vdwg.mxu0
          %v2267 = vadd.f32 %v2210, %v2225
          %v2268 = vadd.f32 %v2211, %v2238
          %v2269 = vadd.f32 %v2212, %v2251
          %v2270 = vadd.f32 %v2213, %v2264
          %v2271 = vxor.u32 %v2267, 2147483648
          %v2272 = vxor.u32 %v2268, 2147483648
          %v2273 = vxor.u32 %v2269, 2147483648
          %v2274 = vmul.f32 %v2271, 1.442695
          %v2275 = vpow.pop %v2274
          %v2276 = vmul.f32 %v2272, 1.442695
          %v2277 = vpow.pop %v2276
          %v2278 = vmul.f32 %v2273, 1.442695
          %v2279 = vpow.pop %v2278
          %v2280 = vadd.f32 %v2275, 1.0
          %v2281 = vadd.f32 %v2277, 1.0
          %v2282 = vadd.f32 %v2279, 1.0
          %v2283 = vrcp.pop %v2280
          %v2284 = vmul.f32 %v2280, %v2283
          %v2285 = vsub.f32 1.0, %v2284
          %v2286 = vmul.f32 %v2283, %v2285
          %v2287 = vadd.f32 %v2283, %v2286
          %vm2288 = vweird.f32 %v2280
          %vm2289 = vweird.f32 %v2283
          %vm2290 = vmor %vm2288, %vm2289
          %v2291 = vsel %vm2290, %v2283, %v2287
          %v2292 = vand.u32 2147483647, %v2280
          %vm2293 = vcmp.eq.f32.partialorder %v2292, 8.507059e+37
          %v2294 = vand.u32 %v2280, 2147483648
          %v2295 = vor.u32 1.1754944e-38, %v2294
          %v2296 = vsel %vm2293, %v2295, %v2291
          %v2297 = vmul.f32 1.0, %v2296
          %v2298 = vrcp.pop %v2281
          %v2299 = vmul.f32 %v2281, %v2298
          %v2300 = vsub.f32 1.0, %v2299
          %v2301 = vmul.f32 %v2298, %v2300
          %v2302 = vadd.f32 %v2298, %v2301
          %vm2303 = vweird.f32 %v2281
          %vm2304 = vweird.f32 %v2298
          %vm2305 = vmor %vm2303, %vm2304
          %v2306 = vsel %vm2305, %v2298, %v2302
          %v2307 = vand.u32 2147483647, %v2281
          %vm2308 = vcmp.eq.f32.partialorder %v2307, 8.507059e+37
          %v2309 = vand.u32 %v2281, 2147483648
          %v2310 = vor.u32 1.1754944e-38, %v2309
          %v2311 = vsel %vm2308, %v2310, %v2306
          %v2312 = vmul.f32 1.0, %v2311
          %v2313 = vrcp.pop %v2282
          %v2314 = vmul.f32 %v2282, %v2313
          %v2315 = vsub.f32 1.0, %v2314
          %v2316 = vmul.f32 %v2313, %v2315
          %v2317 = vadd.f32 %v2313, %v2316
          %vm2318 = vweird.f32 %v2282
          %vm2319 = vweird.f32 %v2313
          %vm2320 = vmor %vm2318, %vm2319
          %v2321 = vsel %vm2320, %v2313, %v2317
          %v2322 = vand.u32 2147483647, %v2282
          %vm2323 = vcmp.eq.f32.partialorder %v2322, 8.507059e+37
          %v2324 = vand.u32 %v2282, 2147483648
          %v2325 = vor.u32 1.1754944e-38, %v2324
          %v2326 = vsel %vm2323, %v2325, %v2321
          %v2327 = vmul.f32 1.0, %v2326
          %v2328 = vtanh.pop %v2270
          %v2329 = vmul.f32 %v2312, %v2204
          %v2330 = vmul.f32 %v2297, %v2328
          %v2331 = vadd.f32 %v2329, %v2330
          %v2332 = vtanh.pop %v2331
          %v2333 = vmul.f32 %v2327, %v2332
          %s2334 = scalar_lea.vmem %s282, 24 [#allocation2]
          %2335 = vst [vmem:[%s2334] sm:$0xff] %v2333
          %s2336 = scalar_lea.vmem %s299, 64
          %v2337 = vld [vmem:[%s2336] sm:$0xff]
          %v2338 = vld [vmem:[%s2336 + $0x8] sm:$0xff]
          %v2339 = vld [vmem:[%s2336 + $0x10] sm:$0xff]
          %v2340 = vld [vmem:[%s2336 + $0x18] sm:$0xff]
          %v2341 = vpack.c.bf16 %v2333, %v2333
          %2342 = vmatpush.bf16.msra.mxu0 %v1671
          %2343 = vmatpush.bf16.msra.mxu0 %v1667
          %2344 = vmatpush.bf16.msra.mxu0 %v1663
          %2345 = vmatpush.bf16.msra.mxu0 %v1659
          %2346 = vmatpush.bf16.msra.mxu0 %v1655
          %2347 = vmatpush.bf16.msra.mxu0 %v1651
          %2348 = vmatpush.bf16.msra.mxu0 %v1647
          %2349 = vmatpush.bf16.msra.mxu0 %v1643
          %2350 = vmatmul.bf16.gmra.mxu0 %v2341
          %v2351 = vpop.f32.mrf.mxu0
          %v2352 = vadd.f32 0.0, %v2351
          %v2353 = vpop.f32.mrf.mxu0
          %2354 = vdwg.mxu0
          %2355 = vmatpush.bf16.msra.mxu0 %v1672
          %2356 = vmatpush.bf16.msra.mxu0 %v1668
          %2357 = vmatpush.bf16.msra.mxu0 %v1664
          %2358 = vmatpush.bf16.msra.mxu0 %v1660
          %2359 = vmatpush.bf16.msra.mxu0 %v1656
          %2360 = vmatpush.bf16.msra.mxu0 %v1652
          %2361 = vmatpush.bf16.msra.mxu0 %v1648
          %2362 = vmatpush.bf16.msra.mxu0 %v1644
          %2363 = vmatmul.bf16.gmra.mxu0 %v2341
          %v2364 = vpop.f32.mrf.mxu0
          %v2365 = vadd.f32 0.0, %v2364
          %v2366 = vpop.f32.mrf.mxu0
          %2367 = vdwg.mxu0
          %2368 = vmatpush.bf16.msra.mxu0 %v1673
          %2369 = vmatpush.bf16.msra.mxu0 %v1669
          %2370 = vmatpush.bf16.msra.mxu0 %v1665
          %2371 = vmatpush.bf16.msra.mxu0 %v1661
          %2372 = vmatpush.bf16.msra.mxu0 %v1657
          %2373 = vmatpush.bf16.msra.mxu0 %v1653
          %2374 = vmatpush.bf16.msra.mxu0 %v1649
          %2375 = vmatpush.bf16.msra.mxu0 %v1645
          %2376 = vmatmul.bf16.gmra.mxu0 %v2341
          %v2377 = vpop.f32.mrf.mxu0
          %v2378 = vadd.f32 0.0, %v2377
          %v2379 = vpop.f32.mrf.mxu0
          %2380 = vdwg.mxu0
          %2381 = vmatpush.bf16.msra.mxu0 %v1674
          %2382 = vmatpush.bf16.msra.mxu0 %v1670
          %2383 = vmatpush.bf16.msra.mxu0 %v1666
          %2384 = vmatpush.bf16.msra.mxu0 %v1662
          %2385 = vmatpush.bf16.msra.mxu0 %v1658
          %2386 = vmatpush.bf16.msra.mxu0 %v1654
          %2387 = vmatpush.bf16.msra.mxu0 %v1650
          %2388 = vmatpush.bf16.msra.mxu0 %v1646
          %2389 = vmatmul.bf16.gmra.mxu0 %v2341
          %v2390 = vpop.f32.mrf.mxu0
          %v2391 = vadd.f32 0.0, %v2390
          %v2392 = vpop.f32.mrf.mxu0
          %2393 = vdwg.mxu0
          %v2394 = vadd.f32 %v2337, %v2352
          %v2395 = vadd.f32 %v2338, %v2365
          %v2396 = vadd.f32 %v2339, %v2378
          %v2397 = vadd.f32 %v2340, %v2391
          %v2398 = vxor.u32 %v2394, 2147483648
          %v2399 = vxor.u32 %v2395, 2147483648
          %v2400 = vxor.u32 %v2396, 2147483648
          %v2401 = vmul.f32 %v2398, 1.442695
          %v2402 = vpow.pop %v2401
          %v2403 = vmul.f32 %v2399, 1.442695
          %v2404 = vpow.pop %v2403
          %v2405 = vmul.f32 %v2400, 1.442695
          %v2406 = vpow.pop %v2405
          %v2407 = vadd.f32 %v2402, 1.0
          %v2408 = vadd.f32 %v2404, 1.0
          %v2409 = vadd.f32 %v2406, 1.0
          %v2410 = vrcp.pop %v2407
          %v2411 = vmul.f32 %v2407, %v2410
          %v2412 = vsub.f32 1.0, %v2411
          %v2413 = vmul.f32 %v2410, %v2412
          %v2414 = vadd.f32 %v2410, %v2413
          %vm2415 = vweird.f32 %v2407
          %vm2416 = vweird.f32 %v2410
          %vm2417 = vmor %vm2415, %vm2416
          %v2418 = vsel %vm2417, %v2410, %v2414
          %v2419 = vand.u32 2147483647, %v2407
          %vm2420 = vcmp.eq.f32.partialorder %v2419, 8.507059e+37
          %v2421 = vand.u32 %v2407, 2147483648
          %v2422 = vor.u32 1.1754944e-38, %v2421
          %v2423 = vsel %vm2420, %v2422, %v2418
          %v2424 = vmul.f32 1.0, %v2423
          %v2425 = vrcp.pop %v2408
          %v2426 = vmul.f32 %v2408, %v2425
          %v2427 = vsub.f32 1.0, %v2426
          %v2428 = vmul.f32 %v2425, %v2427
          %v2429 = vadd.f32 %v2425, %v2428
          %vm2430 = vweird.f32 %v2408
          %vm2431 = vweird.f32 %v2425
          %vm2432 = vmor %vm2430, %vm2431
          %v2433 = vsel %vm2432, %v2425, %v2429
          %v2434 = vand.u32 2147483647, %v2408
          %vm2435 = vcmp.eq.f32.partialorder %v2434, 8.507059e+37
          %v2436 = vand.u32 %v2408, 2147483648
          %v2437 = vor.u32 1.1754944e-38, %v2436
          %v2438 = vsel %vm2435, %v2437, %v2433
          %v2439 = vmul.f32 1.0, %v2438
          %v2440 = vrcp.pop %v2409
          %v2441 = vmul.f32 %v2409, %v2440
          %v2442 = vsub.f32 1.0, %v2441
          %v2443 = vmul.f32 %v2440, %v2442
          %v2444 = vadd.f32 %v2440, %v2443
          %vm2445 = vweird.f32 %v2409
          %vm2446 = vweird.f32 %v2440
          %vm2447 = vmor %vm2445, %vm2446
          %v2448 = vsel %vm2447, %v2440, %v2444
          %v2449 = vand.u32 2147483647, %v2409
          %vm2450 = vcmp.eq.f32.partialorder %v2449, 8.507059e+37
          %v2451 = vand.u32 %v2409, 2147483648
          %v2452 = vor.u32 1.1754944e-38, %v2451
          %v2453 = vsel %vm2450, %v2452, %v2448
          %v2454 = vmul.f32 1.0, %v2453
          %v2455 = vtanh.pop %v2397
          %v2456 = vmul.f32 %v2439, %v2331
          %v2457 = vmul.f32 %v2424, %v2455
          %v2458 = vadd.f32 %v2456, %v2457
          %v2459 = vtanh.pop %v2458
          %v2460 = vmul.f32 %v2454, %v2459
          %s2461 = scalar_lea.vmem %s282, 16 [#allocation2]
          %2462 = vst [vmem:[%s2461] sm:$0xff] %v2460
          %s2463 = scalar_lea.vmem %s299, 32
          %v2464 = vld [vmem:[%s2463] sm:$0xff]
          %v2465 = vld [vmem:[%s2463 + $0x8] sm:$0xff]
          %v2466 = vld [vmem:[%s2463 + $0x10] sm:$0xff]
          %v2467 = vld [vmem:[%s2463 + $0x18] sm:$0xff]
          %v2468 = vpack.c.bf16 %v2460, %v2460
          %2469 = vmatpush.bf16.msra.mxu0 %v1671
          %2470 = vmatpush.bf16.msra.mxu0 %v1667
          %2471 = vmatpush.bf16.msra.mxu0 %v1663
          %2472 = vmatpush.bf16.msra.mxu0 %v1659
          %2473 = vmatpush.bf16.msra.mxu0 %v1655
          %2474 = vmatpush.bf16.msra.mxu0 %v1651
          %2475 = vmatpush.bf16.msra.mxu0 %v1647
          %2476 = vmatpush.bf16.msra.mxu0 %v1643
          %2477 = vmatmul.bf16.gmra.mxu0 %v2468
          %v2478 = vpop.f32.mrf.mxu0
          %v2479 = vadd.f32 0.0, %v2478
          %v2480 = vpop.f32.mrf.mxu0
          %2481 = vdwg.mxu0
          %2482 = vmatpush.bf16.msra.mxu0 %v1672
          %2483 = vmatpush.bf16.msra.mxu0 %v1668
          %2484 = vmatpush.bf16.msra.mxu0 %v1664
          %2485 = vmatpush.bf16.msra.mxu0 %v1660
          %2486 = vmatpush.bf16.msra.mxu0 %v1656
          %2487 = vmatpush.bf16.msra.mxu0 %v1652
          %2488 = vmatpush.bf16.msra.mxu0 %v1648
          %2489 = vmatpush.bf16.msra.mxu0 %v1644
          %2490 = vmatmul.bf16.gmra.mxu0 %v2468
          %v2491 = vpop.f32.mrf.mxu0
          %v2492 = vadd.f32 0.0, %v2491
          %v2493 = vpop.f32.mrf.mxu0
          %2494 = vdwg.mxu0
          %2495 = vmatpush.bf16.msra.mxu0 %v1673
          %2496 = vmatpush.bf16.msra.mxu0 %v1669
          %2497 = vmatpush.bf16.msra.mxu0 %v1665
          %2498 = vmatpush.bf16.msra.mxu0 %v1661
          %2499 = vmatpush.bf16.msra.mxu0 %v1657
          %2500 = vmatpush.bf16.msra.mxu0 %v1653
          %2501 = vmatpush.bf16.msra.mxu0 %v1649
          %2502 = vmatpush.bf16.msra.mxu0 %v1645
          %2503 = vmatmul.bf16.gmra.mxu0 %v2468
          %v2504 = vpop.f32.mrf.mxu0
          %v2505 = vadd.f32 0.0, %v2504
          %v2506 = vpop.f32.mrf.mxu0
          %2507 = vdwg.mxu0
          %2508 = vmatpush.bf16.msra.mxu0 %v1674
          %2509 = vmatpush.bf16.msra.mxu0 %v1670
          %2510 = vmatpush.bf16.msra.mxu0 %v1666
          %2511 = vmatpush.bf16.msra.mxu0 %v1662
          %2512 = vmatpush.bf16.msra.mxu0 %v1658
          %2513 = vmatpush.bf16.msra.mxu0 %v1654
          %2514 = vmatpush.bf16.msra.mxu0 %v1650
          %2515 = vmatpush.bf16.msra.mxu0 %v1646
          %2516 = vmatmul.bf16.gmra.mxu0 %v2468
          %v2517 = vpop.f32.mrf.mxu0
          %v2518 = vadd.f32 0.0, %v2517
          %v2519 = vpop.f32.mrf.mxu0
          %2520 = vdwg.mxu0
          %v2521 = vadd.f32 %v2464, %v2479
          %v2522 = vadd.f32 %v2465, %v2492
          %v2523 = vadd.f32 %v2466, %v2505
          %v2524 = vadd.f32 %v2467, %v2518
          %v2525 = vxor.u32 %v2521, 2147483648
          %v2526 = vxor.u32 %v2522, 2147483648
          %v2527 = vxor.u32 %v2523, 2147483648
          %v2528 = vmul.f32 %v2525, 1.442695
          %v2529 = vpow.pop %v2528
          %v2530 = vmul.f32 %v2526, 1.442695
          %v2531 = vpow.pop %v2530
          %v2532 = vmul.f32 %v2527, 1.442695
          %v2533 = vpow.pop %v2532
          %v2534 = vadd.f32 %v2529, 1.0
          %v2535 = vadd.f32 %v2531, 1.0
          %v2536 = vadd.f32 %v2533, 1.0
          %v2537 = vrcp.pop %v2534
          %v2538 = vmul.f32 %v2534, %v2537
          %v2539 = vsub.f32 1.0, %v2538
          %v2540 = vmul.f32 %v2537, %v2539
          %v2541 = vadd.f32 %v2537, %v2540
          %vm2542 = vweird.f32 %v2534
          %vm2543 = vweird.f32 %v2537
          %vm2544 = vmor %vm2542, %vm2543
          %v2545 = vsel %vm2544, %v2537, %v2541
          %v2546 = vand.u32 2147483647, %v2534
          %vm2547 = vcmp.eq.f32.partialorder %v2546, 8.507059e+37
          %v2548 = vand.u32 %v2534, 2147483648
          %v2549 = vor.u32 1.1754944e-38, %v2548
          %v2550 = vsel %vm2547, %v2549, %v2545
          %v2551 = vmul.f32 1.0, %v2550
          %v2552 = vrcp.pop %v2535
          %v2553 = vmul.f32 %v2535, %v2552
          %v2554 = vsub.f32 1.0, %v2553
          %v2555 = vmul.f32 %v2552, %v2554
          %v2556 = vadd.f32 %v2552, %v2555
          %vm2557 = vweird.f32 %v2535
          %vm2558 = vweird.f32 %v2552
          %vm2559 = vmor %vm2557, %vm2558
          %v2560 = vsel %vm2559, %v2552, %v2556
          %v2561 = vand.u32 2147483647, %v2535
          %vm2562 = vcmp.eq.f32.partialorder %v2561, 8.507059e+37
          %v2563 = vand.u32 %v2535, 2147483648
          %v2564 = vor.u32 1.1754944e-38, %v2563
          %v2565 = vsel %vm2562, %v2564, %v2560
          %v2566 = vmul.f32 1.0, %v2565
          %v2567 = vrcp.pop %v2536
          %v2568 = vmul.f32 %v2536, %v2567
          %v2569 = vsub.f32 1.0, %v2568
          %v2570 = vmul.f32 %v2567, %v2569
          %v2571 = vadd.f32 %v2567, %v2570
          %vm2572 = vweird.f32 %v2536
          %vm2573 = vweird.f32 %v2567
          %vm2574 = vmor %vm2572, %vm2573
          %v2575 = vsel %vm2574, %v2567, %v2571
          %v2576 = vand.u32 2147483647, %v2536
          %vm2577 = vcmp.eq.f32.partialorder %v2576, 8.507059e+37
          %v2578 = vand.u32 %v2536, 2147483648
          %v2579 = vor.u32 1.1754944e-38, %v2578
          %v2580 = vsel %vm2577, %v2579, %v2575
          %v2581 = vmul.f32 1.0, %v2580
          %v2582 = vtanh.pop %v2524
          %v2583 = vmul.f32 %v2566, %v2458
          %v2584 = vmul.f32 %v2551, %v2582
          %v2585 = vadd.f32 %v2583, %v2584
          %v2586 = vtanh.pop %v2585
          %v2587 = vmul.f32 %v2581, %v2586
          %s2588 = scalar_lea.vmem %s282, 8 [#allocation2]
          %2589 = vst [vmem:[%s2588] sm:$0xff] %v2587
          %v2590 = vld [vmem:[%s299] sm:$0xff]
          %v2591 = vld [vmem:[%s299 + $0x8] sm:$0xff]
          %v2592 = vld [vmem:[%s299 + $0x10] sm:$0xff]
          %v2593 = vld [vmem:[%s299 + $0x18] sm:$0xff]
          %v2594 = vpack.c.bf16 %v2587, %v2587
          %2595 = vmatpush.bf16.msra.mxu0 %v1671
          %2596 = vmatpush.bf16.msra.mxu0 %v1667
          %2597 = vmatpush.bf16.msra.mxu0 %v1663
          %2598 = vmatpush.bf16.msra.mxu0 %v1659
          %2599 = vmatpush.bf16.msra.mxu0 %v1655
          %2600 = vmatpush.bf16.msra.mxu0 %v1651
          %2601 = vmatpush.bf16.msra.mxu0 %v1647
          %2602 = vmatpush.bf16.msra.mxu0 %v1643
          %2603 = vmatmul.bf16.gmra.mxu0 %v2594
          %v2604 = vpop.f32.mrf.mxu0
          %v2605 = vadd.f32 0.0, %v2604
          %v2606 = vpop.f32.mrf.mxu0
          %2607 = vdwg.mxu0
          %2608 = vmatpush.bf16.msra.mxu0 %v1672
          %2609 = vmatpush.bf16.msra.mxu0 %v1668
          %2610 = vmatpush.bf16.msra.mxu0 %v1664
          %2611 = vmatpush.bf16.msra.mxu0 %v1660
          %2612 = vmatpush.bf16.msra.mxu0 %v1656
          %2613 = vmatpush.bf16.msra.mxu0 %v1652
          %2614 = vmatpush.bf16.msra.mxu0 %v1648
          %2615 = vmatpush.bf16.msra.mxu0 %v1644
          %2616 = vmatmul.bf16.gmra.mxu0 %v2594
          %v2617 = vpop.f32.mrf.mxu0
          %v2618 = vadd.f32 0.0, %v2617
          %v2619 = vpop.f32.mrf.mxu0
          %2620 = vdwg.mxu0
          %2621 = vmatpush.bf16.msra.mxu0 %v1673
          %2622 = vmatpush.bf16.msra.mxu0 %v1669
          %2623 = vmatpush.bf16.msra.mxu0 %v1665
          %2624 = vmatpush.bf16.msra.mxu0 %v1661
          %2625 = vmatpush.bf16.msra.mxu0 %v1657
          %2626 = vmatpush.bf16.msra.mxu0 %v1653
          %2627 = vmatpush.bf16.msra.mxu0 %v1649
          %2628 = vmatpush.bf16.msra.mxu0 %v1645
          %2629 = vmatmul.bf16.gmra.mxu0 %v2594
          %v2630 = vpop.f32.mrf.mxu0
          %v2631 = vadd.f32 0.0, %v2630
          %v2632 = vpop.f32.mrf.mxu0
          %2633 = vdwg.mxu0
          %2634 = vmatpush.bf16.msra.mxu0 %v1674
          %2635 = vmatpush.bf16.msra.mxu0 %v1670
          %2636 = vmatpush.bf16.msra.mxu0 %v1666
          %2637 = vmatpush.bf16.msra.mxu0 %v1662
          %2638 = vmatpush.bf16.msra.mxu0 %v1658
          %2639 = vmatpush.bf16.msra.mxu0 %v1654
          %2640 = vmatpush.bf16.msra.mxu0 %v1650
          %2641 = vmatpush.bf16.msra.mxu0 %v1646
          %2642 = vmatmul.bf16.gmra.mxu0 %v2594
          %v2643 = vpop.f32.mrf.mxu0
          %v2644 = vadd.f32 0.0, %v2643
          %v2645 = vpop.f32.mrf.mxu0
          %2646 = vdwg.mxu0
          %v2647 = vadd.f32 %v2590, %v2605
          %v2648 = vadd.f32 %v2591, %v2618
          %v2649 = vadd.f32 %v2592, %v2631
          %v2650 = vadd.f32 %v2593, %v2644
          %v2651 = vxor.u32 %v2647, 2147483648
          %v2652 = vxor.u32 %v2648, 2147483648
          %v2653 = vxor.u32 %v2649, 2147483648
          %v2654 = vmul.f32 %v2651, 1.442695
          %v2655 = vpow.pop %v2654
          %v2656 = vmul.f32 %v2652, 1.442695
          %v2657 = vpow.pop %v2656
          %v2658 = vmul.f32 %v2653, 1.442695
          %v2659 = vpow.pop %v2658
          %v2660 = vadd.f32 %v2655, 1.0
          %v2661 = vadd.f32 %v2657, 1.0
          %v2662 = vadd.f32 %v2659, 1.0
          %v2663 = vrcp.pop %v2660
          %v2664 = vmul.f32 %v2660, %v2663
          %v2665 = vsub.f32 1.0, %v2664
          %v2666 = vmul.f32 %v2663, %v2665
          %v2667 = vadd.f32 %v2663, %v2666
          %vm2668 = vweird.f32 %v2660
          %vm2669 = vweird.f32 %v2663
          %vm2670 = vmor %vm2668, %vm2669
          %v2671 = vsel %vm2670, %v2663, %v2667
          %v2672 = vand.u32 2147483647, %v2660
          %vm2673 = vcmp.eq.f32.partialorder %v2672, 8.507059e+37
          %v2674 = vand.u32 %v2660, 2147483648
          %v2675 = vor.u32 1.1754944e-38, %v2674
          %v2676 = vsel %vm2673, %v2675, %v2671
          %v2677 = vmul.f32 1.0, %v2676
          %v2678 = vrcp.pop %v2661
          %v2679 = vmul.f32 %v2661, %v2678
          %v2680 = vsub.f32 1.0, %v2679
          %v2681 = vmul.f32 %v2678, %v2680
          %v2682 = vadd.f32 %v2678, %v2681
          %vm2683 = vweird.f32 %v2661
          %vm2684 = vweird.f32 %v2678
          %vm2685 = vmor %vm2683, %vm2684
          %v2686 = vsel %vm2685, %v2678, %v2682
          %v2687 = vand.u32 2147483647, %v2661
          %vm2688 = vcmp.eq.f32.partialorder %v2687, 8.507059e+37
          %v2689 = vand.u32 %v2661, 2147483648
          %v2690 = vor.u32 1.1754944e-38, %v2689
          %v2691 = vsel %vm2688, %v2690, %v2686
          %v2692 = vmul.f32 1.0, %v2691
          %v2693 = vrcp.pop %v2662
          %v2694 = vmul.f32 %v2662, %v2693
          %v2695 = vsub.f32 1.0, %v2694
          %v2696 = vmul.f32 %v2693, %v2695
          %v2697 = vadd.f32 %v2693, %v2696
          %vm2698 = vweird.f32 %v2662
          %vm2699 = vweird.f32 %v2693
          %vm2700 = vmor %vm2698, %vm2699
          %v2701 = vsel %vm2700, %v2693, %v2697
          %v2702 = vand.u32 2147483647, %v2662
          %vm2703 = vcmp.eq.f32.partialorder %v2702, 8.507059e+37
          %v2704 = vand.u32 %v2662, 2147483648
          %v2705 = vor.u32 1.1754944e-38, %v2704
          %v2706 = vsel %vm2703, %v2705, %v2701
          %v2707 = vmul.f32 1.0, %v2706
          %v2708 = vtanh.pop %v2650
          %v2709 = vmul.f32 %v2692, %v2585
          %v2710 = vmul.f32 %v2677, %v2708
          %v2711 = vadd.f32 %v2709, %v2710
          %v2712 = vtanh.pop %v2711
          %v2713 = vmul.f32 %v2707, %v2712
          %2714 = vst [vmem:[%s282] sm:$0xff] %v2713
          %2715 = vst [vmem:[%s316] sm:$0xff] %v2713
          %2716 = vst [vmem:[%s320] sm:$0xff] %v2711
        $region44: #{encoder_forward.1} parent=35 // pred_fallthru
          _
        %s2717 = sand.u32 %s130, 1
        %s2718 = sand.u32 %s130, 1
        %s2719 = smul.addr %s2718, 64
        %s2720 = scalar_lea.vmem [#allocation2], %s2719
        %p2721 = scmp.lt.s32.totalorder %s18, 1
        %s2722 = scalar_select %p2721, %s18, 1
        %s2723 = smul.addr %s2722, 8
        %s2724 = scalar_lea.vmem %s5, %s2723
        %p2725 = scmp.lt.s32.totalorder %s18, 1
        %s2726 = scalar_select %p2725, %s18, 1
        %s2727 = smul.addr %s2726, 8
        %s2728 = scalar_lea.vmem %s6, %s2727
        // Predicated region
        $region45: #{encoder_forward.1} parent=35 // pred_check
          %p2729 = pneg %p140
        $region46: #{encoder_forward.1} parent=35 // pred_check_branch
          %2731 = sbr.rel (%p2729) target = $region48
        $region47: #{encoder_forward.1} parent=35 // pred_region
          %s2732 = smul.addr %s18, 8
          %s2733 = scalar_lea.vmem %s4, %s2732
          // Predicated region
          $region49: #{encoder_forward.1} parent=47 // pred_check
            _
          $region50: #{encoder_forward.1} parent=47 // pred_check_branch
            %2735 = sbr.rel (0) target = $region52
          $region51: #{encoder_forward.1} parent=47 // pred_region
            // Predicated region
            $region53: #{encoder_forward.1} parent=51 // pred_check
              _
            $region54: #{encoder_forward.1} parent=51 // pred_check_branch
              %2737 = sbr.rel (0) target = $region56
            $region55: #{encoder_forward.1} parent=51 // pred_region
              // Predicated region
              $region68: #{encoder_forward.1} parent=55 // pred_check
                _
              $region69: #{encoder_forward.1} parent=55 // pred_check_branch
                %2767 = sbr.rel (0) target = $region71
              $region70: #{encoder_forward.1} parent=55 // pred_region
                loop: start=0, step=1, limit=1
                $region72: #{encoder_forward.1} parent=70 // loop_pre_header
                  _
                $region73: #{encoder_forward.1} parent=70 // loop_header
                  %s2769 = sphi 0, %s2773
                  %p2770 = scmp.ge.s32.totalorder %s2769, 1
                  %s2774 = sphi %s2720, %s2720
                  %s2775 = sphi %s2733, %s2733
                $region74: #{encoder_forward.1} parent=70 // loop_header_branch
                  %2772 = sbr.rel (%p2770) target = $region78
                $region75: #{encoder_forward.1} parent=70 // loop_body
                  %v2776 = vld [vmem:[%s2774] sm:$0xff]
                  %2777 = vst [vmem:[%s2775] sm:$0xff] %v2776
                  %v2778 = vld [vmem:[%s2774 + $0x8] sm:$0xff]
                  %2779 = vst [vmem:[%s2775 + $0x10] sm:$0xff] %v2778
                  %v2780 = vld [vmem:[%s2774 + $0x10] sm:$0xff]
                  %2781 = vst [vmem:[%s2775 + $0x20] sm:$0xff] %v2780
                  %v2782 = vld [vmem:[%s2774 + $0x18] sm:$0xff]
                  %2783 = vst [vmem:[%s2775 + $0x30] sm:$0xff] %v2782
                  %v2784 = vld [vmem:[%s2774 + $0x20] sm:$0xff]
                  %2785 = vst [vmem:[%s2775 + $0x40] sm:$0xff] %v2784
                  %v2786 = vld [vmem:[%s2774 + $0x28] sm:$0xff]
                  %2787 = vst [vmem:[%s2775 + $0x50] sm:$0xff] %v2786
                  %v2788 = vld [vmem:[%s2774 + $0x30] sm:$0xff]
                  %2789 = vst [vmem:[%s2775 + $0x60] sm:$0xff] %v2788
                  %v2790 = vld [vmem:[%s2774 + $0x38] sm:$0xff]
                  %2791 = vst [vmem:[%s2775 + $0x70] sm:$0xff] %v2790
                $region76: #{encoder_forward.1} parent=70 // loop_footer
                  %s2773 = sadd.s32 1, %s2769
                $region77: #{encoder_forward.1} parent=70 // loop_footer_branch
                  %2768 = sbr.rel target = $region73
                $region78: #{encoder_forward.1} parent=70 // loop_exit
                  _
              $region71: #{encoder_forward.1} parent=55 // pred_fallthru
                _
              // Predicated region
              $region79: #{encoder_forward.1} parent=55 // pred_check
                _
              $region80: #{encoder_forward.1} parent=55 // pred_check_branch
                %2793 = sbr.rel target = $region82
              $region81: #{encoder_forward.1} parent=55 // pred_region
                _
              $region82: #{encoder_forward.1} parent=55 // pred_fallthru
                _
            $region56: #{encoder_forward.1} parent=51 // pred_fallthru
              _
            // Predicated region
            $region57: #{encoder_forward.1} parent=51 // pred_check
              _
            $region58: #{encoder_forward.1} parent=51 // pred_check_branch
              %2739 = sbr.rel target = $region60
            $region59: #{encoder_forward.1} parent=51 // pred_region
              %s2741 = ssub.s32 256, 1
              loop: start=0, step=1, limit=1
              $region61: #{encoder_forward.1} parent=59 // loop_pre_header
                _
              $region62: #{encoder_forward.1} parent=59 // loop_header
                %s2743 = sphi 0, %s2747
                %p2744 = scmp.ge.s32.totalorder %s2743, 1
                %s2748 = sphi %s2720, %s2720
                %s2749 = sphi %s2733, %s2733
              $region63: #{encoder_forward.1} parent=59 // loop_header_branch
                %2746 = sbr.rel (%p2744) target = $region67
              $region64: #{encoder_forward.1} parent=59 // loop_body
                %v2750 = vld [vmem:[%s2748] sm:%s2741]
                %2751 = vst [vmem:[%s2749] sm:%s2741] %v2750
                %v2752 = vld [vmem:[%s2748 + $0x8] sm:%s2741]
                %2753 = vst [vmem:[%s2749 + $0x10] sm:%s2741] %v2752
                %v2754 = vld [vmem:[%s2748 + $0x10] sm:%s2741]
                %2755 = vst [vmem:[%s2749 + $0x20] sm:%s2741] %v2754
                %v2756 = vld [vmem:[%s2748 + $0x18] sm:%s2741]
                %2757 = vst [vmem:[%s2749 + $0x30] sm:%s2741] %v2756
                %v2758 = vld [vmem:[%s2748 + $0x20] sm:%s2741]
                %2759 = vst [vmem:[%s2749 + $0x40] sm:%s2741] %v2758
                %v2760 = vld [vmem:[%s2748 + $0x28] sm:%s2741]
                %2761 = vst [vmem:[%s2749 + $0x50] sm:%s2741] %v2760
                %v2762 = vld [vmem:[%s2748 + $0x30] sm:%s2741]
                %2763 = vst [vmem:[%s2749 + $0x60] sm:%s2741] %v2762
                %v2764 = vld [vmem:[%s2748 + $0x38] sm:%s2741]
                %2765 = vst [vmem:[%s2749 + $0x70] sm:%s2741] %v2764
              $region65: #{encoder_forward.1} parent=59 // loop_footer
                %s2747 = sadd.s32 1, %s2743
              $region66: #{encoder_forward.1} parent=59 // loop_footer_branch
                %2742 = sbr.rel target = $region62
              $region67: #{encoder_forward.1} parent=59 // loop_exit
                _
            $region60: #{encoder_forward.1} parent=51 // pred_fallthru
              _
          $region52: #{encoder_forward.1} parent=47 // pred_fallthru
            _
          %2794 = vnop
        $region48: #{encoder_forward.1} parent=35 // pred_fallthru
          _
        // Predicated region
        $region83: #{encoder_forward.1} parent=35 // pred_check
          %p2795 = pneg %p166
        $region84: #{encoder_forward.1} parent=35 // pred_check_branch
          %2797 = sbr.rel (%p2795) target = $region86
        $region85: #{encoder_forward.1} parent=35 // pred_region
          _
        $region86: #{encoder_forward.1} parent=35 // pred_fallthru
          _
        // Predicated region
        $region87: #{encoder_forward.1} parent=35 // pred_check
          %p2798 = pneg %p192
        $region88: #{encoder_forward.1} parent=35 // pred_check_branch
          %2800 = sbr.rel (%p2798) target = $region90
        $region89: #{encoder_forward.1} parent=35 // pred_region
          _
        $region90: #{encoder_forward.1} parent=35 // pred_fallthru
          _
      $region36: #{encoder_forward.1} parent=5 // pred_fallthru
        _
      %p2801 = scmp.le.s32.totalorder 2, %s13
      // Predicated region
      $region91: #{encoder_forward.1} parent=5 // pred_check
        %p2802 = pneg %p2801
      $region92: #{encoder_forward.1} parent=5 // pred_check_branch
        %2804 = sbr.rel (%p2802) target = $region94
      $region93: #{encoder_forward.1} parent=5 // pred_region
        %s2805 = ssub.s32 %s13, 2
        // Predicated region
        $region95: #{encoder_forward.1} parent=93 // pred_check
          %p2806 = pneg %p146
        $region96: #{encoder_forward.1} parent=93 // pred_check_branch
          %2808 = sbr.rel (%p2806) target = $region98
        $region97: #{encoder_forward.1} parent=93 // pred_region
          %s2809 = sand.u32 %s131, 1
          %s2810 = sand.u32 %s131, 1
          %s2811 = smul.addr %s2810, 64
          %s2812 = scalar_lea.vmem [#allocation2], %s2811
        $region98: #{encoder_forward.1} parent=93 // pred_fallthru
          _
        // Predicated region
        $region99: #{encoder_forward.1} parent=93 // pred_check
          %p2813 = pneg %p172
        $region100: #{encoder_forward.1} parent=93 // pred_check_branch
          %2815 = sbr.rel (%p2813) target = $region102
        $region101: #{encoder_forward.1} parent=93 // pred_region
          %p2816 = scmp.lt.s32.totalorder %s19, 1
          %s2817 = scalar_select %p2816, %s19, 1
          %s2818 = smul.addr %s2817, 8
          %s2819 = scalar_lea.vmem %s5, %s2818
        $region102: #{encoder_forward.1} parent=93 // pred_fallthru
          _
        // Predicated region
        $region103: #{encoder_forward.1} parent=93 // pred_check
          %p2820 = pneg %p198
        $region104: #{encoder_forward.1} parent=93 // pred_check_branch
          %2822 = sbr.rel (%p2820) target = $region106
        $region105: #{encoder_forward.1} parent=93 // pred_region
          %p2823 = scmp.lt.s32.totalorder %s19, 1
          %s2824 = scalar_select %p2823, %s19, 1
          %s2825 = smul.addr %s2824, 8
          %s2826 = scalar_lea.vmem %s6, %s2825
        $region106: #{encoder_forward.1} parent=93 // pred_fallthru
          _
      $region94: #{encoder_forward.1} parent=5 // pred_fallthru
        _
    $region6: #{encoder_forward.1} parent=1 // loop_footer
      %s17 = sadd.s32 1, %s13
    $region7: #{encoder_forward.1} parent=1 // loop_footer_branch
      %12 = sbr.rel target = $region3
    $region8: #{encoder_forward.1} parent=1 // loop_exit
      _

</llo_original>
